<compile_context>
chip_gen: v7x
topology: tpu7x:2x2x1
jax: 0.10.0
libtpu: 0.0.40
codegen_flags: <defaults>
</compile_context>

<pallas_src>
import functools

import jax
import jax.numpy as jnp
from jax.experimental import pallas as pl
from jax.experimental.pallas import tpu as pltpu

EPS = 1e-5          # nn.LayerNorm default eps
NEG_INF = -1e30     # additive key-padding mask value
LANES = 128
SUBLANES = 8


def _mm(x_bf, w_bf):
    """(M, K) @ (K, N) -> (M, N) f32; bf16 operands on the MXU."""
    return jax.lax.dot_general(x_bf, w_bf, (((1,), (0,)), ((), ())),
                               preferred_element_type=jnp.float32)


def _mm_nt(a_bf, b_bf):
    """(M, K) x (N, K) -> (M, N) f32  (attention scores q @ k.T)."""
    return jax.lax.dot_general(a_bf, b_bf, (((1,), (1,)), ((), ())),
                               preferred_element_type=jnp.float32)


def _layer_norm(y, w, b):
    mu = jnp.mean(y, axis=-1, keepdims=True)
    var = jnp.mean((y - mu) ** 2, axis=-1, keepdims=True)
    return (y - mu) * jax.lax.rsqrt(var + EPS) * w + b


def transformer_kernel(
    x_ref, bias_ref,
    wq_ref, wk_ref, wv_ref, bq_ref, bk_ref, bv_ref,
    wo_ref, bo_ref, ln1w_ref, ln1b_ref,
    w1_ref, b1_ref, w2_ref, b2_ref, ln2w_ref, ln2b_ref,
    fcw_ref, fcb_ref,
    out_ref,
    x_sc,
    *, bblk, seq, num_heads, num_layers,
):
    """One encoder layer for a block of batch rows; epilogue at the last layer."""
    l = pl.program_id(1)
    S = seq
    M = bblk * S
    D = x_sc.shape[1]
    hd = D // num_heads

    @pl.when(l == 0)
    def _():
        # Load this batch block's activations into the resident VMEM scratch.
        x_sc[...] = x_ref[...].reshape(M, D)

    x2 = x_sc[...]                                # (M, D) f32, layer-resident
    x2_bf = x2.astype(jnp.bfloat16)               # single cast reused by Q/K/V

    # ---- full-width QKV projections (1/sqrt(hd) folded into Wq/bq) ------------
    q = (_mm(x2_bf, wq_ref[...]) + bq_ref[...]).astype(jnp.bfloat16)   # (M, D)
    k = (_mm(x2_bf, wk_ref[...]) + bk_ref[...]).astype(jnp.bfloat16)
    v = (_mm(x2_bf, wv_ref[...]) + bv_ref[...]).astype(jnp.bfloat16)

    bias = bias_ref[...]                          # (bblk, 1, S) additive key-pad bias

    # ---- attention: (S, S) score/softmax/PV per head, softmax batched over heads
    o_rows = []
    for r in range(bblk):
        rs = r * S
        q_r = q[rs:rs + S, :]
        k_r = k[rs:rs + S, :]
        v_r = v[rs:rs + S, :]
        scores = [_mm_nt(q_r[:, h * hd:(h + 1) * hd],
                         k_r[:, h * hd:(h + 1) * hd]) for h in range(num_heads)]
        s_all = jnp.concatenate(scores, axis=0) if num_heads > 1 else scores[0]
        s_all = s_all + bias[r]                   # one bias broadcast per row
        s_all = s_all - jnp.max(s_all, axis=-1, keepdims=True)
        p_all = jnp.exp(s_all)
        p_all = p_all * pl.reciprocal(jnp.sum(p_all, axis=-1, keepdims=True),
                                      approx=True)
        p_bf = p_all.astype(jnp.bfloat16)
        outs = [_mm(p_bf[h * S:(h + 1) * S, :], v_r[:, h * hd:(h + 1) * hd])
                for h in range(num_heads)]        # each (S, hd) f32
        o_rows.append(jnp.concatenate(outs, axis=1) if num_heads > 1 else outs[0])
    o_full = jnp.concatenate(o_rows, axis=0) if bblk > 1 else o_rows[0]   # (M, D)

    # ---- single full-width out-projection on the lane-concatenated heads ------
    attn = _mm(o_full.astype(jnp.bfloat16), wo_ref[...]) + bo_ref[...]    # (M, D)

    # TODO(synk): dropout layers are identity (inference mode).
    h1 = _layer_norm(x2 + attn, ln1w_ref[...], ln1b_ref[...])
    h1_bf = h1.astype(jnp.bfloat16)

    # ---- feed-forward ----------------------------------------------------------
    ff = jnp.maximum(_mm(h1_bf, w1_ref[...]) + b1_ref[...], 0.0)          # relu
    ff = _mm(ff.astype(jnp.bfloat16), w2_ref[...]) + b2_ref[...]
    x_new = _layer_norm(h1 + ff, ln2w_ref[...], ln2b_ref[...])
    x_sc[...] = x_new

    # ---- epilogue (last layer only): masked mean pool + classifier ------------
    @pl.when(l == num_layers - 1)
    def _():
        pooled_rows = []
        for r in range(bblk):
            valid = (bias[r] == 0.0).astype(jnp.float32)                  # (1, S)
            summed = jax.lax.dot_general(
                valid, x_new[r * S:(r + 1) * S, :],
                (((1,), (0,)), ((), ())), preferred_element_type=jnp.float32)
            length = jnp.maximum(jnp.sum(valid, axis=-1, keepdims=True), 1.0)
            pooled_rows.append(summed / length)   # exact divide (off hot path)
        pooled = jnp.concatenate(pooled_rows, axis=0) if bblk > 1 else pooled_rows[0]
        logits = _mm(pooled.astype(jnp.bfloat16), fcw_ref[...]) + fcb_ref[...]
        out_ref[...] = logits[None, :, :]         # (1, bblk, C_pad) lane-dense


def init_params(key, vocab_size, D, hidden, num_layers, num_classes, max_len):
    keys = jax.random.split(key, 3 + num_layers)
    emb = 0.02 * jax.random.normal(keys[0], (vocab_size, D), jnp.float32)
    emb = emb.at[0].set(0.0)                      # padding_idx=0 row is zeros
    pos = jax.random.normal(keys[1], (1, max_len, D), jnp.float32)
    fcw = 0.02 * jax.random.normal(keys[2], (num_classes, D), jnp.float32)
    fcb = jnp.zeros((num_classes,), jnp.float32)

    layers = []
    for l in range(num_layers):
        lk = jax.random.split(keys[3 + l], 4)
        wqkv = 0.05 * jax.random.normal(lk[0], (3 * D, D), jnp.float32)
        bqkv = jnp.zeros((3 * D,), jnp.float32)
        wo = 0.05 * jax.random.normal(lk[1], (D, D), jnp.float32)
        bo = jnp.zeros((D,), jnp.float32)
        w1 = 0.05 * jax.random.normal(lk[2], (hidden, D), jnp.float32)
        b1 = jnp.zeros((hidden,), jnp.float32)
        w2 = 0.05 * jax.random.normal(lk[3], (D, hidden), jnp.float32)
        b2 = jnp.zeros((D,), jnp.float32)
        ln1w = jnp.ones((D,), jnp.float32); ln1b = jnp.zeros((D,), jnp.float32)
        ln2w = jnp.ones((D,), jnp.float32); ln2b = jnp.zeros((D,), jnp.float32)
        layers.append((wqkv, bqkv, wo, bo, ln1w, ln1b,
                       w1, b1, w2, b2, ln2w, ln2b))
    return emb, pos, fcw, fcb, layers


def _pack_params(layers, fcw, fcb, num_heads, D):
    """Pre-transpose every matmul weight to plain (K, N), fold 1/sqrt(hd) into
    Wq/bq, stack per-layer (layer id becomes a grid axis), cast matmul weights
    to bf16, and pad the classifier to a lane-dense multiple of 128."""
    hd = D // num_heads
    scale = 1.0 / (hd ** 0.5)
    Wq, Wk, Wv, Bq, Bk, Bv = [], [], [], [], [], []
    Wo, Bo, L1w, L1b, W1, B1, W2, B2, L2w, L2b = ([] for _ in range(10))
    for (wqkv, bqkv, wo, bo, ln1w, ln1b, w1, b1, w2, b2, ln2w, ln2b) in layers:
        wq, wk, wv = wqkv[:D], wqkv[D:2 * D], wqkv[2 * D:]
        bq, bk, bv = bqkv[:D], bqkv[D:2 * D], bqkv[2 * D:]
        Wq.append((wq * scale).T); Bq.append((bq * scale)[None, :])
        Wk.append(wk.T);           Bk.append(bk[None, :])
        Wv.append(wv.T);           Bv.append(bv[None, :])
        Wo.append(wo.T);           Bo.append(bo[None, :])
        L1w.append(ln1w[None, :]); L1b.append(ln1b[None, :])
        W1.append(w1.T);           B1.append(b1[None, :])
        W2.append(w2.T);           B2.append(b2[None, :])
        L2w.append(ln2w[None, :]); L2b.append(ln2b[None, :])

    f32 = lambda xs: jnp.stack(xs).astype(jnp.float32)
    bf16 = lambda xs: jnp.stack(xs).astype(jnp.bfloat16)

    num_classes = fcw.shape[0]
    c_pad = ((num_classes + LANES - 1) // LANES) * LANES
    fcw_p = jnp.zeros((D, c_pad), jnp.float32).at[:, :num_classes].set(fcw.T)
    fcw_p = fcw_p.astype(jnp.bfloat16)
    fcb_p = jnp.zeros((1, c_pad), jnp.float32).at[0, :num_classes].set(fcb)

    return (bf16(Wq), bf16(Wk), bf16(Wv), f32(Bq), f32(Bk), f32(Bv),
            bf16(Wo), f32(Bo), f32(L1w), f32(L1b),
            bf16(W1), f32(B1), bf16(W2), f32(B2), f32(L2w), f32(L2b),
            fcw_p, fcb_p)


def transformer_forward(x_ids, params, num_heads, block_b=None):
    emb, pos, fcw, fcb, layers = params
    B, S = x_ids.shape
    D = emb.shape[1]
    num_classes = fcw.shape[0]
    num_layers = len(layers)

    # glue: embedding gather + positional encoding (outside the kernel)
    h0 = jnp.take(emb, x_ids, axis=0).astype(jnp.float32)          # (B, S, D)
    if S <= pos.shape[1]:
        # TODO(synk): like the PyTorch module, pos-encoding is silently skipped
        # when S > max_length.
        h0 = h0 + pos[:, :S, :]

    bias = jnp.where(x_ids == 0, NEG_INF, 0.0).astype(jnp.float32)[:, None, :]

    # Pad the sequence axis to a sublane multiple; padded keys are masked out
    # and excluded from pooling, so results are unchanged.
    S_pad = ((S + SUBLANES - 1) // SUBLANES) * SUBLANES
    if S_pad != S:
        h0 = jnp.pad(h0, ((0, 0), (0, S_pad - S), (0, 0)))
        bias = jnp.pad(bias, ((0, 0), (0, 0), (0, S_pad - S)),
                       constant_values=NEG_INF)

    # Batch rows per grid step so M = block_b * S_pad approaches MXU-sized tiles.
    if block_b is None:
        block_b = min(B, max(1, 256 // S_pad))
        while B % block_b != 0:
            block_b -= 1
    nb = B // block_b

    weights = _pack_params(layers, fcw, fcb, num_heads, D)
    c_pad = weights[-2].shape[1]

    kernel = functools.partial(transformer_kernel, bblk=block_b, seq=S_pad,
                               num_heads=num_heads, num_layers=num_layers)

    def layer_spec(arr):                       # streamed per layer (axis 1 = l)
        tail = arr.shape[1:]
        nt = len(tail)
        return pl.BlockSpec((None,) + tail, lambda b, l, _nt=nt: (l,) + (0,) * _nt)

    def pinned_spec(arr):                      # tiny, constant-index (fc head)
        nd = arr.ndim
        return pl.BlockSpec(arr.shape, lambda b, l, _nd=nd: (0,) * _nd)

    in_specs = ([pl.BlockSpec((block_b, S_pad, D), lambda b, l: (b, 0, 0)),
                 pl.BlockSpec((block_b, 1, S_pad), lambda b, l: (b, 0, 0))]
                + [layer_spec(w) for w in weights[:16]]
                + [pinned_spec(w) for w in weights[16:]])

    out = pl.pallas_call(
        kernel,
        out_shape=jax.ShapeDtypeStruct((nb, block_b, c_pad), jnp.float32),
        grid=(nb, num_layers),
        in_specs=in_specs,
        out_specs=pl.BlockSpec((1, block_b, c_pad), lambda b, l: (b, 0, 0)),
        scratch_shapes=[pltpu.VMEM((block_b * S_pad, D), jnp.float32)],
        compiler_params=pltpu.CompilerParams(
            dimension_semantics=("parallel", "arbitrary"),
            # Raise above v5e's 16 MiB scoped default; re-budget when scaling
            # D/hidden/num_layers (v7x physical VMEM is 64 MiB).
            vmem_limit_bytes=32 * 1024 * 1024),
    )(h0, bias, *weights)

    return out.reshape(B, c_pad)[:, :num_classes]


def reference_forward(x_ids, params, num_heads):
    """Pure-JAX f32 reference matching the PyTorch module (eval mode)."""
    emb, pos, fcw, fcb, layers = params
    B, S = x_ids.shape
    D = emb.shape[1]
    hd = D // num_heads
    scale = 1.0 / (hd ** 0.5)

    h = jnp.take(emb, x_ids, axis=0).astype(jnp.float32)
    if S <= pos.shape[1]:
        h = h + pos[:, :S, :]
    pad = (x_ids == 0)
    att_bias = jnp.where(pad, NEG_INF, 0.0)[:, None, None, :]   # (B,1,1,S)

    for (wqkv, bqkv, wo, bo, ln1w, ln1b, w1, b1, w2, b2, ln2w, ln2b) in layers:
        wq, wk, wv = wqkv[:D], wqkv[D:2 * D], wqkv[2 * D:]
        bq, bk, bv = bqkv[:D], bqkv[D:2 * D], bqkv[2 * D:]
        split = lambda t: t.reshape(B, S, num_heads, hd).transpose(0, 2, 1, 3)
        qh = split(h @ wq.T + bq)
        kh = split(h @ wk.T + bk)
        vh = split(h @ wv.T + bv)
        s = jnp.einsum('bhqd,bhkd->bhqk', qh, kh) * scale + att_bias
        p = jax.nn.softmax(s, axis=-1)
        o = jnp.einsum('bhqk,bhkd->bhqd', p, vh)
        o = o.transpose(0, 2, 1, 3).reshape(B, S, D)
        attn = o @ wo.T + bo
        h1 = _layer_norm(h + attn, ln1w, ln1b)
        ff = jax.nn.relu(h1 @ w1.T + b1) @ w2.T + b2
        h = _layer_norm(h1 + ff, ln2w, ln2b)

    valid = (~pad).astype(jnp.float32)
    pooled = (h * valid[:, :, None]).sum(axis=1) / valid.sum(axis=1, keepdims=True)
    return pooled @ fcw.T + fcb


if __name__ == "__main__":
    # Small-shape config consistent with the module's __init__/forward.
    VOCAB = 50
    D = 32           # embedding_dim
    HEADS = 4        # num_heads
    LAYERS = 2       # num_layers
    HIDDEN = 64      # dim_feedforward
    CLASSES = 10     # num_classes
    MAX_LEN = 16     # max_length
    B, S = 2, 8

    key = jax.random.PRNGKey(0)
    pkey, xkey = jax.random.split(key)
    params = init_params(pkey, VOCAB, D, HIDDEN, LAYERS, CLASSES, MAX_LEN)

    # token ids in [1, VOCAB), with trailing padding (id 0) per row
    x_ids = jax.random.randint(xkey, (B, S), 1, VOCAB, dtype=jnp.int32)
    x_ids = x_ids.at[0, 6:].set(0)   # row 0: 2 padded positions
    x_ids = x_ids.at[1, 5:].set(0)   # row 1: 3 padded positions

    fwd = jax.jit(functools.partial(transformer_forward, num_heads=HEADS))
    out = jax.block_until_ready(fwd(x_ids, params))

    ref = reference_forward(x_ids, params, HEADS)

    assert out.shape == (B, CLASSES), out.shape
    assert bool(jnp.all(jnp.isfinite(out)))
    # bf16 matmul operands + approx softmax reciprocal => loose tolerance.
    assert bool(jnp.allclose(out, ref, atol=5e-2, rtol=5e-2)), (
        float(jnp.max(jnp.abs(out - ref))))
    print("KERNEL_OK")
</pallas_src>

<mosaic_0001>
module attributes {stable_mosaic.version = 11 : i64} {
  func.func @transformer_kernel(%arg0: i32, %arg1: i32, %arg2: memref<2x8x32xf32, #tpu.memory_space<vmem>>, %arg3: memref<2x1x8xf32, #tpu.memory_space<vmem>>, %arg4: memref<1x32x32xbf16, #tpu.memory_space<vmem>>, %arg5: memref<1x32x32xbf16, #tpu.memory_space<vmem>>, %arg6: memref<1x32x32xbf16, #tpu.memory_space<vmem>>, %arg7: memref<1x1x32xf32, #tpu.memory_space<vmem>>, %arg8: memref<1x1x32xf32, #tpu.memory_space<vmem>>, %arg9: memref<1x1x32xf32, #tpu.memory_space<vmem>>, %arg10: memref<1x32x32xbf16, #tpu.memory_space<vmem>>, %arg11: memref<1x1x32xf32, #tpu.memory_space<vmem>>, %arg12: memref<1x1x32xf32, #tpu.memory_space<vmem>>, %arg13: memref<1x1x32xf32, #tpu.memory_space<vmem>>, %arg14: memref<1x32x64xbf16, #tpu.memory_space<vmem>>, %arg15: memref<1x1x64xf32, #tpu.memory_space<vmem>>, %arg16: memref<1x64x32xbf16, #tpu.memory_space<vmem>>, %arg17: memref<1x1x32xf32, #tpu.memory_space<vmem>>, %arg18: memref<1x1x32xf32, #tpu.memory_space<vmem>>, %arg19: memref<1x1x32xf32, #tpu.memory_space<vmem>>, %arg20: memref<32x128xbf16, #tpu.memory_space<vmem>>, %arg21: memref<1x128xf32, #tpu.memory_space<vmem>>, %arg22: memref<1x2x128xf32, #tpu.memory_space<vmem>>, %arg23: memref<16x32xf32, #tpu.memory_space<vmem>>) attributes {dimension_semantics = [#tpu.dimension_semantics<parallel>, #tpu.dimension_semantics<arbitrary>], iteration_bounds = array<i64: 1, 2>, scalar_prefetch = 0 : i64, scratch_operands = 1 : i64, tpu.core_type = #tpu.core_type<tc>, window_params = [{transform_indices = @transform_0, window_bounds = array<i64: 2, 8, 32>}, {transform_indices = @transform_1, window_bounds = array<i64: 2, 1, 8>}, {transform_indices = @transform_2, window_bounds = array<i64: 1, 32, 32>}, {transform_indices = @transform_3, window_bounds = array<i64: 1, 32, 32>}, {transform_indices = @transform_4, window_bounds = array<i64: 1, 32, 32>}, {transform_indices = @transform_5, window_bounds = array<i64: 1, 1, 32>}, {transform_indices = @transform_6, window_bounds = array<i64: 1, 1, 32>}, {transform_indices = @transform_7, window_bounds = array<i64: 1, 1, 32>}, {transform_indices = @transform_8, window_bounds = array<i64: 1, 32, 32>}, {transform_indices = @transform_9, window_bounds = array<i64: 1, 1, 32>}, {transform_indices = @transform_10, window_bounds = array<i64: 1, 1, 32>}, {transform_indices = @transform_11, window_bounds = array<i64: 1, 1, 32>}, {transform_indices = @transform_12, window_bounds = array<i64: 1, 32, 64>}, {transform_indices = @transform_13, window_bounds = array<i64: 1, 1, 64>}, {transform_indices = @transform_14, window_bounds = array<i64: 1, 64, 32>}, {transform_indices = @transform_15, window_bounds = array<i64: 1, 1, 32>}, {transform_indices = @transform_16, window_bounds = array<i64: 1, 1, 32>}, {transform_indices = @transform_17, window_bounds = array<i64: 1, 1, 32>}, {pipeline_mode = #tpu.pipeline_mode<synchronous>, transform_indices = @transform_18, window_bounds = array<i64: 32, 128>}, {pipeline_mode = #tpu.pipeline_mode<synchronous>, transform_indices = @transform_19, window_bounds = array<i64: 1, 128>}, {transform_indices = @transform_20, window_bounds = array<i64: 1, 2, 128>}]} {
    %c0_i32 = arith.constant 0 : i32
    %0 = arith.cmpi eq, %arg1, %c0_i32 : i32
    %1 = arith.extui %0 : i1 to i32
    %c0_i32_0 = arith.constant 0 : i32
    %2 = arith.cmpi ne, %1, %c0_i32_0 : i32
    scf.if %2 {
      %c0_92 = arith.constant 0 : index
      %c0_93 = arith.constant 0 : index
      %c0_94 = arith.constant 0 : index
      %203 = vector.load %arg2[%c0_92, %c0_93, %c0_94] : memref<2x8x32xf32, #tpu.memory_space<vmem>>, vector<2x8x32xf32>
      %204 = vector.shape_cast %203 : vector<2x8x32xf32> to vector<16x32xf32>
      %c0_95 = arith.constant 0 : index
      %c0_96 = arith.constant 0 : index
      %205 = vector.load %arg23[%c0_95, %c0_96] : memref<16x32xf32, #tpu.memory_space<vmem>>, vector<16x32xf32>
      tpu.vector_store %arg23[%c0_95, %c0_96], %204 {strides = array<i32>} : memref<16x32xf32, #tpu.memory_space<vmem>>, vector<16x32xf32>,
    } else {
    }
    %c0 = arith.constant 0 : index
    %c0_1 = arith.constant 0 : index
    %3 = vector.load %arg23[%c0, %c0_1] : memref<16x32xf32, #tpu.memory_space<vmem>>, vector<16x32xf32>
    %4 = arith.truncf %3 : vector<16x32xf32> to vector<16x32xbf16>
    %c0_2 = arith.constant 0 : index
    %c0_3 = arith.constant 0 : index
    %c0_4 = arith.constant 0 : index
    %5 = vector.load %arg4[%c0_2, %c0_3, %c0_4] : memref<1x32x32xbf16, #tpu.memory_space<vmem>>, vector<1x32x32xbf16>
    %6 = vector.shape_cast %5 : vector<1x32x32xbf16> to vector<32x32xbf16>
    %cst = arith.constant dense<0.000000e+00> : vector<16x32xf32>
    %7 = tpu.matmul %4, %6, %cst {dimension_numbers = #tpu.dot_dimension_numbers<[1], [0], [0], [1], [0, 0, 1, 1], [], []>} : vector<16x32xbf16>, vector<32x32xbf16>, vector<16x32xf32> -> vector<16x32xf32>
    %c0_5 = arith.constant 0 : index
    %c0_6 = arith.constant 0 : index
    %c0_7 = arith.constant 0 : index
    %8 = vector.load %arg7[%c0_5, %c0_6, %c0_7] : memref<1x1x32xf32, #tpu.memory_space<vmem>>, vector<1x1x32xf32>
    %9 = vector.shape_cast %8 : vector<1x1x32xf32> to vector<1x32xf32>
    %10 = vector.broadcast %9 : vector<1x32xf32> to vector<16x32xf32>
    %11 = arith.addf %7, %10 : vector<16x32xf32>
    %12 = arith.truncf %11 : vector<16x32xf32> to vector<16x32xbf16>
    %c0_8 = arith.constant 0 : index
    %c0_9 = arith.constant 0 : index
    %c0_10 = arith.constant 0 : index
    %13 = vector.load %arg5[%c0_8, %c0_9, %c0_10] : memref<1x32x32xbf16, #tpu.memory_space<vmem>>, vector<1x32x32xbf16>
    %14 = vector.shape_cast %13 : vector<1x32x32xbf16> to vector<32x32xbf16>
    %cst_11 = arith.constant dense<0.000000e+00> : vector<16x32xf32>
    %15 = tpu.matmul %4, %14, %cst_11 {dimension_numbers = #tpu.dot_dimension_numbers<[1], [0], [0], [1], [0, 0, 1, 1], [], []>} : vector<16x32xbf16>, vector<32x32xbf16>, vector<16x32xf32> -> vector<16x32xf32>
    %c0_12 = arith.constant 0 : index
    %c0_13 = arith.constant 0 : index
    %c0_14 = arith.constant 0 : index
    %16 = vector.load %arg8[%c0_12, %c0_13, %c0_14] : memref<1x1x32xf32, #tpu.memory_space<vmem>>, vector<1x1x32xf32>
    %17 = vector.shape_cast %16 : vector<1x1x32xf32> to vector<1x32xf32>
    %18 = vector.broadcast %17 : vector<1x32xf32> to vector<16x32xf32>
    %19 = arith.addf %15, %18 : vector<16x32xf32>
    %20 = arith.truncf %19 : vector<16x32xf32> to vector<16x32xbf16>
    %c0_15 = arith.constant 0 : index
    %c0_16 = arith.constant 0 : index
    %c0_17 = arith.constant 0 : index
    %21 = vector.load %arg6[%c0_15, %c0_16, %c0_17] : memref<1x32x32xbf16, #tpu.memory_space<vmem>>, vector<1x32x32xbf16>
    %22 = vector.shape_cast %21 : vector<1x32x32xbf16> to vector<32x32xbf16>
    %cst_18 = arith.constant dense<0.000000e+00> : vector<16x32xf32>
    %23 = tpu.matmul %4, %22, %cst_18 {dimension_numbers = #tpu.dot_dimension_numbers<[1], [0], [0], [1], [0, 0, 1, 1], [], []>} : vector<16x32xbf16>, vector<32x32xbf16>, vector<16x32xf32> -> vector<16x32xf32>
    %c0_19 = arith.constant 0 : index
    %c0_20 = arith.constant 0 : index
    %c0_21 = arith.constant 0 : index
    %24 = vector.load %arg9[%c0_19, %c0_20, %c0_21] : memref<1x1x32xf32, #tpu.memory_space<vmem>>, vector<1x1x32xf32>
    %25 = vector.shape_cast %24 : vector<1x1x32xf32> to vector<1x32xf32>
    %26 = vector.broadcast %25 : vector<1x32xf32> to vector<16x32xf32>
    %27 = arith.addf %23, %26 : vector<16x32xf32>
    %28 = arith.truncf %27 : vector<16x32xf32> to vector<16x32xbf16>
    %c0_22 = arith.constant 0 : index
    %c0_23 = arith.constant 0 : index
    %c0_24 = arith.constant 0 : index
    %29 = vector.load %arg3[%c0_22, %c0_23, %c0_24] : memref<2x1x8xf32, #tpu.memory_space<vmem>>, vector<2x1x8xf32>
    %30 = vector.extract_strided_slice %12 {offsets = [0, 0], sizes = [8, 32], strides = [1, 1]} : vector<16x32xbf16> to vector<8x32xbf16>
    %31 = vector.extract_strided_slice %20 {offsets = [0, 0], sizes = [8, 32], strides = [1, 1]} : vector<16x32xbf16> to vector<8x32xbf16>
    %32 = vector.extract_strided_slice %28 {offsets = [0, 0], sizes = [8, 32], strides = [1, 1]} : vector<16x32xbf16> to vector<8x32xbf16>
    %33 = vector.extract_strided_slice %30 {offsets = [0, 0], sizes = [8, 8], strides = [1, 1]} : vector<8x32xbf16> to vector<8x8xbf16>
    %34 = vector.extract_strided_slice %31 {offsets = [0, 0], sizes = [8, 8], strides = [1, 1]} : vector<8x32xbf16> to vector<8x8xbf16>
    %cst_25 = arith.constant dense<0.000000e+00> : vector<8x8xf32>
    %35 = tpu.matmul %33, %34, %cst_25 {dimension_numbers = #tpu.dot_dimension_numbers<[1], [1], [0], [0], [0, 0, 1, 0], [], []>} : vector<8x8xbf16>, vector<8x8xbf16>, vector<8x8xf32> -> vector<8x8xf32>
    %36 = vector.extract_strided_slice %30 {offsets = [0, 8], sizes = [8, 8], strides = [1, 1]} : vector<8x32xbf16> to vector<8x8xbf16>
    %37 = vector.extract_strided_slice %31 {offsets = [0, 8], sizes = [8, 8], strides = [1, 1]} : vector<8x32xbf16> to vector<8x8xbf16>
    %cst_26 = arith.constant dense<0.000000e+00> : vector<8x8xf32>
    %38 = tpu.matmul %36, %37, %cst_26 {dimension_numbers = #tpu.dot_dimension_numbers<[1], [1], [0], [0], [0, 0, 1, 0], [], []>} : vector<8x8xbf16>, vector<8x8xbf16>, vector<8x8xf32> -> vector<8x8xf32>
    %39 = vector.extract_strided_slice %30 {offsets = [0, 16], sizes = [8, 8], strides = [1, 1]} : vector<8x32xbf16> to vector<8x8xbf16>
    %40 = vector.extract_strided_slice %31 {offsets = [0, 16], sizes = [8, 8], strides = [1, 1]} : vector<8x32xbf16> to vector<8x8xbf16>
    %cst_27 = arith.constant dense<0.000000e+00> : vector<8x8xf32>
    %41 = tpu.matmul %39, %40, %cst_27 {dimension_numbers = #tpu.dot_dimension_numbers<[1], [1], [0], [0], [0, 0, 1, 0], [], []>} : vector<8x8xbf16>, vector<8x8xbf16>, vector<8x8xf32> -> vector<8x8xf32>
    %42 = vector.extract_strided_slice %30 {offsets = [0, 24], sizes = [8, 8], strides = [1, 1]} : vector<8x32xbf16> to vector<8x8xbf16>
    %43 = vector.extract_strided_slice %31 {offsets = [0, 24], sizes = [8, 8], strides = [1, 1]} : vector<8x32xbf16> to vector<8x8xbf16>
    %cst_28 = arith.constant dense<0.000000e+00> : vector<8x8xf32>
    %44 = tpu.matmul %42, %43, %cst_28 {dimension_numbers = #tpu.dot_dimension_numbers<[1], [1], [0], [0], [0, 0, 1, 0], [], []>} : vector<8x8xbf16>, vector<8x8xbf16>, vector<8x8xf32> -> vector<8x8xf32>
    %45 = tpu.concatenate %35, %38, %41, %44 in 0 : vector<8x8xf32>, vector<8x8xf32>, vector<8x8xf32>, vector<8x8xf32> -> vector<32x8xf32>
    %46 = vector.extract_strided_slice %29 {offsets = [0, 0, 0], sizes = [1, 1, 8], strides = [1, 1, 1]} : vector<2x1x8xf32> to vector<1x1x8xf32>
    %47 = vector.shape_cast %46 : vector<1x1x8xf32> to vector<1x8xf32>
    %48 = vector.broadcast %47 : vector<1x8xf32> to vector<32x8xf32>
    %49 = arith.addf %45, %48 : vector<32x8xf32>
    %cst_29 = arith.constant dense<0xFF800000> : vector<32xf32>
    %50 = vector.multi_reduction <maximumf>, %49, %cst_29 [1] : vector<32x8xf32> to vector<32xf32>
    %51 = vector.shape_cast %50 : vector<32xf32> to vector<32x1xf32>
    %52 = vector.broadcast %51 : vector<32x1xf32> to vector<32x8xf32>
    %53 = arith.subf %49, %52 : vector<32x8xf32>
    %54 = math.exp %53 : vector<32x8xf32>
    %cst_30 = arith.constant dense<0.000000e+00> : vector<32xf32>
    %55 = vector.multi_reduction <add>, %54, %cst_30 [1] : vector<32x8xf32> to vector<32xf32>
    %56 = vector.shape_cast %55 : vector<32xf32> to vector<32x1xf32>
    %57 = tpu.reciprocal %56 {approx = true} : vector<32x1xf32> -> vector<32x1xf32>
    %58 = vector.broadcast %57 : vector<32x1xf32> to vector<32x8xf32>
    %59 = arith.mulf %54, %58 : vector<32x8xf32>
    %60 = arith.truncf %59 : vector<32x8xf32> to vector<32x8xbf16>
    %61 = vector.extract_strided_slice %60 {offsets = [0, 0], sizes = [8, 8], strides = [1, 1]} : vector<32x8xbf16> to vector<8x8xbf16>
    %62 = vector.extract_strided_slice %32 {offsets = [0, 0], sizes = [8, 8], strides = [1, 1]} : vector<8x32xbf16> to vector<8x8xbf16>
    %cst_31 = arith.constant dense<0.000000e+00> : vector<8x8xf32>
    %63 = tpu.matmul %61, %62, %cst_31 {dimension_numbers = #tpu.dot_dimension_numbers<[1], [0], [0], [1], [0, 0, 1, 1], [], []>} : vector<8x8xbf16>, vector<8x8xbf16>, vector<8x8xf32> -> vector<8x8xf32>
    %64 = vector.extract_strided_slice %60 {offsets = [8, 0], sizes = [8, 8], strides = [1, 1]} : vector<32x8xbf16> to vector<8x8xbf16>
    %65 = vector.extract_strided_slice %32 {offsets = [0, 8], sizes = [8, 8], strides = [1, 1]} : vector<8x32xbf16> to vector<8x8xbf16>
    %cst_32 = arith.constant dense<0.000000e+00> : vector<8x8xf32>
    %66 = tpu.matmul %64, %65, %cst_32 {dimension_numbers = #tpu.dot_dimension_numbers<[1], [0], [0], [1], [0, 0, 1, 1], [], []>} : vector<8x8xbf16>, vector<8x8xbf16>, vector<8x8xf32> -> vector<8x8xf32>
    %67 = vector.extract_strided_slice %60 {offsets = [16, 0], sizes = [8, 8], strides = [1, 1]} : vector<32x8xbf16> to vector<8x8xbf16>
    %68 = vector.extract_strided_slice %32 {offsets = [0, 16], sizes = [8, 8], strides = [1, 1]} : vector<8x32xbf16> to vector<8x8xbf16>
    %cst_33 = arith.constant dense<0.000000e+00> : vector<8x8xf32>
    %69 = tpu.matmul %67, %68, %cst_33 {dimension_numbers = #tpu.dot_dimension_numbers<[1], [0], [0], [1], [0, 0, 1, 1], [], []>} : vector<8x8xbf16>, vector<8x8xbf16>, vector<8x8xf32> -> vector<8x8xf32>
    %70 = vector.extract_strided_slice %60 {offsets = [24, 0], sizes = [8, 8], strides = [1, 1]} : vector<32x8xbf16> to vector<8x8xbf16>
    %71 = vector.extract_strided_slice %32 {offsets = [0, 24], sizes = [8, 8], strides = [1, 1]} : vector<8x32xbf16> to vector<8x8xbf16>
    %cst_34 = arith.constant dense<0.000000e+00> : vector<8x8xf32>
    %72 = tpu.matmul %70, %71, %cst_34 {dimension_numbers = #tpu.dot_dimension_numbers<[1], [0], [0], [1], [0, 0, 1, 1], [], []>} : vector<8x8xbf16>, vector<8x8xbf16>, vector<8x8xf32> -> vector<8x8xf32>
    %73 = tpu.concatenate %63, %66, %69, %72 in 1 : vector<8x8xf32>, vector<8x8xf32>, vector<8x8xf32>, vector<8x8xf32> -> vector<8x32xf32>
    %74 = vector.extract_strided_slice %12 {offsets = [8, 0], sizes = [8, 32], strides = [1, 1]} : vector<16x32xbf16> to vector<8x32xbf16>
    %75 = vector.extract_strided_slice %20 {offsets = [8, 0], sizes = [8, 32], strides = [1, 1]} : vector<16x32xbf16> to vector<8x32xbf16>
    %76 = vector.extract_strided_slice %28 {offsets = [8, 0], sizes = [8, 32], strides = [1, 1]} : vector<16x32xbf16> to vector<8x32xbf16>
    %77 = vector.extract_strided_slice %74 {offsets = [0, 0], sizes = [8, 8], strides = [1, 1]} : vector<8x32xbf16> to vector<8x8xbf16>
    %78 = vector.extract_strided_slice %75 {offsets = [0, 0], sizes = [8, 8], strides = [1, 1]} : vector<8x32xbf16> to vector<8x8xbf16>
    %cst_35 = arith.constant dense<0.000000e+00> : vector<8x8xf32>
    %79 = tpu.matmul %77, %78, %cst_35 {dimension_numbers = #tpu.dot_dimension_numbers<[1], [1], [0], [0], [0, 0, 1, 0], [], []>} : vector<8x8xbf16>, vector<8x8xbf16>, vector<8x8xf32> -> vector<8x8xf32>
    %80 = vector.extract_strided_slice %74 {offsets = [0, 8], sizes = [8, 8], strides = [1, 1]} : vector<8x32xbf16> to vector<8x8xbf16>
    %81 = vector.extract_strided_slice %75 {offsets = [0, 8], sizes = [8, 8], strides = [1, 1]} : vector<8x32xbf16> to vector<8x8xbf16>
    %cst_36 = arith.constant dense<0.000000e+00> : vector<8x8xf32>
    %82 = tpu.matmul %80, %81, %cst_36 {dimension_numbers = #tpu.dot_dimension_numbers<[1], [1], [0], [0], [0, 0, 1, 0], [], []>} : vector<8x8xbf16>, vector<8x8xbf16>, vector<8x8xf32> -> vector<8x8xf32>
    %83 = vector.extract_strided_slice %74 {offsets = [0, 16], sizes = [8, 8], strides = [1, 1]} : vector<8x32xbf16> to vector<8x8xbf16>
    %84 = vector.extract_strided_slice %75 {offsets = [0, 16], sizes = [8, 8], strides = [1, 1]} : vector<8x32xbf16> to vector<8x8xbf16>
    %cst_37 = arith.constant dense<0.000000e+00> : vector<8x8xf32>
    %85 = tpu.matmul %83, %84, %cst_37 {dimension_numbers = #tpu.dot_dimension_numbers<[1], [1], [0], [0], [0, 0, 1, 0], [], []>} : vector<8x8xbf16>, vector<8x8xbf16>, vector<8x8xf32> -> vector<8x8xf32>
    %86 = vector.extract_strided_slice %74 {offsets = [0, 24], sizes = [8, 8], strides = [1, 1]} : vector<8x32xbf16> to vector<8x8xbf16>
    %87 = vector.extract_strided_slice %75 {offsets = [0, 24], sizes = [8, 8], strides = [1, 1]} : vector<8x32xbf16> to vector<8x8xbf16>
    %cst_38 = arith.constant dense<0.000000e+00> : vector<8x8xf32>
    %88 = tpu.matmul %86, %87, %cst_38 {dimension_numbers = #tpu.dot_dimension_numbers<[1], [1], [0], [0], [0, 0, 1, 0], [], []>} : vector<8x8xbf16>, vector<8x8xbf16>, vector<8x8xf32> -> vector<8x8xf32>
    %89 = tpu.concatenate %79, %82, %85, %88 in 0 : vector<8x8xf32>, vector<8x8xf32>, vector<8x8xf32>, vector<8x8xf32> -> vector<32x8xf32>
    %90 = vector.extract_strided_slice %29 {offsets = [1, 0, 0], sizes = [1, 1, 8], strides = [1, 1, 1]} : vector<2x1x8xf32> to vector<1x1x8xf32>
    %91 = vector.shape_cast %90 : vector<1x1x8xf32> to vector<1x8xf32>
    %92 = vector.broadcast %91 : vector<1x8xf32> to vector<32x8xf32>
    %93 = arith.addf %89, %92 : vector<32x8xf32>
    %cst_39 = arith.constant dense<0xFF800000> : vector<32xf32>
    %94 = vector.multi_reduction <maximumf>, %93, %cst_39 [1] : vector<32x8xf32> to vector<32xf32>
    %95 = vector.shape_cast %94 : vector<32xf32> to vector<32x1xf32>
    %96 = vector.broadcast %95 : vector<32x1xf32> to vector<32x8xf32>
    %97 = arith.subf %93, %96 : vector<32x8xf32>
    %98 = math.exp %97 : vector<32x8xf32>
    %cst_40 = arith.constant dense<0.000000e+00> : vector<32xf32>
    %99 = vector.multi_reduction <add>, %98, %cst_40 [1] : vector<32x8xf32> to vector<32xf32>
    %100 = vector.shape_cast %99 : vector<32xf32> to vector<32x1xf32>
    %101 = tpu.reciprocal %100 {approx = true} : vector<32x1xf32> -> vector<32x1xf32>
    %102 = vector.broadcast %101 : vector<32x1xf32> to vector<32x8xf32>
    %103 = arith.mulf %98, %102 : vector<32x8xf32>
    %104 = arith.truncf %103 : vector<32x8xf32> to vector<32x8xbf16>
    %105 = vector.extract_strided_slice %104 {offsets = [0, 0], sizes = [8, 8], strides = [1, 1]} : vector<32x8xbf16> to vector<8x8xbf16>
    %106 = vector.extract_strided_slice %76 {offsets = [0, 0], sizes = [8, 8], strides = [1, 1]} : vector<8x32xbf16> to vector<8x8xbf16>
    %cst_41 = arith.constant dense<0.000000e+00> : vector<8x8xf32>
    %107 = tpu.matmul %105, %106, %cst_41 {dimension_numbers = #tpu.dot_dimension_numbers<[1], [0], [0], [1], [0, 0, 1, 1], [], []>} : vector<8x8xbf16>, vector<8x8xbf16>, vector<8x8xf32> -> vector<8x8xf32>
    %108 = vector.extract_strided_slice %104 {offsets = [8, 0], sizes = [8, 8], strides = [1, 1]} : vector<32x8xbf16> to vector<8x8xbf16>
    %109 = vector.extract_strided_slice %76 {offsets = [0, 8], sizes = [8, 8], strides = [1, 1]} : vector<8x32xbf16> to vector<8x8xbf16>
    %cst_42 = arith.constant dense<0.000000e+00> : vector<8x8xf32>
    %110 = tpu.matmul %108, %109, %cst_42 {dimension_numbers = #tpu.dot_dimension_numbers<[1], [0], [0], [1], [0, 0, 1, 1], [], []>} : vector<8x8xbf16>, vector<8x8xbf16>, vector<8x8xf32> -> vector<8x8xf32>
    %111 = vector.extract_strided_slice %104 {offsets = [16, 0], sizes = [8, 8], strides = [1, 1]} : vector<32x8xbf16> to vector<8x8xbf16>
    %112 = vector.extract_strided_slice %76 {offsets = [0, 16], sizes = [8, 8], strides = [1, 1]} : vector<8x32xbf16> to vector<8x8xbf16>
    %cst_43 = arith.constant dense<0.000000e+00> : vector<8x8xf32>
    %113 = tpu.matmul %111, %112, %cst_43 {dimension_numbers = #tpu.dot_dimension_numbers<[1], [0], [0], [1], [0, 0, 1, 1], [], []>} : vector<8x8xbf16>, vector<8x8xbf16>, vector<8x8xf32> -> vector<8x8xf32>
    %114 = vector.extract_strided_slice %104 {offsets = [24, 0], sizes = [8, 8], strides = [1, 1]} : vector<32x8xbf16> to vector<8x8xbf16>
    %115 = vector.extract_strided_slice %76 {offsets = [0, 24], sizes = [8, 8], strides = [1, 1]} : vector<8x32xbf16> to vector<8x8xbf16>
    %cst_44 = arith.constant dense<0.000000e+00> : vector<8x8xf32>
    %116 = tpu.matmul %114, %115, %cst_44 {dimension_numbers = #tpu.dot_dimension_numbers<[1], [0], [0], [1], [0, 0, 1, 1], [], []>} : vector<8x8xbf16>, vector<8x8xbf16>, vector<8x8xf32> -> vector<8x8xf32>
    %117 = tpu.concatenate %107, %110, %113, %116 in 1 : vector<8x8xf32>, vector<8x8xf32>, vector<8x8xf32>, vector<8x8xf32> -> vector<8x32xf32>
    %118 = tpu.concatenate %73, %117 in 0 : vector<8x32xf32>, vector<8x32xf32> -> vector<16x32xf32>
    %119 = arith.truncf %118 : vector<16x32xf32> to vector<16x32xbf16>
    %c0_45 = arith.constant 0 : index
    %c0_46 = arith.constant 0 : index
    %c0_47 = arith.constant 0 : index
    %120 = vector.load %arg10[%c0_45, %c0_46, %c0_47] : memref<1x32x32xbf16, #tpu.memory_space<vmem>>, vector<1x32x32xbf16>
    %121 = vector.shape_cast %120 : vector<1x32x32xbf16> to vector<32x32xbf16>
    %cst_48 = arith.constant dense<0.000000e+00> : vector<16x32xf32>
    %122 = tpu.matmul %119, %121, %cst_48 {dimension_numbers = #tpu.dot_dimension_numbers<[1], [0], [0], [1], [0, 0, 1, 1], [], []>} : vector<16x32xbf16>, vector<32x32xbf16>, vector<16x32xf32> -> vector<16x32xf32>
    %c0_49 = arith.constant 0 : index
    %c0_50 = arith.constant 0 : index
    %c0_51 = arith.constant 0 : index
    %123 = vector.load %arg11[%c0_49, %c0_50, %c0_51] : memref<1x1x32xf32, #tpu.memory_space<vmem>>, vector<1x1x32xf32>
    %124 = vector.shape_cast %123 : vector<1x1x32xf32> to vector<1x32xf32>
    %125 = vector.broadcast %124 : vector<1x32xf32> to vector<16x32xf32>
    %126 = arith.addf %122, %125 : vector<16x32xf32>
    %127 = arith.addf %3, %126 : vector<16x32xf32>
    %c0_52 = arith.constant 0 : index
    %c0_53 = arith.constant 0 : index
    %c0_54 = arith.constant 0 : index
    %128 = vector.load %arg12[%c0_52, %c0_53, %c0_54] : memref<1x1x32xf32, #tpu.memory_space<vmem>>, vector<1x1x32xf32>
    %129 = vector.shape_cast %128 : vector<1x1x32xf32> to vector<1x32xf32>
    %c0_55 = arith.constant 0 : index
    %c0_56 = arith.constant 0 : index
    %c0_57 = arith.constant 0 : index
    %130 = vector.load %arg13[%c0_55, %c0_56, %c0_57] : memref<1x1x32xf32, #tpu.memory_space<vmem>>, vector<1x1x32xf32>
    %131 = vector.shape_cast %130 : vector<1x1x32xf32> to vector<1x32xf32>
    %cst_58 = arith.constant dense<0.000000e+00> : vector<16xf32>
    %132 = vector.multi_reduction <add>, %127, %cst_58 [1] : vector<16x32xf32> to vector<16xf32>
    %133 = vector.shape_cast %132 : vector<16xf32> to vector<16x1xf32>
    %cst_59 = arith.constant 3.200000e+01 : f32
    %134 = vector.broadcast %cst_59 : f32 to vector<16x1xf32>
    %135 = arith.divf %133, %134 : vector<16x1xf32>
    %136 = vector.broadcast %135 : vector<16x1xf32> to vector<16x32xf32>
    %137 = arith.subf %127, %136 : vector<16x32xf32>
    %138 = arith.mulf %137, %137 : vector<16x32xf32>
    %cst_60 = arith.constant dense<0.000000e+00> : vector<16xf32>
    %139 = vector.multi_reduction <add>, %138, %cst_60 [1] : vector<16x32xf32> to vector<16xf32>
    %140 = vector.shape_cast %139 : vector<16xf32> to vector<16x1xf32>
    %cst_61 = arith.constant 3.200000e+01 : f32
    %141 = vector.broadcast %cst_61 : f32 to vector<16x1xf32>
    %142 = arith.divf %140, %141 : vector<16x1xf32>
    %143 = vector.broadcast %135 : vector<16x1xf32> to vector<16x32xf32>
    %144 = arith.subf %127, %143 : vector<16x32xf32>
    %cst_62 = arith.constant 9.99999974E-6 : f32
    %145 = vector.broadcast %cst_62 : f32 to vector<16x1xf32>
    %146 = arith.addf %142, %145 : vector<16x1xf32>
    %147 = math.rsqrt %146 : vector<16x1xf32>
    %148 = vector.broadcast %147 : vector<16x1xf32> to vector<16x32xf32>
    %149 = arith.mulf %144, %148 : vector<16x32xf32>
    %150 = vector.broadcast %129 : vector<1x32xf32> to vector<16x32xf32>
    %151 = arith.mulf %149, %150 : vector<16x32xf32>
    %152 = vector.broadcast %131 : vector<1x32xf32> to vector<16x32xf32>
    %153 = arith.addf %151, %152 : vector<16x32xf32>
    %154 = arith.truncf %153 : vector<16x32xf32> to vector<16x32xbf16>
    %c0_63 = arith.constant 0 : index
    %c0_64 = arith.constant 0 : index
    %c0_65 = arith.constant 0 : index
    %155 = vector.load %arg14[%c0_63, %c0_64, %c0_65] : memref<1x32x64xbf16, #tpu.memory_space<vmem>>, vector<1x32x64xbf16>
    %156 = vector.shape_cast %155 : vector<1x32x64xbf16> to vector<32x64xbf16>
    %cst_66 = arith.constant dense<0.000000e+00> : vector<16x64xf32>
    %157 = tpu.matmul %154, %156, %cst_66 {dimension_numbers = #tpu.dot_dimension_numbers<[1], [0], [0], [1], [0, 0, 1, 1], [], []>} : vector<16x32xbf16>, vector<32x64xbf16>, vector<16x64xf32> -> vector<16x64xf32>
    %c0_67 = arith.constant 0 : index
    %c0_68 = arith.constant 0 : index
    %c0_69 = arith.constant 0 : index
    %158 = vector.load %arg15[%c0_67, %c0_68, %c0_69] : memref<1x1x64xf32, #tpu.memory_space<vmem>>, vector<1x1x64xf32>
    %159 = vector.shape_cast %158 : vector<1x1x64xf32> to vector<1x64xf32>
    %160 = vector.broadcast %159 : vector<1x64xf32> to vector<16x64xf32>
    %161 = arith.addf %157, %160 : vector<16x64xf32>
    %cst_70 = arith.constant 0.000000e+00 : f32
    %162 = vector.broadcast %cst_70 : f32 to vector<16x64xf32>
    %163 = arith.maximumf %161, %162 : vector<16x64xf32>
    %164 = arith.truncf %163 : vector<16x64xf32> to vector<16x64xbf16>
    %c0_71 = arith.constant 0 : index
    %c0_72 = arith.constant 0 : index
    %c0_73 = arith.constant 0 : index
    %165 = vector.load %arg16[%c0_71, %c0_72, %c0_73] : memref<1x64x32xbf16, #tpu.memory_space<vmem>>, vector<1x64x32xbf16>
    %166 = vector.shape_cast %165 : vector<1x64x32xbf16> to vector<64x32xbf16>
    %cst_74 = arith.constant dense<0.000000e+00> : vector<16x32xf32>
    %167 = tpu.matmul %164, %166, %cst_74 {dimension_numbers = #tpu.dot_dimension_numbers<[1], [0], [0], [1], [0, 0, 1, 1], [], []>} : vector<16x64xbf16>, vector<64x32xbf16>, vector<16x32xf32> -> vector<16x32xf32>
    %c0_75 = arith.constant 0 : index
    %c0_76 = arith.constant 0 : index
    %c0_77 = arith.constant 0 : index
    %168 = vector.load %arg17[%c0_75, %c0_76, %c0_77] : memref<1x1x32xf32, #tpu.memory_space<vmem>>, vector<1x1x32xf32>
    %169 = vector.shape_cast %168 : vector<1x1x32xf32> to vector<1x32xf32>
    %170 = vector.broadcast %169 : vector<1x32xf32> to vector<16x32xf32>
    %171 = arith.addf %167, %170 : vector<16x32xf32>
    %172 = arith.addf %153, %171 : vector<16x32xf32>
    %c0_78 = arith.constant 0 : index
    %c0_79 = arith.constant 0 : index
    %c0_80 = arith.constant 0 : index
    %173 = vector.load %arg18[%c0_78, %c0_79, %c0_80] : memref<1x1x32xf32, #tpu.memory_space<vmem>>, vector<1x1x32xf32>
    %174 = vector.shape_cast %173 : vector<1x1x32xf32> to vector<1x32xf32>
    %c0_81 = arith.constant 0 : index
    %c0_82 = arith.constant 0 : index
    %c0_83 = arith.constant 0 : index
    %175 = vector.load %arg19[%c0_81, %c0_82, %c0_83] : memref<1x1x32xf32, #tpu.memory_space<vmem>>, vector<1x1x32xf32>
    %176 = vector.shape_cast %175 : vector<1x1x32xf32> to vector<1x32xf32>
    %cst_84 = arith.constant dense<0.000000e+00> : vector<16xf32>
    %177 = vector.multi_reduction <add>, %172, %cst_84 [1] : vector<16x32xf32> to vector<16xf32>
    %178 = vector.shape_cast %177 : vector<16xf32> to vector<16x1xf32>
    %cst_85 = arith.constant 3.200000e+01 : f32
    %179 = vector.broadcast %cst_85 : f32 to vector<16x1xf32>
    %180 = arith.divf %178, %179 : vector<16x1xf32>
    %181 = vector.broadcast %180 : vector<16x1xf32> to vector<16x32xf32>
    %182 = arith.subf %172, %181 : vector<16x32xf32>
    %183 = arith.mulf %182, %182 : vector<16x32xf32>
    %cst_86 = arith.constant dense<0.000000e+00> : vector<16xf32>
    %184 = vector.multi_reduction <add>, %183, %cst_86 [1] : vector<16x32xf32> to vector<16xf32>
    %185 = vector.shape_cast %184 : vector<16xf32> to vector<16x1xf32>
    %cst_87 = arith.constant 3.200000e+01 : f32
    %186 = vector.broadcast %cst_87 : f32 to vector<16x1xf32>
    %187 = arith.divf %185, %186 : vector<16x1xf32>
    %188 = vector.broadcast %180 : vector<16x1xf32> to vector<16x32xf32>
    %189 = arith.subf %172, %188 : vector<16x32xf32>
    %cst_88 = arith.constant 9.99999974E-6 : f32
    %190 = vector.broadcast %cst_88 : f32 to vector<16x1xf32>
    %191 = arith.addf %187, %190 : vector<16x1xf32>
    %192 = math.rsqrt %191 : vector<16x1xf32>
    %193 = vector.broadcast %192 : vector<16x1xf32> to vector<16x32xf32>
    %194 = arith.mulf %189, %193 : vector<16x32xf32>
    %195 = vector.broadcast %174 : vector<1x32xf32> to vector<16x32xf32>
    %196 = arith.mulf %194, %195 : vector<16x32xf32>
    %197 = vector.broadcast %176 : vector<1x32xf32> to vector<16x32xf32>
    %198 = arith.addf %196, %197 : vector<16x32xf32>
    %c0_89 = arith.constant 0 : index
    %c0_90 = arith.constant 0 : index
    %199 = vector.load %arg23[%c0_89, %c0_90] : memref<16x32xf32, #tpu.memory_space<vmem>>, vector<16x32xf32>
    tpu.vector_store %arg23[%c0_89, %c0_90], %198 {strides = array<i32>} : memref<16x32xf32, #tpu.memory_space<vmem>>, vector<16x32xf32>,
    %c1_i32 = arith.constant 1 : i32
    %200 = arith.cmpi eq, %arg1, %c1_i32 : i32
    %201 = arith.extui %200 : i1 to i32
    %c0_i32_91 = arith.constant 0 : i32
    %202 = arith.cmpi ne, %201, %c0_i32_91 : i32
    scf.if %202 {
      %203 = vector.extract_strided_slice %29 {offsets = [0, 0, 0], sizes = [1, 1, 8], strides = [1, 1, 1]} : vector<2x1x8xf32> to vector<1x1x8xf32>
      %204 = vector.shape_cast %203 : vector<1x1x8xf32> to vector<1x8xf32>
      %cst_92 = arith.constant 0.000000e+00 : f32
      %205 = vector.broadcast %cst_92 : f32 to vector<1x8xf32>
      %206 = arith.cmpf oeq, %204, %205 : vector<1x8xf32>
      %207 = arith.extui %206 : vector<1x8xi1> to vector<1x8xi32>
      %208 = arith.sitofp %207 : vector<1x8xi32> to vector<1x8xf32>
      %209 = vector.extract_strided_slice %198 {offsets = [0, 0], sizes = [8, 32], strides = [1, 1]} : vector<16x32xf32> to vector<8x32xf32>
      %cst_93 = arith.constant dense<0.000000e+00> : vector<1x32xf32>
      %210 = tpu.matmul %208, %209, %cst_93 {dimension_numbers = #tpu.dot_dimension_numbers<[1], [0], [0], [1], [0, 0, 1, 1], [], []>} : vector<1x8xf32>, vector<8x32xf32>, vector<1x32xf32> -> vector<1x32xf32>
      %cst_94 = arith.constant dense<0.000000e+00> : vector<1xf32>
      %211 = vector.multi_reduction <add>, %208, %cst_94 [1] : vector<1x8xf32> to vector<1xf32>
      %212 = vector.shape_cast %211 : vector<1xf32> to vector<1x1xf32>
      %cst_95 = arith.constant 1.000000e+00 : f32
      %213 = vector.broadcast %cst_95 : f32 to vector<1x1xf32>
      %214 = arith.maximumf %212, %213 : vector<1x1xf32>
      %215 = vector.broadcast %214 : vector<1x1xf32> to vector<1x32xf32>
      %216 = arith.divf %210, %215 : vector<1x32xf32>
      %217 = vector.extract_strided_slice %29 {offsets = [1, 0, 0], sizes = [1, 1, 8], strides = [1, 1, 1]} : vector<2x1x8xf32> to vector<1x1x8xf32>
      %218 = vector.shape_cast %217 : vector<1x1x8xf32> to vector<1x8xf32>
      %cst_96 = arith.constant 0.000000e+00 : f32
      %219 = vector.broadcast %cst_96 : f32 to vector<1x8xf32>
      %220 = arith.cmpf oeq, %218, %219 : vector<1x8xf32>
      %221 = arith.extui %220 : vector<1x8xi1> to vector<1x8xi32>
      %222 = arith.sitofp %221 : vector<1x8xi32> to vector<1x8xf32>
      %223 = vector.extract_strided_slice %198 {offsets = [8, 0], sizes = [8, 32], strides = [1, 1]} : vector<16x32xf32> to vector<8x32xf32>
      %cst_97 = arith.constant dense<0.000000e+00> : vector<1x32xf32>
      %224 = tpu.matmul %222, %223, %cst_97 {dimension_numbers = #tpu.dot_dimension_numbers<[1], [0], [0], [1], [0, 0, 1, 1], [], []>} : vector<1x8xf32>, vector<8x32xf32>, vector<1x32xf32> -> vector<1x32xf32>
      %cst_98 = arith.constant dense<0.000000e+00> : vector<1xf32>
      %225 = vector.multi_reduction <add>, %222, %cst_98 [1] : vector<1x8xf32> to vector<1xf32>
      %226 = vector.shape_cast %225 : vector<1xf32> to vector<1x1xf32>
      %cst_99 = arith.constant 1.000000e+00 : f32
      %227 = vector.broadcast %cst_99 : f32 to vector<1x1xf32>
      %228 = arith.maximumf %226, %227 : vector<1x1xf32>
      %229 = vector.broadcast %228 : vector<1x1xf32> to vector<1x32xf32>
      %230 = arith.divf %224, %229 : vector<1x32xf32>
      %231 = tpu.concatenate %216, %230 in 0 : vector<1x32xf32>, vector<1x32xf32> -> vector<2x32xf32>
      %232 = arith.truncf %231 : vector<2x32xf32> to vector<2x32xbf16>
      %c0_100 = arith.constant 0 : index
      %c0_101 = arith.constant 0 : index
      %233 = vector.load %arg20[%c0_100, %c0_101] : memref<32x128xbf16, #tpu.memory_space<vmem>>, vector<32x128xbf16>
      %cst_102 = arith.constant dense<0.000000e+00> : vector<2x128xf32>
      %234 = tpu.matmul %232, %233, %cst_102 {dimension_numbers = #tpu.dot_dimension_numbers<[1], [0], [0], [1], [0, 0, 1, 1], [], []>} : vector<2x32xbf16>, vector<32x128xbf16>, vector<2x128xf32> -> vector<2x128xf32>
      %c0_103 = arith.constant 0 : index
      %c0_104 = arith.constant 0 : index
      %235 = vector.load %arg21[%c0_103, %c0_104] : memref<1x128xf32, #tpu.memory_space<vmem>>, vector<1x128xf32>
      %236 = vector.broadcast %235 : vector<1x128xf32> to vector<2x128xf32>
      %237 = arith.addf %234, %236 : vector<2x128xf32>
      %238 = vector.shape_cast %237 : vector<2x128xf32> to vector<1x2x128xf32>
      %c0_105 = arith.constant 0 : index
      %c0_106 = arith.constant 0 : index
      %c0_107 = arith.constant 0 : index
      %239 = vector.load %arg22[%c0_105, %c0_106, %c0_107] : memref<1x2x128xf32, #tpu.memory_space<vmem>>, vector<1x2x128xf32>
      tpu.vector_store %arg22[%c0_105, %c0_106, %c0_107], %238 {strides = array<i32>} : memref<1x2x128xf32, #tpu.memory_space<vmem>>, vector<1x2x128xf32>,
    } else {
    }
    return
  }
  func.func @transform_0(%arg0: i32, %arg1: i32) -> (i32, i32, i32) {
    %c0_i32 = arith.constant 0 : i32
    %c0_i32_0 = arith.constant 0 : i32
    %c0_i32_1 = arith.constant 0 : i32
    return %arg0, %c0_i32, %c0_i32_0 : i32, i32, i32
  }
  func.func @transform_1(%arg0: i32, %arg1: i32) -> (i32, i32, i32) {
    %c0_i32 = arith.constant 0 : i32
    %c0_i32_0 = arith.constant 0 : i32
    %c0_i32_1 = arith.constant 0 : i32
    return %arg0, %c0_i32, %c0_i32_0 : i32, i32, i32
  }
  func.func @transform_2(%arg0: i32, %arg1: i32) -> (i32, i32, i32) {
    %c0_i32 = arith.constant 0 : i32
    %c0_i32_0 = arith.constant 0 : i32
    %c0_i32_1 = arith.constant 0 : i32
    return %arg1, %c0_i32, %c0_i32_0 : i32, i32, i32
  }
  func.func @transform_3(%arg0: i32, %arg1: i32) -> (i32, i32, i32) {
    %c0_i32 = arith.constant 0 : i32
    %c0_i32_0 = arith.constant 0 : i32
    %c0_i32_1 = arith.constant 0 : i32
    return %arg1, %c0_i32, %c0_i32_0 : i32, i32, i32
  }
  func.func @transform_4(%arg0: i32, %arg1: i32) -> (i32, i32, i32) {
    %c0_i32 = arith.constant 0 : i32
    %c0_i32_0 = arith.constant 0 : i32
    %c0_i32_1 = arith.constant 0 : i32
    return %arg1, %c0_i32, %c0_i32_0 : i32, i32, i32
  }
  func.func @transform_5(%arg0: i32, %arg1: i32) -> (i32, i32, i32) {
    %c0_i32 = arith.constant 0 : i32
    %c0_i32_0 = arith.constant 0 : i32
    %c0_i32_1 = arith.constant 0 : i32
    return %arg1, %c0_i32, %c0_i32_0 : i32, i32, i32
  }
  func.func @transform_6(%arg0: i32, %arg1: i32) -> (i32, i32, i32) {
    %c0_i32 = arith.constant 0 : i32
    %c0_i32_0 = arith.constant 0 : i32
    %c0_i32_1 = arith.constant 0 : i32
    return %arg1, %c0_i32, %c0_i32_0 : i32, i32, i32
  }
  func.func @transform_7(%arg0: i32, %arg1: i32) -> (i32, i32, i32) {
    %c0_i32 = arith.constant 0 : i32
    %c0_i32_0 = arith.constant 0 : i32
    %c0_i32_1 = arith.constant 0 : i32
    return %arg1, %c0_i32, %c0_i32_0 : i32, i32, i32
  }
  func.func @transform_8(%arg0: i32, %arg1: i32) -> (i32, i32, i32) {
    %c0_i32 = arith.constant 0 : i32
    %c0_i32_0 = arith.constant 0 : i32
    %c0_i32_1 = arith.constant 0 : i32
    return %arg1, %c0_i32, %c0_i32_0 : i32, i32, i32
  }
  func.func @transform_9(%arg0: i32, %arg1: i32) -> (i32, i32, i32) {
    %c0_i32 = arith.constant 0 : i32
    %c0_i32_0 = arith.constant 0 : i32
    %c0_i32_1 = arith.constant 0 : i32
    return %arg1, %c0_i32, %c0_i32_0 : i32, i32, i32
  }
  func.func @transform_10(%arg0: i32, %arg1: i32) -> (i32, i32, i32) {
    %c0_i32 = arith.constant 0 : i32
    %c0_i32_0 = arith.constant 0 : i32
    %c0_i32_1 = arith.constant 0 : i32
    return %arg1, %c0_i32, %c0_i32_0 : i32, i32, i32
  }
  func.func @transform_11(%arg0: i32, %arg1: i32) -> (i32, i32, i32) {
    %c0_i32 = arith.constant 0 : i32
    %c0_i32_0 = arith.constant 0 : i32
    %c0_i32_1 = arith.constant 0 : i32
    return %arg1, %c0_i32, %c0_i32_0 : i32, i32, i32
  }
  func.func @transform_12(%arg0: i32, %arg1: i32) -> (i32, i32, i32) {
    %c0_i32 = arith.constant 0 : i32
    %c0_i32_0 = arith.constant 0 : i32
    %c0_i32_1 = arith.constant 0 : i32
    return %arg1, %c0_i32, %c0_i32_0 : i32, i32, i32
  }
  func.func @transform_13(%arg0: i32, %arg1: i32) -> (i32, i32, i32) {
    %c0_i32 = arith.constant 0 : i32
    %c0_i32_0 = arith.constant 0 : i32
    %c0_i32_1 = arith.constant 0 : i32
    return %arg1, %c0_i32, %c0_i32_0 : i32, i32, i32
  }
  func.func @transform_14(%arg0: i32, %arg1: i32) -> (i32, i32, i32) {
    %c0_i32 = arith.constant 0 : i32
    %c0_i32_0 = arith.constant 0 : i32
    %c0_i32_1 = arith.constant 0 : i32
    return %arg1, %c0_i32, %c0_i32_0 : i32, i32, i32
  }
  func.func @transform_15(%arg0: i32, %arg1: i32) -> (i32, i32, i32) {
    %c0_i32 = arith.constant 0 : i32
    %c0_i32_0 = arith.constant 0 : i32
    %c0_i32_1 = arith.constant 0 : i32
    return %arg1, %c0_i32, %c0_i32_0 : i32, i32, i32
  }
  func.func @transform_16(%arg0: i32, %arg1: i32) -> (i32, i32, i32) {
    %c0_i32 = arith.constant 0 : i32
    %c0_i32_0 = arith.constant 0 : i32
    %c0_i32_1 = arith.constant 0 : i32
    return %arg1, %c0_i32, %c0_i32_0 : i32, i32, i32
  }
  func.func @transform_17(%arg0: i32, %arg1: i32) -> (i32, i32, i32) {
    %c0_i32 = arith.constant 0 : i32
    %c0_i32_0 = arith.constant 0 : i32
    %c0_i32_1 = arith.constant 0 : i32
    return %arg1, %c0_i32, %c0_i32_0 : i32, i32, i32
  }
  func.func @transform_18(%arg0: i32, %arg1: i32) -> (i32, i32) {
    %c0_i32 = arith.constant 0 : i32
    %c0_i32_0 = arith.constant 0 : i32
    %c0_i32_1 = arith.constant 0 : i32
    return %c0_i32, %c0_i32_0 : i32, i32
  }
  func.func @transform_19(%arg0: i32, %arg1: i32) -> (i32, i32) {
    %c0_i32 = arith.constant 0 : i32
    %c0_i32_0 = arith.constant 0 : i32
    %c0_i32_1 = arith.constant 0 : i32
    return %c0_i32, %c0_i32_0 : i32, i32
  }
  func.func @transform_20(%arg0: i32, %arg1: i32) -> (i32, i32, i32) {
    %c0_i32 = arith.constant 0 : i32
    %c0_i32_0 = arith.constant 0 : i32
    %c0_i32_1 = arith.constant 0 : i32
    return %arg0, %c0_i32, %c0_i32_0 : i32, i32, i32
  }
}

</mosaic_0001>

<llo_original>
// kernel: transformer_forward.1
$region0: #{transformer_forward.1}
  #allocation0 [shape = 'u32[]', space=smem, size = 0x4, offset = 0x4, fixed_abs, tag = 'smem constant byte address 0x4 - core index']
  #allocation1 [shape = 'u32[144,128]{1,0:T(1,128)}', space=vmem, size = 0x12000, scoped, tag = 'internal scratch']
  #allocation2 [shape = 'f32[16,32]{1,0:T(8,128)}', space=vmem, size = 0x2000, scoped, tag = 'scratch operand']
  %s0 = inlined_call_operand.vmem [shape: f32[2,8,32], index: 0, kind: input, shape index: {}]
  %s1 = inlined_call_operand.vmem [shape: f32[2,1,8], index: 1, kind: input, shape index: {}]
  %s2 = inlined_call_operand.vmem [shape: bf16[2,32,32], index: 2, kind: input, shape index: {}]
  %s3 = inlined_call_operand.vmem [shape: bf16[2,32,32], index: 3, kind: input, shape index: {}]
  %s4 = inlined_call_operand.vmem [shape: bf16[2,32,32], index: 4, kind: input, shape index: {}]
  %s5 = inlined_call_operand.vmem [shape: f32[2,1,32], index: 5, kind: input, shape index: {}]
  %s6 = inlined_call_operand.vmem [shape: f32[2,1,32], index: 6, kind: input, shape index: {}]
  %s7 = inlined_call_operand.vmem [shape: f32[2,1,32], index: 7, kind: input, shape index: {}]
  %s8 = inlined_call_operand.vmem [shape: bf16[2,32,32], index: 8, kind: input, shape index: {}]
  %s9 = inlined_call_operand.vmem [shape: f32[2,1,32], index: 9, kind: input, shape index: {}]
  %s10 = inlined_call_operand.vmem [shape: f32[2,1,32], index: 10, kind: input, shape index: {}]
  %s11 = inlined_call_operand.vmem [shape: f32[2,1,32], index: 11, kind: input, shape index: {}]
  %s12 = inlined_call_operand.vmem [shape: bf16[2,32,64], index: 12, kind: input, shape index: {}]
  %s13 = inlined_call_operand.vmem [shape: f32[2,1,64], index: 13, kind: input, shape index: {}]
  %s14 = inlined_call_operand.vmem [shape: bf16[2,64,32], index: 14, kind: input, shape index: {}]
  %s15 = inlined_call_operand.vmem [shape: f32[2,1,32], index: 15, kind: input, shape index: {}]
  %s16 = inlined_call_operand.vmem [shape: f32[2,1,32], index: 16, kind: input, shape index: {}]
  %s17 = inlined_call_operand.vmem [shape: f32[2,1,32], index: 17, kind: input, shape index: {}]
  %s18 = inlined_call_operand.vmem [shape: bf16[32,128], index: 18, kind: input, shape index: {}]
  %s19 = inlined_call_operand.vmem [shape: f32[1,128], index: 19, kind: input, shape index: {}]
  %s20 = inlined_call_operand.hbm [shape: f32[1,2,128], index: 20, kind: output, shape index: {}]
  %s21 = sld [smem:[#allocation0]]
  $region121: #{transformer_forward.1} parent=0
    _
  %s23 = ssub.s32 1, %s21
  %s24 = scalar_select 0, %s23, %s21
  $region1: #{transformer_forward.1} parent=0
    #allocation3 [shape = 'u8[1024]{0}', space=vmem, size = 0x400, scoped, tag = 'output window, operand 0, single buffered']
    #allocation4 [shape = 's32[2]{0}', space=sflag, size = 0x8, scoped, tag = 'scoped memory for transformer_forward.1']
    %25 = vsyncpa [#allocation4], 0
    loop: start=0, step=1, limit=4
    $region2: #{transformer_forward.1} parent=1 // loop_pre_header
      _
    $region3: #{transformer_forward.1} parent=1 // loop_header
      %s27 = sphi 0, %s31
      %p28 = scmp.ge.s32.totalorder %s27, 4
      %s34 = sphi 0, %s46
      %s35 = sphi 0, %s42
      %s36 = sphi 0, %s34
      %s37 = sphi 0, %s35
      %s38 = sphi 0, %s36
      %s39 = sphi 0, %s37
      %s49 = sphi 0, %s51
      %s52 = sphi 0, %s49
      %s53 = sphi 0, %s52
      %s69 = sphi 0, %s53
      %s75 = sphi 0, %s77
      %s78 = sphi 0, %s75
      %s79 = sphi 0, %s78
      %s95 = sphi 0, %s79
      %s101 = sphi 0, %s103
      %s104 = sphi 0, %s101
      %s105 = sphi 0, %s104
      %s121 = sphi 0, %s105
      %s127 = sphi 0, %s129
      %s130 = sphi 0, %s127
      %s131 = sphi 0, %s130
      %s147 = sphi 0, %s131
      %s153 = sphi 0, %s155
      %s156 = sphi 0, %s153
      %s157 = sphi 0, %s156
      %s173 = sphi 0, %s157
      %s179 = sphi 0, %s181
      %s182 = sphi 0, %s179
      %s183 = sphi 0, %s182
      %s199 = sphi 0, %s183
      %s205 = sphi 0, %s207
      %s208 = sphi 0, %s205
      %s209 = sphi 0, %s208
      %s225 = sphi 0, %s209
      %s231 = sphi 0, %s233
      %s234 = sphi 0, %s231
      %s235 = sphi 0, %s234
      %s251 = sphi 0, %s235
      %s257 = sphi 0, %s259
      %s260 = sphi 0, %s257
      %s261 = sphi 0, %s260
      %s277 = sphi 0, %s261
      %s283 = sphi 0, %s285
      %s286 = sphi 0, %s283
      %s287 = sphi 0, %s286
      %s303 = sphi 0, %s287
      %s309 = sphi 0, %s311
      %s312 = sphi 0, %s309
      %s313 = sphi 0, %s312
      %s329 = sphi 0, %s313
      %s335 = sphi 0, %s337
      %s338 = sphi 0, %s335
      %s339 = sphi 0, %s338
      %s355 = sphi 0, %s339
      %s361 = sphi 0, %s363
      %s364 = sphi 0, %s361
      %s365 = sphi 0, %s364
      %s381 = sphi 0, %s365
      %s387 = sphi 0, %s389
      %s390 = sphi 0, %s387
      %s391 = sphi 0, %s390
      %s407 = sphi 0, %s391
      %s413 = sphi 0, %s415
      %s416 = sphi 0, %s413
      %s417 = sphi 0, %s416
      %s433 = sphi 0, %s417
      %s439 = sphi 0, %s441
      %s442 = sphi 0, %s439
      %s443 = sphi 0, %s442
      %s459 = sphi 0, %s443
      %s465 = sphi 0, %s467
      %s468 = sphi 0, %s465
      %s469 = sphi 0, %s468
      %s485 = sphi 0, %s469
      %s491 = sphi 0, %s493
      %s494 = sphi 0, %s491
      %s495 = sphi 0, %s494
      %s511 = sphi 0, %s495
      %s515 = sphi 0, %s515
      %s517 = sphi 0, %s515
      %s518 = sphi 0, %s517
      %s532 = sphi 0, %s518
      %s536 = sphi 0, %s536
      %s538 = sphi 0, %s536
      %s539 = sphi 0, %s538
      %s553 = sphi 0, %s539
      %s559 = sphi 0, %s561
      %s562 = sphi 0, %s559
      %s563 = sphi 0, %s562
      %s579 = sphi 0, %s563
    $region4: #{transformer_forward.1} parent=1 // loop_header_branch
      %30 = sbr.rel (%p28) target = $region8
    $region5: #{transformer_forward.1} parent=1 // loop_body
      %s32 = ssub.s32 %s27, 1
      %s33 = ssub.s32 %s27, 2
      %s40 = sadd.s32 1, %s35
      %p41 = scmp.ge.s32.totalorder %s40, 2
      %s42 = scalar_select %p41, 0, %s40
      %s43 = sadd.s32 1, %s34
      %s44 = scalar_select %p41, %s43, %s34
      %p45 = scmp.ge.s32.totalorder %s44, 1
      %s46 = scalar_select %p45, 0, %s44
      %s47 = ssub.s32 %s34, %s46
      %p48 = scmp.eq.s32.totalorder %s47, 0
      %s50 = sadd.s32 %s49, 1
      %s51 = scalar_select %p48, %s49, %s50
      %p54 = pneg %p48
      %p55 = scmp.eq.s32.totalorder %s27, 1
      %p56 = por %p54, %p55
      %p57 = scmp.ne.s32.totalorder %s49, %s52
      %p58 = scmp.eq.s32.totalorder %s27, 0
      %p59 = por %p57, %p58
      %p60 = scmp.ne.s32.totalorder %s49, %s52
      %p61 = scmp.eq.s32.totalorder %s32, 1
      %p62 = por %p60, %p61
      %p63 = scmp.ne.s32.totalorder %s52, %s53
      %p64 = scmp.eq.s32.totalorder %s32, 0
      %p65 = por %p63, %p64
      %p66 = scmp.ne.s32.totalorder %s52, %s53
      %p67 = scmp.eq.s32.totalorder %s33, 1
      %p68 = por %p66, %p67
      %p70 = scmp.ne.s32.totalorder %s53, %s69
      %p71 = scmp.eq.s32.totalorder %s33, 0
      %p72 = por %p70, %p71
      %s73 = ssub.s32 %s34, %s46
      %p74 = scmp.eq.s32.totalorder %s73, 0
      %s76 = sadd.s32 %s75, 1
      %s77 = scalar_select %p74, %s75, %s76
      %p80 = pneg %p74
      %p81 = scmp.eq.s32.totalorder %s27, 1
      %p82 = por %p80, %p81
      %p83 = scmp.ne.s32.totalorder %s75, %s78
      %p84 = scmp.eq.s32.totalorder %s27, 0
      %p85 = por %p83, %p84
      %p86 = scmp.ne.s32.totalorder %s75, %s78
      %p87 = scmp.eq.s32.totalorder %s32, 1
      %p88 = por %p86, %p87
      %p89 = scmp.ne.s32.totalorder %s78, %s79
      %p90 = scmp.eq.s32.totalorder %s32, 0
      %p91 = por %p89, %p90
      %p92 = scmp.ne.s32.totalorder %s78, %s79
      %p93 = scmp.eq.s32.totalorder %s33, 1
      %p94 = por %p92, %p93
      %p96 = scmp.ne.s32.totalorder %s79, %s95
      %p97 = scmp.eq.s32.totalorder %s33, 0
      %p98 = por %p96, %p97
      %s99 = ssub.s32 %s35, %s42
      %p100 = scmp.eq.s32.totalorder %s99, 0
      %s102 = sadd.s32 %s101, 1
      %s103 = scalar_select %p100, %s101, %s102
      %p106 = pneg %p100
      %p107 = scmp.eq.s32.totalorder %s27, 1
      %p108 = por %p106, %p107
      %p109 = scmp.ne.s32.totalorder %s101, %s104
      %p110 = scmp.eq.s32.totalorder %s27, 0
      %p111 = por %p109, %p110
      %p112 = scmp.ne.s32.totalorder %s101, %s104
      %p113 = scmp.eq.s32.totalorder %s32, 1
      %p114 = por %p112, %p113
      %p115 = scmp.ne.s32.totalorder %s104, %s105
      %p116 = scmp.eq.s32.totalorder %s32, 0
      %p117 = por %p115, %p116
      %p118 = scmp.ne.s32.totalorder %s104, %s105
      %p119 = scmp.eq.s32.totalorder %s33, 1
      %p120 = por %p118, %p119
      %p122 = scmp.ne.s32.totalorder %s105, %s121
      %p123 = scmp.eq.s32.totalorder %s33, 0
      %p124 = por %p122, %p123
      %s125 = ssub.s32 %s35, %s42
      %p126 = scmp.eq.s32.totalorder %s125, 0
      %s128 = sadd.s32 %s127, 1
      %s129 = scalar_select %p126, %s127, %s128
      %p132 = pneg %p126
      %p133 = scmp.eq.s32.totalorder %s27, 1
      %p134 = por %p132, %p133
      %p135 = scmp.ne.s32.totalorder %s127, %s130
      %p136 = scmp.eq.s32.totalorder %s27, 0
      %p137 = por %p135, %p136
      %p138 = scmp.ne.s32.totalorder %s127, %s130
      %p139 = scmp.eq.s32.totalorder %s32, 1
      %p140 = por %p138, %p139
      %p141 = scmp.ne.s32.totalorder %s130, %s131
      %p142 = scmp.eq.s32.totalorder %s32, 0
      %p143 = por %p141, %p142
      %p144 = scmp.ne.s32.totalorder %s130, %s131
      %p145 = scmp.eq.s32.totalorder %s33, 1
      %p146 = por %p144, %p145
      %p148 = scmp.ne.s32.totalorder %s131, %s147
      %p149 = scmp.eq.s32.totalorder %s33, 0
      %p150 = por %p148, %p149
      %s151 = ssub.s32 %s35, %s42
      %p152 = scmp.eq.s32.totalorder %s151, 0
      %s154 = sadd.s32 %s153, 1
      %s155 = scalar_select %p152, %s153, %s154
      %p158 = pneg %p152
      %p159 = scmp.eq.s32.totalorder %s27, 1
      %p160 = por %p158, %p159
      %p161 = scmp.ne.s32.totalorder %s153, %s156
      %p162 = scmp.eq.s32.totalorder %s27, 0
      %p163 = por %p161, %p162
      %p164 = scmp.ne.s32.totalorder %s153, %s156
      %p165 = scmp.eq.s32.totalorder %s32, 1
      %p166 = por %p164, %p165
      %p167 = scmp.ne.s32.totalorder %s156, %s157
      %p168 = scmp.eq.s32.totalorder %s32, 0
      %p169 = por %p167, %p168
      %p170 = scmp.ne.s32.totalorder %s156, %s157
      %p171 = scmp.eq.s32.totalorder %s33, 1
      %p172 = por %p170, %p171
      %p174 = scmp.ne.s32.totalorder %s157, %s173
      %p175 = scmp.eq.s32.totalorder %s33, 0
      %p176 = por %p174, %p175
      %s177 = ssub.s32 %s35, %s42
      %p178 = scmp.eq.s32.totalorder %s177, 0
      %s180 = sadd.s32 %s179, 1
      %s181 = scalar_select %p178, %s179, %s180
      %p184 = pneg %p178
      %p185 = scmp.eq.s32.totalorder %s27, 1
      %p186 = por %p184, %p185
      %p187 = scmp.ne.s32.totalorder %s179, %s182
      %p188 = scmp.eq.s32.totalorder %s27, 0
      %p189 = por %p187, %p188
      %p190 = scmp.ne.s32.totalorder %s179, %s182
      %p191 = scmp.eq.s32.totalorder %s32, 1
      %p192 = por %p190, %p191
      %p193 = scmp.ne.s32.totalorder %s182, %s183
      %p194 = scmp.eq.s32.totalorder %s32, 0
      %p195 = por %p193, %p194
      %p196 = scmp.ne.s32.totalorder %s182, %s183
      %p197 = scmp.eq.s32.totalorder %s33, 1
      %p198 = por %p196, %p197
      %p200 = scmp.ne.s32.totalorder %s183, %s199
      %p201 = scmp.eq.s32.totalorder %s33, 0
      %p202 = por %p200, %p201
      %s203 = ssub.s32 %s35, %s42
      %p204 = scmp.eq.s32.totalorder %s203, 0
      %s206 = sadd.s32 %s205, 1
      %s207 = scalar_select %p204, %s205, %s206
      %p210 = pneg %p204
      %p211 = scmp.eq.s32.totalorder %s27, 1
      %p212 = por %p210, %p211
      %p213 = scmp.ne.s32.totalorder %s205, %s208
      %p214 = scmp.eq.s32.totalorder %s27, 0
      %p215 = por %p213, %p214
      %p216 = scmp.ne.s32.totalorder %s205, %s208
      %p217 = scmp.eq.s32.totalorder %s32, 1
      %p218 = por %p216, %p217
      %p219 = scmp.ne.s32.totalorder %s208, %s209
      %p220 = scmp.eq.s32.totalorder %s32, 0
      %p221 = por %p219, %p220
      %p222 = scmp.ne.s32.totalorder %s208, %s209
      %p223 = scmp.eq.s32.totalorder %s33, 1
      %p224 = por %p222, %p223
      %p226 = scmp.ne.s32.totalorder %s209, %s225
      %p227 = scmp.eq.s32.totalorder %s33, 0
      %p228 = por %p226, %p227
      %s229 = ssub.s32 %s35, %s42
      %p230 = scmp.eq.s32.totalorder %s229, 0
      %s232 = sadd.s32 %s231, 1
      %s233 = scalar_select %p230, %s231, %s232
      %p236 = pneg %p230
      %p237 = scmp.eq.s32.totalorder %s27, 1
      %p238 = por %p236, %p237
      %p239 = scmp.ne.s32.totalorder %s231, %s234
      %p240 = scmp.eq.s32.totalorder %s27, 0
      %p241 = por %p239, %p240
      %p242 = scmp.ne.s32.totalorder %s231, %s234
      %p243 = scmp.eq.s32.totalorder %s32, 1
      %p244 = por %p242, %p243
      %p245 = scmp.ne.s32.totalorder %s234, %s235
      %p246 = scmp.eq.s32.totalorder %s32, 0
      %p247 = por %p245, %p246
      %p248 = scmp.ne.s32.totalorder %s234, %s235
      %p249 = scmp.eq.s32.totalorder %s33, 1
      %p250 = por %p248, %p249
      %p252 = scmp.ne.s32.totalorder %s235, %s251
      %p253 = scmp.eq.s32.totalorder %s33, 0
      %p254 = por %p252, %p253
      %s255 = ssub.s32 %s35, %s42
      %p256 = scmp.eq.s32.totalorder %s255, 0
      %s258 = sadd.s32 %s257, 1
      %s259 = scalar_select %p256, %s257, %s258
      %p262 = pneg %p256
      %p263 = scmp.eq.s32.totalorder %s27, 1
      %p264 = por %p262, %p263
      %p265 = scmp.ne.s32.totalorder %s257, %s260
      %p266 = scmp.eq.s32.totalorder %s27, 0
      %p267 = por %p265, %p266
      %p268 = scmp.ne.s32.totalorder %s257, %s260
      %p269 = scmp.eq.s32.totalorder %s32, 1
      %p270 = por %p268, %p269
      %p271 = scmp.ne.s32.totalorder %s260, %s261
      %p272 = scmp.eq.s32.totalorder %s32, 0
      %p273 = por %p271, %p272
      %p274 = scmp.ne.s32.totalorder %s260, %s261
      %p275 = scmp.eq.s32.totalorder %s33, 1
      %p276 = por %p274, %p275
      %p278 = scmp.ne.s32.totalorder %s261, %s277
      %p279 = scmp.eq.s32.totalorder %s33, 0
      %p280 = por %p278, %p279
      %s281 = ssub.s32 %s35, %s42
      %p282 = scmp.eq.s32.totalorder %s281, 0
      %s284 = sadd.s32 %s283, 1
      %s285 = scalar_select %p282, %s283, %s284
      %p288 = pneg %p282
      %p289 = scmp.eq.s32.totalorder %s27, 1
      %p290 = por %p288, %p289
      %p291 = scmp.ne.s32.totalorder %s283, %s286
      %p292 = scmp.eq.s32.totalorder %s27, 0
      %p293 = por %p291, %p292
      %p294 = scmp.ne.s32.totalorder %s283, %s286
      %p295 = scmp.eq.s32.totalorder %s32, 1
      %p296 = por %p294, %p295
      %p297 = scmp.ne.s32.totalorder %s286, %s287
      %p298 = scmp.eq.s32.totalorder %s32, 0
      %p299 = por %p297, %p298
      %p300 = scmp.ne.s32.totalorder %s286, %s287
      %p301 = scmp.eq.s32.totalorder %s33, 1
      %p302 = por %p300, %p301
      %p304 = scmp.ne.s32.totalorder %s287, %s303
      %p305 = scmp.eq.s32.totalorder %s33, 0
      %p306 = por %p304, %p305
      %s307 = ssub.s32 %s35, %s42
      %p308 = scmp.eq.s32.totalorder %s307, 0
      %s310 = sadd.s32 %s309, 1
      %s311 = scalar_select %p308, %s309, %s310
      %p314 = pneg %p308
      %p315 = scmp.eq.s32.totalorder %s27, 1
      %p316 = por %p314, %p315
      %p317 = scmp.ne.s32.totalorder %s309, %s312
      %p318 = scmp.eq.s32.totalorder %s27, 0
      %p319 = por %p317, %p318
      %p320 = scmp.ne.s32.totalorder %s309, %s312
      %p321 = scmp.eq.s32.totalorder %s32, 1
      %p322 = por %p320, %p321
      %p323 = scmp.ne.s32.totalorder %s312, %s313
      %p324 = scmp.eq.s32.totalorder %s32, 0
      %p325 = por %p323, %p324
      %p326 = scmp.ne.s32.totalorder %s312, %s313
      %p327 = scmp.eq.s32.totalorder %s33, 1
      %p328 = por %p326, %p327
      %p330 = scmp.ne.s32.totalorder %s313, %s329
      %p331 = scmp.eq.s32.totalorder %s33, 0
      %p332 = por %p330, %p331
      %s333 = ssub.s32 %s35, %s42
      %p334 = scmp.eq.s32.totalorder %s333, 0
      %s336 = sadd.s32 %s335, 1
      %s337 = scalar_select %p334, %s335, %s336
      %p340 = pneg %p334
      %p341 = scmp.eq.s32.totalorder %s27, 1
      %p342 = por %p340, %p341
      %p343 = scmp.ne.s32.totalorder %s335, %s338
      %p344 = scmp.eq.s32.totalorder %s27, 0
      %p345 = por %p343, %p344
      %p346 = scmp.ne.s32.totalorder %s335, %s338
      %p347 = scmp.eq.s32.totalorder %s32, 1
      %p348 = por %p346, %p347
      %p349 = scmp.ne.s32.totalorder %s338, %s339
      %p350 = scmp.eq.s32.totalorder %s32, 0
      %p351 = por %p349, %p350
      %p352 = scmp.ne.s32.totalorder %s338, %s339
      %p353 = scmp.eq.s32.totalorder %s33, 1
      %p354 = por %p352, %p353
      %p356 = scmp.ne.s32.totalorder %s339, %s355
      %p357 = scmp.eq.s32.totalorder %s33, 0
      %p358 = por %p356, %p357
      %s359 = ssub.s32 %s35, %s42
      %p360 = scmp.eq.s32.totalorder %s359, 0
      %s362 = sadd.s32 %s361, 1
      %s363 = scalar_select %p360, %s361, %s362
      %p366 = pneg %p360
      %p367 = scmp.eq.s32.totalorder %s27, 1
      %p368 = por %p366, %p367
      %p369 = scmp.ne.s32.totalorder %s361, %s364
      %p370 = scmp.eq.s32.totalorder %s27, 0
      %p371 = por %p369, %p370
      %p372 = scmp.ne.s32.totalorder %s361, %s364
      %p373 = scmp.eq.s32.totalorder %s32, 1
      %p374 = por %p372, %p373
      %p375 = scmp.ne.s32.totalorder %s364, %s365
      %p376 = scmp.eq.s32.totalorder %s32, 0
      %p377 = por %p375, %p376
      %p378 = scmp.ne.s32.totalorder %s364, %s365
      %p379 = scmp.eq.s32.totalorder %s33, 1
      %p380 = por %p378, %p379
      %p382 = scmp.ne.s32.totalorder %s365, %s381
      %p383 = scmp.eq.s32.totalorder %s33, 0
      %p384 = por %p382, %p383
      %s385 = ssub.s32 %s35, %s42
      %p386 = scmp.eq.s32.totalorder %s385, 0
      %s388 = sadd.s32 %s387, 1
      %s389 = scalar_select %p386, %s387, %s388
      %p392 = pneg %p386
      %p393 = scmp.eq.s32.totalorder %s27, 1
      %p394 = por %p392, %p393
      %p395 = scmp.ne.s32.totalorder %s387, %s390
      %p396 = scmp.eq.s32.totalorder %s27, 0
      %p397 = por %p395, %p396
      %p398 = scmp.ne.s32.totalorder %s387, %s390
      %p399 = scmp.eq.s32.totalorder %s32, 1
      %p400 = por %p398, %p399
      %p401 = scmp.ne.s32.totalorder %s390, %s391
      %p402 = scmp.eq.s32.totalorder %s32, 0
      %p403 = por %p401, %p402
      %p404 = scmp.ne.s32.totalorder %s390, %s391
      %p405 = scmp.eq.s32.totalorder %s33, 1
      %p406 = por %p404, %p405
      %p408 = scmp.ne.s32.totalorder %s391, %s407
      %p409 = scmp.eq.s32.totalorder %s33, 0
      %p410 = por %p408, %p409
      %s411 = ssub.s32 %s35, %s42
      %p412 = scmp.eq.s32.totalorder %s411, 0
      %s414 = sadd.s32 %s413, 1
      %s415 = scalar_select %p412, %s413, %s414
      %p418 = pneg %p412
      %p419 = scmp.eq.s32.totalorder %s27, 1
      %p420 = por %p418, %p419
      %p421 = scmp.ne.s32.totalorder %s413, %s416
      %p422 = scmp.eq.s32.totalorder %s27, 0
      %p423 = por %p421, %p422
      %p424 = scmp.ne.s32.totalorder %s413, %s416
      %p425 = scmp.eq.s32.totalorder %s32, 1
      %p426 = por %p424, %p425
      %p427 = scmp.ne.s32.totalorder %s416, %s417
      %p428 = scmp.eq.s32.totalorder %s32, 0
      %p429 = por %p427, %p428
      %p430 = scmp.ne.s32.totalorder %s416, %s417
      %p431 = scmp.eq.s32.totalorder %s33, 1
      %p432 = por %p430, %p431
      %p434 = scmp.ne.s32.totalorder %s417, %s433
      %p435 = scmp.eq.s32.totalorder %s33, 0
      %p436 = por %p434, %p435
      %s437 = ssub.s32 %s35, %s42
      %p438 = scmp.eq.s32.totalorder %s437, 0
      %s440 = sadd.s32 %s439, 1
      %s441 = scalar_select %p438, %s439, %s440
      %p444 = pneg %p438
      %p445 = scmp.eq.s32.totalorder %s27, 1
      %p446 = por %p444, %p445
      %p447 = scmp.ne.s32.totalorder %s439, %s442
      %p448 = scmp.eq.s32.totalorder %s27, 0
      %p449 = por %p447, %p448
      %p450 = scmp.ne.s32.totalorder %s439, %s442
      %p451 = scmp.eq.s32.totalorder %s32, 1
      %p452 = por %p450, %p451
      %p453 = scmp.ne.s32.totalorder %s442, %s443
      %p454 = scmp.eq.s32.totalorder %s32, 0
      %p455 = por %p453, %p454
      %p456 = scmp.ne.s32.totalorder %s442, %s443
      %p457 = scmp.eq.s32.totalorder %s33, 1
      %p458 = por %p456, %p457
      %p460 = scmp.ne.s32.totalorder %s443, %s459
      %p461 = scmp.eq.s32.totalorder %s33, 0
      %p462 = por %p460, %p461
      %s463 = ssub.s32 %s35, %s42
      %p464 = scmp.eq.s32.totalorder %s463, 0
      %s466 = sadd.s32 %s465, 1
      %s467 = scalar_select %p464, %s465, %s466
      %p470 = pneg %p464
      %p471 = scmp.eq.s32.totalorder %s27, 1
      %p472 = por %p470, %p471
      %p473 = scmp.ne.s32.totalorder %s465, %s468
      %p474 = scmp.eq.s32.totalorder %s27, 0
      %p475 = por %p473, %p474
      %p476 = scmp.ne.s32.totalorder %s465, %s468
      %p477 = scmp.eq.s32.totalorder %s32, 1
      %p478 = por %p476, %p477
      %p479 = scmp.ne.s32.totalorder %s468, %s469
      %p480 = scmp.eq.s32.totalorder %s32, 0
      %p481 = por %p479, %p480
      %p482 = scmp.ne.s32.totalorder %s468, %s469
      %p483 = scmp.eq.s32.totalorder %s33, 1
      %p484 = por %p482, %p483
      %p486 = scmp.ne.s32.totalorder %s469, %s485
      %p487 = scmp.eq.s32.totalorder %s33, 0
      %p488 = por %p486, %p487
      %s489 = ssub.s32 %s35, %s42
      %p490 = scmp.eq.s32.totalorder %s489, 0
      %s492 = sadd.s32 %s491, 1
      %s493 = scalar_select %p490, %s491, %s492
      %p496 = pneg %p490
      %p497 = scmp.eq.s32.totalorder %s27, 1
      %p498 = por %p496, %p497
      %p499 = scmp.ne.s32.totalorder %s491, %s494
      %p500 = scmp.eq.s32.totalorder %s27, 0
      %p501 = por %p499, %p500
      %p502 = scmp.ne.s32.totalorder %s491, %s494
      %p503 = scmp.eq.s32.totalorder %s32, 1
      %p504 = por %p502, %p503
      %p505 = scmp.ne.s32.totalorder %s494, %s495
      %p506 = scmp.eq.s32.totalorder %s32, 0
      %p507 = por %p505, %p506
      %p508 = scmp.ne.s32.totalorder %s494, %s495
      %p509 = scmp.eq.s32.totalorder %s33, 1
      %p510 = por %p508, %p509
      %p512 = scmp.ne.s32.totalorder %s495, %s511
      %p513 = scmp.eq.s32.totalorder %s33, 0
      %p514 = por %p512, %p513
      %s516 = sadd.s32 %s515, 1
      %p519 = scmp.eq.s32.totalorder %s27, 1
      %p520 = scmp.ne.s32.totalorder %s515, %s517
      %p521 = scmp.eq.s32.totalorder %s27, 0
      %p522 = por %p520, %p521
      %p523 = scmp.ne.s32.totalorder %s515, %s517
      %p524 = scmp.eq.s32.totalorder %s32, 1
      %p525 = por %p523, %p524
      %p526 = scmp.ne.s32.totalorder %s517, %s518
      %p527 = scmp.eq.s32.totalorder %s32, 0
      %p528 = por %p526, %p527
      %p529 = scmp.ne.s32.totalorder %s517, %s518
      %p530 = scmp.eq.s32.totalorder %s33, 1
      %p531 = por %p529, %p530
      %p533 = scmp.ne.s32.totalorder %s518, %s532
      %p534 = scmp.eq.s32.totalorder %s33, 0
      %p535 = por %p533, %p534
      %s537 = sadd.s32 %s536, 1
      %p540 = scmp.eq.s32.totalorder %s27, 1
      %p541 = scmp.ne.s32.totalorder %s536, %s538
      %p542 = scmp.eq.s32.totalorder %s27, 0
      %p543 = por %p541, %p542
      %p544 = scmp.ne.s32.totalorder %s536, %s538
      %p545 = scmp.eq.s32.totalorder %s32, 1
      %p546 = por %p544, %p545
      %p547 = scmp.ne.s32.totalorder %s538, %s539
      %p548 = scmp.eq.s32.totalorder %s32, 0
      %p549 = por %p547, %p548
      %p550 = scmp.ne.s32.totalorder %s538, %s539
      %p551 = scmp.eq.s32.totalorder %s33, 1
      %p552 = por %p550, %p551
      %p554 = scmp.ne.s32.totalorder %s539, %s553
      %p555 = scmp.eq.s32.totalorder %s33, 0
      %p556 = por %p554, %p555
      %s557 = ssub.s32 %s34, %s46
      %p558 = scmp.eq.s32.totalorder %s557, 0
      %s560 = sadd.s32 %s559, 1
      %s561 = scalar_select %p558, %s559, %s560
      %p564 = pneg %p558
      %p565 = scmp.eq.s32.totalorder %s27, 1
      %p566 = por %p564, %p565
      %p567 = scmp.ne.s32.totalorder %s559, %s562
      %p568 = scmp.eq.s32.totalorder %s27, 0
      %p569 = por %p567, %p568
      %p570 = scmp.ne.s32.totalorder %s559, %s562
      %p571 = scmp.eq.s32.totalorder %s32, 1
      %p572 = por %p570, %p571
      %p573 = scmp.ne.s32.totalorder %s562, %s563
      %p574 = scmp.eq.s32.totalorder %s32, 0
      %p575 = por %p573, %p574
      %p576 = scmp.ne.s32.totalorder %s562, %s563
      %p577 = scmp.eq.s32.totalorder %s33, 1
      %p578 = por %p576, %p577
      %p580 = scmp.ne.s32.totalorder %s563, %s579
      %p581 = scmp.eq.s32.totalorder %s33, 0
      %p582 = por %p580, %p581
      %p583 = scmp.le.s32.totalorder 1, %s27
      %p584 = scmp.lt.s32.totalorder %s27, 3
      %p585 = pnand %p583, %p584
      %p586 = pneg %p585
      // Predicated region
      $region9: #{transformer_forward.1} parent=5 // pred_check
        _
      $region10: #{transformer_forward.1} parent=5 // pred_check_branch
        %588 = sbr.rel (%p585) target = $region12
      $region11: #{transformer_forward.1} parent=5 // pred_region
        %s589 = ssub.s32 %s27, 1
        // Predicated region
        $region13: #{transformer_forward.1} parent=11 // pred_check
          %p590 = pneg %p65
        $region14: #{transformer_forward.1} parent=11 // pred_check_branch
          %592 = sbr.rel (%p590) target = $region16
        $region15: #{transformer_forward.1} parent=11 // pred_region
          %s593 = smul.u32 2, %s36
          %p594 = scmp.lt.s32.totalorder %s593, 1
          %s595 = scalar_select %p594, %s593, 1
          %s596 = smul.addr %s595, 8
          %s597 = scalar_lea.vmem %s0, %s596
          %s598 = smul.u32 2, %s36
        $region16: #{transformer_forward.1} parent=11 // pred_fallthru
          _
        // Predicated region
        $region17: #{transformer_forward.1} parent=11 // pred_check
          %p599 = pneg %p91
        $region18: #{transformer_forward.1} parent=11 // pred_check_branch
          %601 = sbr.rel (%p599) target = $region20
        $region19: #{transformer_forward.1} parent=11 // pred_region
          %s602 = smul.u32 2, %s36
          %p603 = scmp.lt.s32.totalorder %s602, 1
          %s604 = scalar_select %p603, %s602, 1
          %s605 = scalar_lea.vmem %s1, %s604
          %s606 = smul.u32 2, %s36
        $region20: #{transformer_forward.1} parent=11 // pred_fallthru
          _
        // Predicated region
        $region21: #{transformer_forward.1} parent=11 // pred_check
          %p607 = pneg %p528
        $region22: #{transformer_forward.1} parent=11 // pred_check_branch
          %609 = sbr.rel (%p607) target = $region24
        $region23: #{transformer_forward.1} parent=11 // pred_region
          _
        $region24: #{transformer_forward.1} parent=11 // pred_fallthru
          _
        // Predicated region
        $region25: #{transformer_forward.1} parent=11 // pred_check
          %p610 = pneg %p549
        $region26: #{transformer_forward.1} parent=11 // pred_check_branch
          %612 = sbr.rel (%p610) target = $region28
        $region27: #{transformer_forward.1} parent=11 // pred_region
          _
        $region28: #{transformer_forward.1} parent=11 // pred_fallthru
          _
      $region12: #{transformer_forward.1} parent=5 // pred_fallthru
        _
      %p613 = scmp.lt.s32.totalorder %s27, 2
      // Predicated region
      $region29: #{transformer_forward.1} parent=5 // pred_check
        %p614 = pneg %p613
      $region30: #{transformer_forward.1} parent=5 // pred_check_branch
        %616 = sbr.rel (%p614) target = $region32
      $region31: #{transformer_forward.1} parent=5 // pred_region
        // Predicated region
        $region33: #{transformer_forward.1} parent=31 // pred_check
          %p617 = pneg %p111
        $region34: #{transformer_forward.1} parent=31 // pred_check_branch
          %619 = sbr.rel (%p617) target = $region36
        $region35: #{transformer_forward.1} parent=31 // pred_region
          %p620 = scmp.lt.s32.totalorder %s35, 1
          %s621 = scalar_select %p620, %s35, 1
          %s622 = smul.addr %s621, 4
          %s623 = smul.addr %s622, 4
          %s624 = scalar_lea.vmem %s2, %s623
        $region36: #{transformer_forward.1} parent=31 // pred_fallthru
          _
        // Predicated region
        $region37: #{transformer_forward.1} parent=31 // pred_check
          %p625 = pneg %p137
        $region38: #{transformer_forward.1} parent=31 // pred_check_branch
          %627 = sbr.rel (%p625) target = $region40
        $region39: #{transformer_forward.1} parent=31 // pred_region
          %p628 = scmp.lt.s32.totalorder %s35, 1
          %s629 = scalar_select %p628, %s35, 1
          %s630 = smul.addr %s629, 4
          %s631 = smul.addr %s630, 4
          %s632 = scalar_lea.vmem %s3, %s631
        $region40: #{transformer_forward.1} parent=31 // pred_fallthru
          _
        // Predicated region
        $region41: #{transformer_forward.1} parent=31 // pred_check
          %p633 = pneg %p163
        $region42: #{transformer_forward.1} parent=31 // pred_check_branch
          %635 = sbr.rel (%p633) target = $region44
        $region43: #{transformer_forward.1} parent=31 // pred_region
          %p636 = scmp.lt.s32.totalorder %s35, 1
          %s637 = scalar_select %p636, %s35, 1
          %s638 = smul.addr %s637, 4
          %s639 = smul.addr %s638, 4
          %s640 = scalar_lea.vmem %s4, %s639
        $region44: #{transformer_forward.1} parent=31 // pred_fallthru
          _
        // Predicated region
        $region45: #{transformer_forward.1} parent=31 // pred_check
          %p641 = pneg %p189
        $region46: #{transformer_forward.1} parent=31 // pred_check_branch
          %643 = sbr.rel (%p641) target = $region48
        $region47: #{transformer_forward.1} parent=31 // pred_region
          %p644 = scmp.lt.s32.totalorder %s35, 1
          %s645 = scalar_select %p644, %s35, 1
          %s646 = scalar_lea.vmem %s5, %s645
        $region48: #{transformer_forward.1} parent=31 // pred_fallthru
          _
        // Predicated region
        $region49: #{transformer_forward.1} parent=31 // pred_check
          %p647 = pneg %p215
        $region50: #{transformer_forward.1} parent=31 // pred_check_branch
          %649 = sbr.rel (%p647) target = $region52
        $region51: #{transformer_forward.1} parent=31 // pred_region
          %p650 = scmp.lt.s32.totalorder %s35, 1
          %s651 = scalar_select %p650, %s35, 1
          %s652 = scalar_lea.vmem %s6, %s651
        $region52: #{transformer_forward.1} parent=31 // pred_fallthru
          _
        // Predicated region
        $region53: #{transformer_forward.1} parent=31 // pred_check
          %p653 = pneg %p241
        $region54: #{transformer_forward.1} parent=31 // pred_check_branch
          %655 = sbr.rel (%p653) target = $region56
        $region55: #{transformer_forward.1} parent=31 // pred_region
          %p656 = scmp.lt.s32.totalorder %s35, 1
          %s657 = scalar_select %p656, %s35, 1
          %s658 = scalar_lea.vmem %s7, %s657
        $region56: #{transformer_forward.1} parent=31 // pred_fallthru
          _
        // Predicated region
        $region57: #{transformer_forward.1} parent=31 // pred_check
          %p659 = pneg %p267
        $region58: #{transformer_forward.1} parent=31 // pred_check_branch
          %661 = sbr.rel (%p659) target = $region60
        $region59: #{transformer_forward.1} parent=31 // pred_region
          %p662 = scmp.lt.s32.totalorder %s35, 1
          %s663 = scalar_select %p662, %s35, 1
          %s664 = smul.addr %s663, 4
          %s665 = smul.addr %s664, 4
          %s666 = scalar_lea.vmem %s8, %s665
        $region60: #{transformer_forward.1} parent=31 // pred_fallthru
          _
        // Predicated region
        $region61: #{transformer_forward.1} parent=31 // pred_check
          %p667 = pneg %p293
        $region62: #{transformer_forward.1} parent=31 // pred_check_branch
          %669 = sbr.rel (%p667) target = $region64
        $region63: #{transformer_forward.1} parent=31 // pred_region
          %p670 = scmp.lt.s32.totalorder %s35, 1
          %s671 = scalar_select %p670, %s35, 1
          %s672 = scalar_lea.vmem %s9, %s671
        $region64: #{transformer_forward.1} parent=31 // pred_fallthru
          _
        // Predicated region
        $region65: #{transformer_forward.1} parent=31 // pred_check
          %p673 = pneg %p319
        $region66: #{transformer_forward.1} parent=31 // pred_check_branch
          %675 = sbr.rel (%p673) target = $region68
        $region67: #{transformer_forward.1} parent=31 // pred_region
          %p676 = scmp.lt.s32.totalorder %s35, 1
          %s677 = scalar_select %p676, %s35, 1
          %s678 = scalar_lea.vmem %s10, %s677
        $region68: #{transformer_forward.1} parent=31 // pred_fallthru
          _
        // Predicated region
        $region69: #{transformer_forward.1} parent=31 // pred_check
          %p679 = pneg %p345
        $region70: #{transformer_forward.1} parent=31 // pred_check_branch
          %681 = sbr.rel (%p679) target = $region72
        $region71: #{transformer_forward.1} parent=31 // pred_region
          %p682 = scmp.lt.s32.totalorder %s35, 1
          %s683 = scalar_select %p682, %s35, 1
          %s684 = scalar_lea.vmem %s11, %s683
        $region72: #{transformer_forward.1} parent=31 // pred_fallthru
          _
        // Predicated region
        $region73: #{transformer_forward.1} parent=31 // pred_check
          %p685 = pneg %p371
        $region74: #{transformer_forward.1} parent=31 // pred_check_branch
          %687 = sbr.rel (%p685) target = $region76
        $region75: #{transformer_forward.1} parent=31 // pred_region
          %p688 = scmp.lt.s32.totalorder %s35, 1
          %s689 = scalar_select %p688, %s35, 1
          %s690 = smul.addr %s689, 4
          %s691 = smul.addr %s690, 4
          %s692 = scalar_lea.vmem %s12, %s691
        $region76: #{transformer_forward.1} parent=31 // pred_fallthru
          _
        // Predicated region
        $region77: #{transformer_forward.1} parent=31 // pred_check
          %p693 = pneg %p397
        $region78: #{transformer_forward.1} parent=31 // pred_check_branch
          %695 = sbr.rel (%p693) target = $region80
        $region79: #{transformer_forward.1} parent=31 // pred_region
          %p696 = scmp.lt.s32.totalorder %s35, 1
          %s697 = scalar_select %p696, %s35, 1
          %s698 = scalar_lea.vmem %s13, %s697
        $region80: #{transformer_forward.1} parent=31 // pred_fallthru
          _
        // Predicated region
        $region81: #{transformer_forward.1} parent=31 // pred_check
          %p699 = pneg %p423
        $region82: #{transformer_forward.1} parent=31 // pred_check_branch
          %701 = sbr.rel (%p699) target = $region84
        $region83: #{transformer_forward.1} parent=31 // pred_region
          %p702 = scmp.lt.s32.totalorder %s35, 1
          %s703 = scalar_select %p702, %s35, 1
          %s704 = smul.addr %s703, 8
          %s705 = smul.addr %s704, 4
          %s706 = scalar_lea.vmem %s14, %s705
        $region84: #{transformer_forward.1} parent=31 // pred_fallthru
          _
        // Predicated region
        $region85: #{transformer_forward.1} parent=31 // pred_check
          %p707 = pneg %p449
        $region86: #{transformer_forward.1} parent=31 // pred_check_branch
          %709 = sbr.rel (%p707) target = $region88
        $region87: #{transformer_forward.1} parent=31 // pred_region
          %p710 = scmp.lt.s32.totalorder %s35, 1
          %s711 = scalar_select %p710, %s35, 1
          %s712 = scalar_lea.vmem %s15, %s711
        $region88: #{transformer_forward.1} parent=31 // pred_fallthru
          _
        // Predicated region
        $region89: #{transformer_forward.1} parent=31 // pred_check
          %p713 = pneg %p475
        $region90: #{transformer_forward.1} parent=31 // pred_check_branch
          %715 = sbr.rel (%p713) target = $region92
        $region91: #{transformer_forward.1} parent=31 // pred_region
          %p716 = scmp.lt.s32.totalorder %s35, 1
          %s717 = scalar_select %p716, %s35, 1
          %s718 = scalar_lea.vmem %s16, %s717
        $region92: #{transformer_forward.1} parent=31 // pred_fallthru
          _
        // Predicated region
        $region93: #{transformer_forward.1} parent=31 // pred_check
          %p719 = pneg %p501
        $region94: #{transformer_forward.1} parent=31 // pred_check_branch
          %721 = sbr.rel (%p719) target = $region96
        $region95: #{transformer_forward.1} parent=31 // pred_region
          %p722 = scmp.lt.s32.totalorder %s35, 1
          %s723 = scalar_select %p722, %s35, 1
          %s724 = scalar_lea.vmem %s17, %s723
        $region96: #{transformer_forward.1} parent=31 // pred_fallthru
          _
      $region32: #{transformer_forward.1} parent=5 // pred_fallthru
        _
      %p725 = scmp.le.s32.totalorder 1, %s27
      %p726 = scmp.lt.s32.totalorder %s27, 3
      %p727 = pnand %p725, %p726
      %p728 = pneg %p727
      // Predicated region
      $region97: #{transformer_forward.1} parent=5 // pred_check
        _
      $region98: #{transformer_forward.1} parent=5 // pred_check_branch
        %730 = sbr.rel (%p727) target = $region100
      $region99: #{transformer_forward.1} parent=5 // pred_region
        %s731 = ssub.s32 %s27, 1
        %s732 = smul.u32 2, %s36
        %p733 = scmp.lt.s32.totalorder %s732, 1
        %s734 = scalar_select %p733, %s732, 1
        %s735 = smul.addr %s734, 8
        %s736 = scalar_lea.vmem %s0, %s735
        %p737 = pneg %p65
        %p738 = pneg %p62
        %s739 = smul.u32 2, %s36
        %p740 = scmp.lt.s32.totalorder %s739, 1
        %s741 = scalar_select %p740, %s739, 1
        %s742 = scalar_lea.vmem %s1, %s741
        %p743 = pneg %p91
        %p744 = pneg %p88
        %p745 = scmp.lt.s32.totalorder %s37, 1
        %s746 = scalar_select %p745, %s37, 1
        %s747 = smul.addr %s746, 4
        %s748 = smul.addr %s747, 4
        %s749 = scalar_lea.vmem %s2, %s748
        %p750 = pneg %p117
        %p751 = pneg %p114
        %p752 = scmp.lt.s32.totalorder %s37, 1
        %s753 = scalar_select %p752, %s37, 1
        %s754 = smul.addr %s753, 4
        %s755 = smul.addr %s754, 4
        %s756 = scalar_lea.vmem %s3, %s755
        %p757 = pneg %p143
        %p758 = pneg %p140
        %p759 = scmp.lt.s32.totalorder %s37, 1
        %s760 = scalar_select %p759, %s37, 1
        %s761 = smul.addr %s760, 4
        %s762 = smul.addr %s761, 4
        %s763 = scalar_lea.vmem %s4, %s762
        %p764 = pneg %p169
        %p765 = pneg %p166
        %p766 = scmp.lt.s32.totalorder %s37, 1
        %s767 = scalar_select %p766, %s37, 1
        %s768 = scalar_lea.vmem %s5, %s767
        %p769 = pneg %p195
        %p770 = pneg %p192
        %p771 = scmp.lt.s32.totalorder %s37, 1
        %s772 = scalar_select %p771, %s37, 1
        %s773 = scalar_lea.vmem %s6, %s772
        %p774 = pneg %p221
        %p775 = pneg %p218
        %p776 = scmp.lt.s32.totalorder %s37, 1
        %s777 = scalar_select %p776, %s37, 1
        %s778 = scalar_lea.vmem %s7, %s777
        %p779 = pneg %p247
        %p780 = pneg %p244
        %p781 = scmp.lt.s32.totalorder %s37, 1
        %s782 = scalar_select %p781, %s37, 1
        %s783 = smul.addr %s782, 4
        %s784 = smul.addr %s783, 4
        %s785 = scalar_lea.vmem %s8, %s784
        %p786 = pneg %p273
        %p787 = pneg %p270
        %p788 = scmp.lt.s32.totalorder %s37, 1
        %s789 = scalar_select %p788, %s37, 1
        %s790 = scalar_lea.vmem %s9, %s789
        %p791 = pneg %p299
        %p792 = pneg %p296
        %p793 = scmp.lt.s32.totalorder %s37, 1
        %s794 = scalar_select %p793, %s37, 1
        %s795 = scalar_lea.vmem %s10, %s794
        %p796 = pneg %p325
        %p797 = pneg %p322
        %p798 = scmp.lt.s32.totalorder %s37, 1
        %s799 = scalar_select %p798, %s37, 1
        %s800 = scalar_lea.vmem %s11, %s799
        %p801 = pneg %p351
        %p802 = pneg %p348
        %p803 = scmp.lt.s32.totalorder %s37, 1
        %s804 = scalar_select %p803, %s37, 1
        %s805 = smul.addr %s804, 4
        %s806 = smul.addr %s805, 4
        %s807 = scalar_lea.vmem %s12, %s806
        %p808 = pneg %p377
        %p809 = pneg %p374
        %p810 = scmp.lt.s32.totalorder %s37, 1
        %s811 = scalar_select %p810, %s37, 1
        %s812 = scalar_lea.vmem %s13, %s811
        %p813 = pneg %p403
        %p814 = pneg %p400
        %p815 = scmp.lt.s32.totalorder %s37, 1
        %s816 = scalar_select %p815, %s37, 1
        %s817 = smul.addr %s816, 8
        %s818 = smul.addr %s817, 4
        %s819 = scalar_lea.vmem %s14, %s818
        %p820 = pneg %p429
        %p821 = pneg %p426
        %p822 = scmp.lt.s32.totalorder %s37, 1
        %s823 = scalar_select %p822, %s37, 1
        %s824 = scalar_lea.vmem %s15, %s823
        %p825 = pneg %p455
        %p826 = pneg %p452
        %p827 = scmp.lt.s32.totalorder %s37, 1
        %s828 = scalar_select %p827, %s37, 1
        %s829 = scalar_lea.vmem %s16, %s828
        %p830 = pneg %p481
        %p831 = pneg %p478
        %p832 = scmp.lt.s32.totalorder %s37, 1
        %s833 = scalar_select %p832, %s37, 1
        %s834 = scalar_lea.vmem %s17, %s833
        %p835 = pneg %p507
        %p836 = pneg %p504
        %p837 = pneg %p528
        %p838 = pneg %p525
        %p839 = pneg %p549
        %p840 = pneg %p546
        %p841 = pneg %p575
        %p842 = pneg %p572
        %s843 = smul.u32 2, %s36
        %p844 = scmp.lt.s32.totalorder %s843, 1
        %s845 = scalar_select %p844, %s843, 1
        %s846 = smul.addr %s845, 8
        %s847 = scalar_lea.vmem %s0, %s846
        %s848 = smul.u32 2, %s36
        %s849 = smul.u32 2, %s36
        %p850 = scmp.lt.s32.totalorder %s849, 1
        %s851 = scalar_select %p850, %s849, 1
        %s852 = scalar_lea.vmem %s1, %s851
        %s853 = smul.u32 2, %s36
        %p854 = scmp.lt.s32.totalorder %s37, 1
        %s855 = scalar_select %p854, %s37, 1
        %s856 = smul.addr %s855, 4
        %s857 = smul.addr %s856, 4
        %s858 = scalar_lea.vmem %s2, %s857
        %p859 = scmp.lt.s32.totalorder %s37, 1
        %s860 = scalar_select %p859, %s37, 1
        %s861 = smul.addr %s860, 4
        %s862 = smul.addr %s861, 4
        %s863 = scalar_lea.vmem %s3, %s862
        %p864 = scmp.lt.s32.totalorder %s37, 1
        %s865 = scalar_select %p864, %s37, 1
        %s866 = smul.addr %s865, 4
        %s867 = smul.addr %s866, 4
        %s868 = scalar_lea.vmem %s4, %s867
        %p869 = scmp.lt.s32.totalorder %s37, 1
        %s870 = scalar_select %p869, %s37, 1
        %s871 = scalar_lea.vmem %s5, %s870
        %p872 = scmp.lt.s32.totalorder %s37, 1
        %s873 = scalar_select %p872, %s37, 1
        %s874 = scalar_lea.vmem %s6, %s873
        %p875 = scmp.lt.s32.totalorder %s37, 1
        %s876 = scalar_select %p875, %s37, 1
        %s877 = scalar_lea.vmem %s7, %s876
        %p878 = scmp.lt.s32.totalorder %s37, 1
        %s879 = scalar_select %p878, %s37, 1
        %s880 = smul.addr %s879, 4
        %s881 = smul.addr %s880, 4
        %s882 = scalar_lea.vmem %s8, %s881
        %p883 = scmp.lt.s32.totalorder %s37, 1
        %s884 = scalar_select %p883, %s37, 1
        %s885 = scalar_lea.vmem %s9, %s884
        %p886 = scmp.lt.s32.totalorder %s37, 1
        %s887 = scalar_select %p886, %s37, 1
        %s888 = scalar_lea.vmem %s10, %s887
        %p889 = scmp.lt.s32.totalorder %s37, 1
        %s890 = scalar_select %p889, %s37, 1
        %s891 = scalar_lea.vmem %s11, %s890
        %p892 = scmp.lt.s32.totalorder %s37, 1
        %s893 = scalar_select %p892, %s37, 1
        %s894 = smul.addr %s893, 4
        %s895 = smul.addr %s894, 4
        %s896 = scalar_lea.vmem %s12, %s895
        %p897 = scmp.lt.s32.totalorder %s37, 1
        %s898 = scalar_select %p897, %s37, 1
        %s899 = scalar_lea.vmem %s13, %s898
        %p900 = scmp.lt.s32.totalorder %s37, 1
        %s901 = scalar_select %p900, %s37, 1
        %s902 = smul.addr %s901, 8
        %s903 = smul.addr %s902, 4
        %s904 = scalar_lea.vmem %s14, %s903
        %p905 = scmp.lt.s32.totalorder %s37, 1
        %s906 = scalar_select %p905, %s37, 1
        %s907 = scalar_lea.vmem %s15, %s906
        %p908 = scmp.lt.s32.totalorder %s37, 1
        %s909 = scalar_select %p908, %s37, 1
        %s910 = scalar_lea.vmem %s16, %s909
        %p911 = scmp.lt.s32.totalorder %s37, 1
        %s912 = scalar_select %p911, %s37, 1
        %s913 = scalar_lea.vmem %s17, %s912
        %p915 = scmp.eq.s32.totalorder %s37, 0
        // Predicated region
        $region101: #{transformer_forward.1} parent=99 // pred_check
          %p916 = pneg %p915
        $region102: #{transformer_forward.1} parent=99 // pred_check_branch
          %918 = sbr.rel (%p916) target = $region104
        $region103: #{transformer_forward.1} parent=99 // pred_region
          %v919 = vld [vmem:[%s847] sm:$0xff]
          %v920 = vld [vmem:[%s847 + $0x8] sm:$0xff]
          %vm921 = vcmask 261120
          %922 = vst.msk [vmem:[#allocation2] sm:$0xff] %vm921, %v919
          %923 = vst.msk [vmem:[#allocation2 + $0x8] sm:$0xff] %vm921, %v920
        $region104: #{transformer_forward.1} parent=99 // pred_fallthru
          _
        %v924 = vld [vmem:[#allocation2] sm:$0xff]
        %v925 = vld [vmem:[#allocation2 + $0x8] sm:$0xff]
        %v926 = vpack.c.bf16 %v925, %v924
        %v927 = vld [vmem:[%s858] sm:$0xf]
        %v928 = vld [vmem:[%s858 + $0x4] sm:$0xf]
        %v929 = vld [vmem:[%s858 + $0x8] sm:$0xf]
        %v930 = vld [vmem:[%s858 + $0xc] sm:$0xf]
        %v931 = vld [vmem:[%s871] sm:$0x1]
        %v933 = vlaneseq
        %v934 = vshrl.u32 %v933, 7
        %v935 = vsub.s32 0, %v934
        %v936 = vrot.slane %v931, %v935
        %v942 = vunpack.c.l.b16 %v927
        %v943 = vunpack.c.l.b16 %v928
        %v944 = vunpack.c.l.b16 %v929
        %v945 = vunpack.c.l.b16 %v930
        %v946 = vpack.c.b16 %v943, %v942
        %v947 = vpack.c.b16 %v945, %v944
        %vm950 = vcmask 261120
        %v952 = vsel %vm950, %v926, 0
        %954 = vmatprep.subr.bf16.mxu0 0
        %955 = vmatpush1.bf16.msra.mxu0 %v946
        %956 = vmatprep.subr.bf16.mxu0 0
        %957 = vmatpush1.bf16.msra.mxu0 %v947
        %958 = vmatprep.subr.bf16.mxu0 0
        %959 = vmatpush1.bf16.msra.mxu0 0
        %960 = vmatprep.subr.bf16.mxu0 0
        %961 = vmatpush1.bf16.msra.mxu0 0
        %962 = vmatprep.subr.bf16.mxu0 0
        %963 = vmatpush1.bf16.msra.mxu0 0
        %964 = vmatprep.subr.bf16.mxu0 0
        %965 = vmatpush1.bf16.msra.mxu0 0
        %966 = vmatprep.subr.bf16.mxu0 0
        %967 = vmatpush1.bf16.msra.mxu0 0
        %968 = vmatprep.subr.bf16.mxu0 0
        %969 = vmatpush1.bf16.msra.mxu0 0
        %970 = vmatprep.subr.bf16.mxu0 0
        %971 = vmatpush1.bf16.msra.mxu0 0
        %972 = vmatprep.subr.bf16.mxu0 0
        %973 = vmatpush1.bf16.msra.mxu0 0
        %974 = vmatprep.subr.bf16.mxu0 0
        %975 = vmatpush1.bf16.msra.mxu0 0
        %976 = vmatprep.subr.bf16.mxu0 0
        %977 = vmatpush1.bf16.msra.mxu0 0
        %978 = vmatprep.subr.bf16.mxu0 0
        %979 = vmatpush1.bf16.msra.mxu0 0
        %980 = vmatprep.subr.bf16.mxu0 0
        %981 = vmatpush1.bf16.msra.mxu0 0
        %982 = vmatprep.subr.bf16.mxu0 0
        %983 = vmatpush1.bf16.msra.mxu0 0
        %984 = vmatprep.subr.bf16.mxu0 0
        %985 = vmatpush1.bf16.msra.mxu0 0
        %986 = vmatprep.mubr.bf16.mxu0 0
        %987 = vmatmul.mubr.bf16.gmra.mrb[0].mxu0 %v952
        %v988 = vpop.f32.mrb[0].mxu0
        %v989 = vadd.f32 %v936, %v988
        %v990 = vpop.f32.mrb[0].mxu0
        %v991 = vpop.f32.mrb[0].mxu0
        %v992 = vadd.f32 %v936, %v991
        %v993 = vpop.f32.mrb[0].mxu0
        %994 = vdwg.mxu0
        %v995 = vpack.c.bf16 %v992, %v989
        %v996 = vld [vmem:[%s863] sm:$0xf]
        %v997 = vld [vmem:[%s863 + $0x4] sm:$0xf]
        %v998 = vld [vmem:[%s863 + $0x8] sm:$0xf]
        %v999 = vld [vmem:[%s863 + $0xc] sm:$0xf]
        %v1000 = vld [vmem:[%s874] sm:$0x1]
        %v1002 = vlaneseq
        %v1003 = vshrl.u32 %v1002, 7
        %v1004 = vsub.s32 0, %v1003
        %v1005 = vrot.slane %v1000, %v1004
        %v1011 = vunpack.c.l.b16 %v996
        %v1012 = vunpack.c.l.b16 %v997
        %v1013 = vunpack.c.l.b16 %v998
        %v1014 = vunpack.c.l.b16 %v999
        %v1015 = vpack.c.b16 %v1012, %v1011
        %v1016 = vpack.c.b16 %v1014, %v1013
        %1019 = vmatprep.subr.bf16.mxu0 0
        %1020 = vmatpush1.bf16.msra.mxu0 %v1015
        %1021 = vmatprep.subr.bf16.mxu0 0
        %1022 = vmatpush1.bf16.msra.mxu0 %v1016
        %1023 = vmatprep.subr.bf16.mxu0 0
        %1024 = vmatpush1.bf16.msra.mxu0 0
        %1025 = vmatprep.subr.bf16.mxu0 0
        %1026 = vmatpush1.bf16.msra.mxu0 0
        %1027 = vmatprep.subr.bf16.mxu0 0
        %1028 = vmatpush1.bf16.msra.mxu0 0
        %1029 = vmatprep.subr.bf16.mxu0 0
        %1030 = vmatpush1.bf16.msra.mxu0 0
        %1031 = vmatprep.subr.bf16.mxu0 0
        %1032 = vmatpush1.bf16.msra.mxu0 0
        %1033 = vmatprep.subr.bf16.mxu0 0
        %1034 = vmatpush1.bf16.msra.mxu0 0
        %1035 = vmatprep.subr.bf16.mxu0 0
        %1036 = vmatpush1.bf16.msra.mxu0 0
        %1037 = vmatprep.subr.bf16.mxu0 0
        %1038 = vmatpush1.bf16.msra.mxu0 0
        %1039 = vmatprep.subr.bf16.mxu0 0
        %1040 = vmatpush1.bf16.msra.mxu0 0
        %1041 = vmatprep.subr.bf16.mxu0 0
        %1042 = vmatpush1.bf16.msra.mxu0 0
        %1043 = vmatprep.subr.bf16.mxu0 0
        %1044 = vmatpush1.bf16.msra.mxu0 0
        %1045 = vmatprep.subr.bf16.mxu0 0
        %1046 = vmatpush1.bf16.msra.mxu0 0
        %1047 = vmatprep.subr.bf16.mxu0 0
        %1048 = vmatpush1.bf16.msra.mxu0 0
        %1049 = vmatprep.subr.bf16.mxu0 0
        %1050 = vmatpush1.bf16.msra.mxu0 0
        %1051 = vmatprep.mubr.bf16.mxu0 0
        %1052 = vmatmul.mubr.bf16.gmra.mrb[0].mxu0 %v952
        %v1053 = vpop.f32.mrb[0].mxu0
        %v1054 = vadd.f32 %v1005, %v1053
        %v1055 = vpop.f32.mrb[0].mxu0
        %v1056 = vpop.f32.mrb[0].mxu0
        %v1057 = vadd.f32 %v1005, %v1056
        %v1058 = vpop.f32.mrb[0].mxu0
        %1059 = vdwg.mxu0
        %v1060 = vpack.c.bf16 %v1057, %v1054
        %v1061 = vld [vmem:[%s868] sm:$0xf]
        %v1062 = vld [vmem:[%s868 + $0x4] sm:$0xf]
        %v1063 = vld [vmem:[%s868 + $0x8] sm:$0xf]
        %v1064 = vld [vmem:[%s868 + $0xc] sm:$0xf]
        %v1065 = vld [vmem:[%s877] sm:$0x1]
        %v1067 = vlaneseq
        %v1068 = vshrl.u32 %v1067, 7
        %v1069 = vsub.s32 0, %v1068
        %v1070 = vrot.slane %v1065, %v1069
        %v1076 = vunpack.c.l.b16 %v1061
        %v1077 = vunpack.c.l.b16 %v1062
        %v1078 = vunpack.c.l.b16 %v1063
        %v1079 = vunpack.c.l.b16 %v1064
        %v1080 = vpack.c.b16 %v1077, %v1076
        %v1081 = vpack.c.b16 %v1079, %v1078
        %1084 = vmatprep.subr.bf16.mxu0 0
        %1085 = vmatpush1.bf16.msra.mxu0 %v1080
        %1086 = vmatprep.subr.bf16.mxu0 0
        %1087 = vmatpush1.bf16.msra.mxu0 %v1081
        %1088 = vmatprep.subr.bf16.mxu0 0
        %1089 = vmatpush1.bf16.msra.mxu0 0
        %1090 = vmatprep.subr.bf16.mxu0 0
        %1091 = vmatpush1.bf16.msra.mxu0 0
        %1092 = vmatprep.subr.bf16.mxu0 0
        %1093 = vmatpush1.bf16.msra.mxu0 0
        %1094 = vmatprep.subr.bf16.mxu0 0
        %1095 = vmatpush1.bf16.msra.mxu0 0
        %1096 = vmatprep.subr.bf16.mxu0 0
        %1097 = vmatpush1.bf16.msra.mxu0 0
        %1098 = vmatprep.subr.bf16.mxu0 0
        %1099 = vmatpush1.bf16.msra.mxu0 0
        %1100 = vmatprep.subr.bf16.mxu0 0
        %1101 = vmatpush1.bf16.msra.mxu0 0
        %1102 = vmatprep.subr.bf16.mxu0 0
        %1103 = vmatpush1.bf16.msra.mxu0 0
        %1104 = vmatprep.subr.bf16.mxu0 0
        %1105 = vmatpush1.bf16.msra.mxu0 0
        %1106 = vmatprep.subr.bf16.mxu0 0
        %1107 = vmatpush1.bf16.msra.mxu0 0
        %1108 = vmatprep.subr.bf16.mxu0 0
        %1109 = vmatpush1.bf16.msra.mxu0 0
        %1110 = vmatprep.subr.bf16.mxu0 0
        %1111 = vmatpush1.bf16.msra.mxu0 0
        %1112 = vmatprep.subr.bf16.mxu0 0
        %1113 = vmatpush1.bf16.msra.mxu0 0
        %1114 = vmatprep.subr.bf16.mxu0 0
        %1115 = vmatpush1.bf16.msra.mxu0 0
        %1116 = vmatprep.mubr.bf16.mxu0 0
        %1117 = vmatmul.mubr.bf16.gmra.mrb[0].mxu0 %v952
        %v1118 = vpop.f32.mrb[0].mxu0
        %v1119 = vadd.f32 %v1070, %v1118
        %v1120 = vpop.f32.mrb[0].mxu0
        %v1121 = vpop.f32.mrb[0].mxu0
        %v1122 = vadd.f32 %v1070, %v1121
        %v1123 = vpop.f32.mrb[0].mxu0
        %1124 = vdwg.mxu0
        %v1125 = vpack.c.bf16 %v1122, %v1119
        %v1126 = vld [vmem:[%s852] sm:$0x1]
        %v1127 = vld [vmem:[%s852 + $0x1] sm:$0x1]
        %vm1128 = vcmask 64512
        %v1130 = vsel %vm1128, %v995, 0
        %v1133 = vsel %vm1128, %v1060, 0
        %1135 = vmatprep.subr.bf16.mxu0 0
        %1136 = vmatpush1.bf16.xpose.msra.mxu0 %v1133
        %1137 = vmatprep.subr.bf16.mxu0 0
        %1138 = vmatpush1.bf16.xpose.msra.mxu0 0
        %1139 = vmatprep.subr.bf16.mxu0 0
        %1140 = vmatpush1.bf16.xpose.msra.mxu0 0
        %1141 = vmatprep.subr.bf16.mxu0 0
        %1142 = vmatpush1.bf16.xpose.msra.mxu0 0
        %1143 = vmatprep.subr.bf16.mxu0 0
        %1144 = vmatpush1.bf16.xpose.msra.mxu0 0
        %1145 = vmatprep.subr.bf16.mxu0 0
        %1146 = vmatpush1.bf16.xpose.msra.mxu0 0
        %1147 = vmatprep.subr.bf16.mxu0 0
        %1148 = vmatpush1.bf16.xpose.msra.mxu0 0
        %1149 = vmatprep.subr.bf16.mxu0 0
        %1150 = vmatpush1.bf16.xpose.msra.mxu0 0
        %1151 = vmatprep.subr.bf16.mxu0 0
        %1152 = vmatpush1.bf16.xpose.msra.mxu0 0
        %1153 = vmatprep.subr.bf16.mxu0 0
        %1154 = vmatpush1.bf16.xpose.msra.mxu0 0
        %1155 = vmatprep.subr.bf16.mxu0 0
        %1156 = vmatpush1.bf16.xpose.msra.mxu0 0
        %1157 = vmatprep.subr.bf16.mxu0 0
        %1158 = vmatpush1.bf16.xpose.msra.mxu0 0
        %1159 = vmatprep.subr.bf16.mxu0 0
        %1160 = vmatpush1.bf16.xpose.msra.mxu0 0
        %1161 = vmatprep.subr.bf16.mxu0 0
        %1162 = vmatpush1.bf16.xpose.msra.mxu0 0
        %1163 = vmatprep.subr.bf16.mxu0 0
        %1164 = vmatpush1.bf16.xpose.msra.mxu0 0
        %1165 = vmatprep.subr.bf16.mxu0 0
        %1166 = vmatpush1.bf16.xpose.msra.mxu0 0
        %1167 = vmatprep.mubr.bf16.mxu0 0
        %1168 = vmatmul.mubr.bf16.gmra.mrb[0].mxu0 %v1130
        %v1169 = vpop.f32.mrb[0].mxu0
        %v1170 = vadd.f32 0.0, %v1169
        %v1171 = vpop.f32.mrb[0].mxu0
        %v1172 = vpop.f32.mrb[0].mxu0
        %v1173 = vpop.f32.mrb[0].mxu0
        %1174 = vdwg.mxu0
        %1176 = vrot.lane.b32.xlu0 %v995, 120
        %v1177 = vpop.permute.xlu0 %1176
        %1179 = vrot.lane.b32.xlu0 %v1060, 120
        %v1180 = vpop.permute.xlu0 %1179
        %v1182 = vsel %vm1128, %v1177, 0
        %v1185 = vsel %vm1128, %v1180, 0
        %1187 = vmatprep.subr.bf16.mxu0 0
        %1188 = vmatpush1.bf16.xpose.msra.mxu0 %v1185
        %1189 = vmatprep.subr.bf16.mxu0 0
        %1190 = vmatpush1.bf16.xpose.msra.mxu0 0
        %1191 = vmatprep.subr.bf16.mxu0 0
        %1192 = vmatpush1.bf16.xpose.msra.mxu0 0
        %1193 = vmatprep.subr.bf16.mxu0 0
        %1194 = vmatpush1.bf16.xpose.msra.mxu0 0
        %1195 = vmatprep.subr.bf16.mxu0 0
        %1196 = vmatpush1.bf16.xpose.msra.mxu0 0
        %1197 = vmatprep.subr.bf16.mxu0 0
        %1198 = vmatpush1.bf16.xpose.msra.mxu0 0
        %1199 = vmatprep.subr.bf16.mxu0 0
        %1200 = vmatpush1.bf16.xpose.msra.mxu0 0
        %1201 = vmatprep.subr.bf16.mxu0 0
        %1202 = vmatpush1.bf16.xpose.msra.mxu0 0
        %1203 = vmatprep.subr.bf16.mxu0 0
        %1204 = vmatpush1.bf16.xpose.msra.mxu0 0
        %1205 = vmatprep.subr.bf16.mxu0 0
        %1206 = vmatpush1.bf16.xpose.msra.mxu0 0
        %1207 = vmatprep.subr.bf16.mxu0 0
        %1208 = vmatpush1.bf16.xpose.msra.mxu0 0
        %1209 = vmatprep.subr.bf16.mxu0 0
        %1210 = vmatpush1.bf16.xpose.msra.mxu0 0
        %1211 = vmatprep.subr.bf16.mxu0 0
        %1212 = vmatpush1.bf16.xpose.msra.mxu0 0
        %1213 = vmatprep.subr.bf16.mxu0 0
        %1214 = vmatpush1.bf16.xpose.msra.mxu0 0
        %1215 = vmatprep.subr.bf16.mxu0 0
        %1216 = vmatpush1.bf16.xpose.msra.mxu0 0
        %1217 = vmatprep.subr.bf16.mxu0 0
        %1218 = vmatpush1.bf16.xpose.msra.mxu0 0
        %1219 = vmatprep.mubr.bf16.mxu0 0
        %1220 = vmatmul.mubr.bf16.gmra.mrb[0].mxu0 %v1182
        %v1221 = vpop.f32.mrb[0].mxu0
        %v1222 = vadd.f32 0.0, %v1221
        %v1223 = vpop.f32.mrb[0].mxu0
        %v1224 = vpop.f32.mrb[0].mxu0
        %v1225 = vpop.f32.mrb[0].mxu0
        %1226 = vdwg.mxu0
        %1227 = vrot.lane.b32.xlu0 %v995, 112
        %v1228 = vpop.permute.xlu0 %1227
        %1229 = vrot.lane.b32.xlu0 %v1060, 112
        %v1230 = vpop.permute.xlu0 %1229
        %v1232 = vsel %vm1128, %v1228, 0
        %v1235 = vsel %vm1128, %v1230, 0
        %1237 = vmatprep.subr.bf16.mxu0 0
        %1238 = vmatpush1.bf16.xpose.msra.mxu0 %v1235
        %1239 = vmatprep.subr.bf16.mxu0 0
        %1240 = vmatpush1.bf16.xpose.msra.mxu0 0
        %1241 = vmatprep.subr.bf16.mxu0 0
        %1242 = vmatpush1.bf16.xpose.msra.mxu0 0
        %1243 = vmatprep.subr.bf16.mxu0 0
        %1244 = vmatpush1.bf16.xpose.msra.mxu0 0
        %1245 = vmatprep.subr.bf16.mxu0 0
        %1246 = vmatpush1.bf16.xpose.msra.mxu0 0
        %1247 = vmatprep.subr.bf16.mxu0 0
        %1248 = vmatpush1.bf16.xpose.msra.mxu0 0
        %1249 = vmatprep.subr.bf16.mxu0 0
        %1250 = vmatpush1.bf16.xpose.msra.mxu0 0
        %1251 = vmatprep.subr.bf16.mxu0 0
        %1252 = vmatpush1.bf16.xpose.msra.mxu0 0
        %1253 = vmatprep.subr.bf16.mxu0 0
        %1254 = vmatpush1.bf16.xpose.msra.mxu0 0
        %1255 = vmatprep.subr.bf16.mxu0 0
        %1256 = vmatpush1.bf16.xpose.msra.mxu0 0
        %1257 = vmatprep.subr.bf16.mxu0 0
        %1258 = vmatpush1.bf16.xpose.msra.mxu0 0
        %1259 = vmatprep.subr.bf16.mxu0 0
        %1260 = vmatpush1.bf16.xpose.msra.mxu0 0
        %1261 = vmatprep.subr.bf16.mxu0 0
        %1262 = vmatpush1.bf16.xpose.msra.mxu0 0
        %1263 = vmatprep.subr.bf16.mxu0 0
        %1264 = vmatpush1.bf16.xpose.msra.mxu0 0
        %1265 = vmatprep.subr.bf16.mxu0 0
        %1266 = vmatpush1.bf16.xpose.msra.mxu0 0
        %1267 = vmatprep.subr.bf16.mxu0 0
        %1268 = vmatpush1.bf16.xpose.msra.mxu0 0
        %1269 = vmatprep.mubr.bf16.mxu0 0
        %1270 = vmatmul.mubr.bf16.gmra.mrb[0].mxu0 %v1232
        %v1271 = vpop.f32.mrb[0].mxu0
        %v1272 = vadd.f32 0.0, %v1271
        %v1273 = vpop.f32.mrb[0].mxu0
        %v1274 = vpop.f32.mrb[0].mxu0
        %v1275 = vpop.f32.mrb[0].mxu0
        %1276 = vdwg.mxu0
        %1277 = vrot.lane.b32.xlu0 %v995, 104
        %v1278 = vpop.permute.xlu0 %1277
        %1279 = vrot.lane.b32.xlu0 %v1060, 104
        %v1280 = vpop.permute.xlu0 %1279
        %v1282 = vsel %vm1128, %v1278, 0
        %v1285 = vsel %vm1128, %v1280, 0
        %1287 = vmatprep.subr.bf16.mxu0 0
        %1288 = vmatpush1.bf16.xpose.msra.mxu0 %v1285
        %1289 = vmatprep.subr.bf16.mxu0 0
        %1290 = vmatpush1.bf16.xpose.msra.mxu0 0
        %1291 = vmatprep.subr.bf16.mxu0 0
        %1292 = vmatpush1.bf16.xpose.msra.mxu0 0
        %1293 = vmatprep.subr.bf16.mxu0 0
        %1294 = vmatpush1.bf16.xpose.msra.mxu0 0
        %1295 = vmatprep.subr.bf16.mxu0 0
        %1296 = vmatpush1.bf16.xpose.msra.mxu0 0
        %1297 = vmatprep.subr.bf16.mxu0 0
        %1298 = vmatpush1.bf16.xpose.msra.mxu0 0
        %1299 = vmatprep.subr.bf16.mxu0 0
        %1300 = vmatpush1.bf16.xpose.msra.mxu0 0
        %1301 = vmatprep.subr.bf16.mxu0 0
        %1302 = vmatpush1.bf16.xpose.msra.mxu0 0
        %1303 = vmatprep.subr.bf16.mxu0 0
        %1304 = vmatpush1.bf16.xpose.msra.mxu0 0
        %1305 = vmatprep.subr.bf16.mxu0 0
        %1306 = vmatpush1.bf16.xpose.msra.mxu0 0
        %1307 = vmatprep.subr.bf16.mxu0 0
        %1308 = vmatpush1.bf16.xpose.msra.mxu0 0
        %1309 = vmatprep.subr.bf16.mxu0 0
        %1310 = vmatpush1.bf16.xpose.msra.mxu0 0
        %1311 = vmatprep.subr.bf16.mxu0 0
        %1312 = vmatpush1.bf16.xpose.msra.mxu0 0
        %1313 = vmatprep.subr.bf16.mxu0 0
        %1314 = vmatpush1.bf16.xpose.msra.mxu0 0
        %1315 = vmatprep.subr.bf16.mxu0 0
        %1316 = vmatpush1.bf16.xpose.msra.mxu0 0
        %1317 = vmatprep.subr.bf16.mxu0 0
        %1318 = vmatpush1.bf16.xpose.msra.mxu0 0
        %1319 = vmatprep.mubr.bf16.mxu0 0
        %1320 = vmatmul.mubr.bf16.gmra.mrb[0].mxu0 %v1282
        %v1321 = vpop.f32.mrb[0].mxu0
        %v1322 = vadd.f32 0.0, %v1321
        %v1323 = vpop.f32.mrb[0].mxu0
        %v1324 = vpop.f32.mrb[0].mxu0
        %v1325 = vpop.f32.mrb[0].mxu0
        %1326 = vdwg.mxu0
        %v1328 = vlaneseq
        %v1329 = vshrl.u32 %v1328, 7
        %v1330 = vsub.s32 0, %v1329
        %v1331 = vrot.slane %v1126, %v1330
        %v1333 = vadd.f32 %v1170, %v1331
        %v1334 = vadd.f32 %v1222, %v1331
        %v1335 = vadd.f32 %v1272, %v1331
        %v1336 = vadd.f32 %v1322, %v1331
        %v1337 = vsel %vm1128, %v1333, -inf
        %1338 = vmax.xlane.f32.xlu0 %v1337
        %v1339 = vpop.xlane.xlu0 %1338
        %v1340 = vsel %vm1128, %v1334, -inf
        %1341 = vmax.xlane.f32.xlu0 %v1340
        %v1342 = vpop.xlane.xlu0 %1341
        %v1343 = vsel %vm1128, %v1335, -inf
        %1344 = vmax.xlane.f32.xlu0 %v1343
        %v1345 = vpop.xlane.xlu0 %1344
        %v1346 = vsel %vm1128, %v1336, -inf
        %1347 = vmax.xlane.f32.xlu0 %v1346
        %v1348 = vpop.xlane.xlu0 %1347
        %v1349 = vsub.f32 %v1333, %v1339
        %v1350 = vsub.f32 %v1334, %v1342
        %v1351 = vsub.f32 %v1335, %v1345
        %v1352 = vsub.f32 %v1336, %v1348
        %v1353 = vmul.f32 %v1349, 1.442695
        %v1354 = vpow.pop %v1353
        %v1355 = vmul.f32 %v1350, 1.442695
        %v1356 = vpow.pop %v1355
        %v1357 = vmul.f32 %v1351, 1.442695
        %v1358 = vpow.pop %v1357
        %v1359 = vmul.f32 %v1352, 1.442695
        %v1360 = vpow.pop %v1359
        %v1361 = vsel %vm1128, %v1354, 0.0
        %1362 = vadd.xlane.f32.xlu0 %v1361
        %v1363 = vpop.xlane.xlu0 %1362
        %v1364 = vsel %vm1128, %v1356, 0.0
        %1365 = vadd.xlane.f32.xlu0 %v1364
        %v1366 = vpop.xlane.xlu0 %1365
        %v1367 = vsel %vm1128, %v1358, 0.0
        %1368 = vadd.xlane.f32.xlu0 %v1367
        %v1369 = vpop.xlane.xlu0 %1368
        %v1370 = vsel %vm1128, %v1360, 0.0
        %1371 = vadd.xlane.f32.xlu0 %v1370
        %v1372 = vpop.xlane.xlu0 %1371
        %v1373 = vrcp.pop %v1363
        %v1374 = vrcp.pop %v1366
        %v1375 = vrcp.pop %v1369
        %v1376 = vrcp.pop %v1372
        %v1377 = vmul.f32 %v1354, %v1373
        %v1378 = vmul.f32 %v1356, %v1374
        %v1379 = vmul.f32 %v1358, %v1375
        %v1380 = vmul.f32 %v1360, %v1376
        %v1381 = vpack.c.bf16 %v1378, %v1377
        %v1382 = vpack.c.bf16 %v1380, %v1379
        %v1384 = vsel %vm1128, %v1381, 0
        %vm1386 = vcmask 1043456
        %v1388 = vsel %vm1386, %v1125, 0
        %1390 = vmatprep.subr.bf16.mxu0 0
        %1391 = vmatpush1.bf16.msra.mxu0 %v1388
        %1392 = vmatprep.subr.bf16.mxu0 0
        %1393 = vmatpush1.bf16.msra.mxu0 0
        %1394 = vmatprep.subr.bf16.mxu0 0
        %1395 = vmatpush1.bf16.msra.mxu0 0
        %1396 = vmatprep.subr.bf16.mxu0 0
        %1397 = vmatpush1.bf16.msra.mxu0 0
        %1398 = vmatprep.subr.bf16.mxu0 0
        %1399 = vmatpush1.bf16.msra.mxu0 0
        %1400 = vmatprep.subr.bf16.mxu0 0
        %1401 = vmatpush1.bf16.msra.mxu0 0
        %1402 = vmatprep.subr.bf16.mxu0 0
        %1403 = vmatpush1.bf16.msra.mxu0 0
        %1404 = vmatprep.subr.bf16.mxu0 0
        %1405 = vmatpush1.bf16.msra.mxu0 0
        %1406 = vmatprep.subr.bf16.mxu0 0
        %1407 = vmatpush1.bf16.msra.mxu0 0
        %1408 = vmatprep.subr.bf16.mxu0 0
        %1409 = vmatpush1.bf16.msra.mxu0 0
        %1410 = vmatprep.subr.bf16.mxu0 0
        %1411 = vmatpush1.bf16.msra.mxu0 0
        %1412 = vmatprep.subr.bf16.mxu0 0
        %1413 = vmatpush1.bf16.msra.mxu0 0
        %1414 = vmatprep.subr.bf16.mxu0 0
        %1415 = vmatpush1.bf16.msra.mxu0 0
        %1416 = vmatprep.subr.bf16.mxu0 0
        %1417 = vmatpush1.bf16.msra.mxu0 0
        %1418 = vmatprep.subr.bf16.mxu0 0
        %1419 = vmatpush1.bf16.msra.mxu0 0
        %1420 = vmatprep.subr.bf16.mxu0 0
        %1421 = vmatpush1.bf16.msra.mxu0 0
        %1422 = vmatprep.mubr.bf16.mxu0 0
        %1423 = vmatmul.mubr.bf16.gmra.mrb[0].mxu0 %v1384
        %v1424 = vpop.f32.mrb[0].mxu0
        %v1425 = vadd.f32 0.0, %v1424
        %v1426 = vpop.f32.mrb[0].mxu0
        %v1427 = vpop.f32.mrb[0].mxu0
        %v1428 = vpop.f32.mrb[0].mxu0
        %1429 = vdwg.mxu0
        %v1431 = vrot.slane %v1381, 4
        %1433 = vrot.lane.b32.xlu0 %v1125, 120
        %v1434 = vpop.permute.xlu0 %1433
        %v1436 = vsel %vm1128, %v1431, 0
        %v1439 = vsel %vm1386, %v1434, 0
        %1441 = vmatprep.subr.bf16.mxu0 0
        %1442 = vmatpush1.bf16.msra.mxu0 %v1439
        %1443 = vmatprep.subr.bf16.mxu0 0
        %1444 = vmatpush1.bf16.msra.mxu0 0
        %1445 = vmatprep.subr.bf16.mxu0 0
        %1446 = vmatpush1.bf16.msra.mxu0 0
        %1447 = vmatprep.subr.bf16.mxu0 0
        %1448 = vmatpush1.bf16.msra.mxu0 0
        %1449 = vmatprep.subr.bf16.mxu0 0
        %1450 = vmatpush1.bf16.msra.mxu0 0
        %1451 = vmatprep.subr.bf16.mxu0 0
        %1452 = vmatpush1.bf16.msra.mxu0 0
        %1453 = vmatprep.subr.bf16.mxu0 0
        %1454 = vmatpush1.bf16.msra.mxu0 0
        %1455 = vmatprep.subr.bf16.mxu0 0
        %1456 = vmatpush1.bf16.msra.mxu0 0
        %1457 = vmatprep.subr.bf16.mxu0 0
        %1458 = vmatpush1.bf16.msra.mxu0 0
        %1459 = vmatprep.subr.bf16.mxu0 0
        %1460 = vmatpush1.bf16.msra.mxu0 0
        %1461 = vmatprep.subr.bf16.mxu0 0
        %1462 = vmatpush1.bf16.msra.mxu0 0
        %1463 = vmatprep.subr.bf16.mxu0 0
        %1464 = vmatpush1.bf16.msra.mxu0 0
        %1465 = vmatprep.subr.bf16.mxu0 0
        %1466 = vmatpush1.bf16.msra.mxu0 0
        %1467 = vmatprep.subr.bf16.mxu0 0
        %1468 = vmatpush1.bf16.msra.mxu0 0
        %1469 = vmatprep.subr.bf16.mxu0 0
        %1470 = vmatpush1.bf16.msra.mxu0 0
        %1471 = vmatprep.subr.bf16.mxu0 0
        %1472 = vmatpush1.bf16.msra.mxu0 0
        %1473 = vmatprep.mubr.bf16.mxu0 0
        %1474 = vmatmul.mubr.bf16.gmra.mrb[0].mxu0 %v1436
        %v1475 = vpop.f32.mrb[0].mxu0
        %v1476 = vadd.f32 0.0, %v1475
        %v1477 = vpop.f32.mrb[0].mxu0
        %v1478 = vpop.f32.mrb[0].mxu0
        %v1479 = vpop.f32.mrb[0].mxu0
        %1480 = vdwg.mxu0
        %1481 = vrot.lane.b32.xlu0 %v1125, 112
        %v1482 = vpop.permute.xlu0 %1481
        %v1484 = vsel %vm1128, %v1382, 0
        %v1487 = vsel %vm1386, %v1482, 0
        %1489 = vmatprep.subr.bf16.mxu0 0
        %1490 = vmatpush1.bf16.msra.mxu0 %v1487
        %1491 = vmatprep.subr.bf16.mxu0 0
        %1492 = vmatpush1.bf16.msra.mxu0 0
        %1493 = vmatprep.subr.bf16.mxu0 0
        %1494 = vmatpush1.bf16.msra.mxu0 0
        %1495 = vmatprep.subr.bf16.mxu0 0
        %1496 = vmatpush1.bf16.msra.mxu0 0
        %1497 = vmatprep.subr.bf16.mxu0 0
        %1498 = vmatpush1.bf16.msra.mxu0 0
        %1499 = vmatprep.subr.bf16.mxu0 0
        %1500 = vmatpush1.bf16.msra.mxu0 0
        %1501 = vmatprep.subr.bf16.mxu0 0
        %1502 = vmatpush1.bf16.msra.mxu0 0
        %1503 = vmatprep.subr.bf16.mxu0 0
        %1504 = vmatpush1.bf16.msra.mxu0 0
        %1505 = vmatprep.subr.bf16.mxu0 0
        %1506 = vmatpush1.bf16.msra.mxu0 0
        %1507 = vmatprep.subr.bf16.mxu0 0
        %1508 = vmatpush1.bf16.msra.mxu0 0
        %1509 = vmatprep.subr.bf16.mxu0 0
        %1510 = vmatpush1.bf16.msra.mxu0 0
        %1511 = vmatprep.subr.bf16.mxu0 0
        %1512 = vmatpush1.bf16.msra.mxu0 0
        %1513 = vmatprep.subr.bf16.mxu0 0
        %1514 = vmatpush1.bf16.msra.mxu0 0
        %1515 = vmatprep.subr.bf16.mxu0 0
        %1516 = vmatpush1.bf16.msra.mxu0 0
        %1517 = vmatprep.subr.bf16.mxu0 0
        %1518 = vmatpush1.bf16.msra.mxu0 0
        %1519 = vmatprep.subr.bf16.mxu0 0
        %1520 = vmatpush1.bf16.msra.mxu0 0
        %1521 = vmatprep.mubr.bf16.mxu0 0
        %1522 = vmatmul.mubr.bf16.gmra.mrb[0].mxu0 %v1484
        %v1523 = vpop.f32.mrb[0].mxu0
        %v1524 = vadd.f32 0.0, %v1523
        %v1525 = vpop.f32.mrb[0].mxu0
        %v1526 = vpop.f32.mrb[0].mxu0
        %v1527 = vpop.f32.mrb[0].mxu0
        %1528 = vdwg.mxu0
        %v1530 = vrot.slane %v1382, 4
        %1531 = vrot.lane.b32.xlu0 %v1125, 104
        %v1532 = vpop.permute.xlu0 %1531
        %v1534 = vsel %vm1128, %v1530, 0
        %v1537 = vsel %vm1386, %v1532, 0
        %1539 = vmatprep.subr.bf16.mxu0 0
        %1540 = vmatpush1.bf16.msra.mxu0 %v1537
        %1541 = vmatprep.subr.bf16.mxu0 0
        %1542 = vmatpush1.bf16.msra.mxu0 0
        %1543 = vmatprep.subr.bf16.mxu0 0
        %1544 = vmatpush1.bf16.msra.mxu0 0
        %1545 = vmatprep.subr.bf16.mxu0 0
        %1546 = vmatpush1.bf16.msra.mxu0 0
        %1547 = vmatprep.subr.bf16.mxu0 0
        %1548 = vmatpush1.bf16.msra.mxu0 0
        %1549 = vmatprep.subr.bf16.mxu0 0
        %1550 = vmatpush1.bf16.msra.mxu0 0
        %1551 = vmatprep.subr.bf16.mxu0 0
        %1552 = vmatpush1.bf16.msra.mxu0 0
        %1553 = vmatprep.subr.bf16.mxu0 0
        %1554 = vmatpush1.bf16.msra.mxu0 0
        %1555 = vmatprep.subr.bf16.mxu0 0
        %1556 = vmatpush1.bf16.msra.mxu0 0
        %1557 = vmatprep.subr.bf16.mxu0 0
        %1558 = vmatpush1.bf16.msra.mxu0 0
        %1559 = vmatprep.subr.bf16.mxu0 0
        %1560 = vmatpush1.bf16.msra.mxu0 0
        %1561 = vmatprep.subr.bf16.mxu0 0
        %1562 = vmatpush1.bf16.msra.mxu0 0
        %1563 = vmatprep.subr.bf16.mxu0 0
        %1564 = vmatpush1.bf16.msra.mxu0 0
        %1565 = vmatprep.subr.bf16.mxu0 0
        %1566 = vmatpush1.bf16.msra.mxu0 0
        %1567 = vmatprep.subr.bf16.mxu0 0
        %1568 = vmatpush1.bf16.msra.mxu0 0
        %1569 = vmatprep.subr.bf16.mxu0 0
        %1570 = vmatpush1.bf16.msra.mxu0 0
        %1571 = vmatprep.mubr.bf16.mxu0 0
        %1572 = vmatmul.mubr.bf16.gmra.mrb[0].mxu0 %v1534
        %v1573 = vpop.f32.mrb[0].mxu0
        %v1574 = vadd.f32 0.0, %v1573
        %v1575 = vpop.f32.mrb[0].mxu0
        %v1576 = vpop.f32.mrb[0].mxu0
        %v1577 = vpop.f32.mrb[0].mxu0
        %1578 = vdwg.mxu0
        %1580 = vrot.lane.b32.xlu0 %v1476, 8
        %v1581 = vpop.permute.xlu0 %1580
        %1584 = vrot.lane.b32.xlu0 %v1524, 16
        %v1585 = vpop.permute.xlu0 %1584
        %1588 = vrot.lane.b32.xlu0 %v1574, 24
        %v1589 = vpop.permute.xlu0 %1588
        %v1591 = vsel %vm1128, %v1425, %v1581
        %vm1592 = vcmask 130048
        %v1593 = vsel %vm1592, %v1591, %v1585
        %vm1594 = vcmask 195584
        %v1595 = vsel %vm1594, %v1593, %v1589
        %v1596 = vrot.slane %v995, 4
        %v1597 = vrot.slane %v1060, 4
        %v1599 = vsel %vm1128, %v1596, 0
        %v1602 = vsel %vm1128, %v1597, 0
        %1604 = vmatprep.subr.bf16.mxu0 0
        %1605 = vmatpush1.bf16.xpose.msra.mxu0 %v1602
        %1606 = vmatprep.subr.bf16.mxu0 0
        %1607 = vmatpush1.bf16.xpose.msra.mxu0 0
        %1608 = vmatprep.subr.bf16.mxu0 0
        %1609 = vmatpush1.bf16.xpose.msra.mxu0 0
        %1610 = vmatprep.subr.bf16.mxu0 0
        %1611 = vmatpush1.bf16.xpose.msra.mxu0 0
        %1612 = vmatprep.subr.bf16.mxu0 0
        %1613 = vmatpush1.bf16.xpose.msra.mxu0 0
        %1614 = vmatprep.subr.bf16.mxu0 0
        %1615 = vmatpush1.bf16.xpose.msra.mxu0 0
        %1616 = vmatprep.subr.bf16.mxu0 0
        %1617 = vmatpush1.bf16.xpose.msra.mxu0 0
        %1618 = vmatprep.subr.bf16.mxu0 0
        %1619 = vmatpush1.bf16.xpose.msra.mxu0 0
        %1620 = vmatprep.subr.bf16.mxu0 0
        %1621 = vmatpush1.bf16.xpose.msra.mxu0 0
        %1622 = vmatprep.subr.bf16.mxu0 0
        %1623 = vmatpush1.bf16.xpose.msra.mxu0 0
        %1624 = vmatprep.subr.bf16.mxu0 0
        %1625 = vmatpush1.bf16.xpose.msra.mxu0 0
        %1626 = vmatprep.subr.bf16.mxu0 0
        %1627 = vmatpush1.bf16.xpose.msra.mxu0 0
        %1628 = vmatprep.subr.bf16.mxu0 0
        %1629 = vmatpush1.bf16.xpose.msra.mxu0 0
        %1630 = vmatprep.subr.bf16.mxu0 0
        %1631 = vmatpush1.bf16.xpose.msra.mxu0 0
        %1632 = vmatprep.subr.bf16.mxu0 0
        %1633 = vmatpush1.bf16.xpose.msra.mxu0 0
        %1634 = vmatprep.subr.bf16.mxu0 0
        %1635 = vmatpush1.bf16.xpose.msra.mxu0 0
        %1636 = vmatprep.mubr.bf16.mxu0 0
        %1637 = vmatmul.mubr.bf16.gmra.mrb[0].mxu0 %v1599
        %v1638 = vpop.f32.mrb[0].mxu0
        %v1639 = vadd.f32 0.0, %v1638
        %v1640 = vpop.f32.mrb[0].mxu0
        %v1641 = vpop.f32.mrb[0].mxu0
        %v1642 = vpop.f32.mrb[0].mxu0
        %1643 = vdwg.mxu0
        %1644 = vrot.lane.b32.xlu0 %v1596, 120
        %v1645 = vpop.permute.xlu0 %1644
        %1646 = vrot.lane.b32.xlu0 %v1597, 120
        %v1647 = vpop.permute.xlu0 %1646
        %v1649 = vsel %vm1128, %v1645, 0
        %v1652 = vsel %vm1128, %v1647, 0
        %1654 = vmatprep.subr.bf16.mxu0 0
        %1655 = vmatpush1.bf16.xpose.msra.mxu0 %v1652
        %1656 = vmatprep.subr.bf16.mxu0 0
        %1657 = vmatpush1.bf16.xpose.msra.mxu0 0
        %1658 = vmatprep.subr.bf16.mxu0 0
        %1659 = vmatpush1.bf16.xpose.msra.mxu0 0
        %1660 = vmatprep.subr.bf16.mxu0 0
        %1661 = vmatpush1.bf16.xpose.msra.mxu0 0
        %1662 = vmatprep.subr.bf16.mxu0 0
        %1663 = vmatpush1.bf16.xpose.msra.mxu0 0
        %1664 = vmatprep.subr.bf16.mxu0 0
        %1665 = vmatpush1.bf16.xpose.msra.mxu0 0
        %1666 = vmatprep.subr.bf16.mxu0 0
        %1667 = vmatpush1.bf16.xpose.msra.mxu0 0
        %1668 = vmatprep.subr.bf16.mxu0 0
        %1669 = vmatpush1.bf16.xpose.msra.mxu0 0
        %1670 = vmatprep.subr.bf16.mxu0 0
        %1671 = vmatpush1.bf16.xpose.msra.mxu0 0
        %1672 = vmatprep.subr.bf16.mxu0 0
        %1673 = vmatpush1.bf16.xpose.msra.mxu0 0
        %1674 = vmatprep.subr.bf16.mxu0 0
        %1675 = vmatpush1.bf16.xpose.msra.mxu0 0
        %1676 = vmatprep.subr.bf16.mxu0 0
        %1677 = vmatpush1.bf16.xpose.msra.mxu0 0
        %1678 = vmatprep.subr.bf16.mxu0 0
        %1679 = vmatpush1.bf16.xpose.msra.mxu0 0
        %1680 = vmatprep.subr.bf16.mxu0 0
        %1681 = vmatpush1.bf16.xpose.msra.mxu0 0
        %1682 = vmatprep.subr.bf16.mxu0 0
        %1683 = vmatpush1.bf16.xpose.msra.mxu0 0
        %1684 = vmatprep.subr.bf16.mxu0 0
        %1685 = vmatpush1.bf16.xpose.msra.mxu0 0
        %1686 = vmatprep.mubr.bf16.mxu0 0
        %1687 = vmatmul.mubr.bf16.gmra.mrb[0].mxu0 %v1649
        %v1688 = vpop.f32.mrb[0].mxu0
        %v1689 = vadd.f32 0.0, %v1688
        %v1690 = vpop.f32.mrb[0].mxu0
        %v1691 = vpop.f32.mrb[0].mxu0
        %v1692 = vpop.f32.mrb[0].mxu0
        %1693 = vdwg.mxu0
        %1694 = vrot.lane.b32.xlu0 %v1596, 112
        %v1695 = vpop.permute.xlu0 %1694
        %1696 = vrot.lane.b32.xlu0 %v1597, 112
        %v1697 = vpop.permute.xlu0 %1696
        %v1699 = vsel %vm1128, %v1695, 0
        %v1702 = vsel %vm1128, %v1697, 0
        %1704 = vmatprep.subr.bf16.mxu0 0
        %1705 = vmatpush1.bf16.xpose.msra.mxu0 %v1702
        %1706 = vmatprep.subr.bf16.mxu0 0
        %1707 = vmatpush1.bf16.xpose.msra.mxu0 0
        %1708 = vmatprep.subr.bf16.mxu0 0
        %1709 = vmatpush1.bf16.xpose.msra.mxu0 0
        %1710 = vmatprep.subr.bf16.mxu0 0
        %1711 = vmatpush1.bf16.xpose.msra.mxu0 0
        %1712 = vmatprep.subr.bf16.mxu0 0
        %1713 = vmatpush1.bf16.xpose.msra.mxu0 0
        %1714 = vmatprep.subr.bf16.mxu0 0
        %1715 = vmatpush1.bf16.xpose.msra.mxu0 0
        %1716 = vmatprep.subr.bf16.mxu0 0
        %1717 = vmatpush1.bf16.xpose.msra.mxu0 0
        %1718 = vmatprep.subr.bf16.mxu0 0
        %1719 = vmatpush1.bf16.xpose.msra.mxu0 0
        %1720 = vmatprep.subr.bf16.mxu0 0
        %1721 = vmatpush1.bf16.xpose.msra.mxu0 0
        %1722 = vmatprep.subr.bf16.mxu0 0
        %1723 = vmatpush1.bf16.xpose.msra.mxu0 0
        %1724 = vmatprep.subr.bf16.mxu0 0
        %1725 = vmatpush1.bf16.xpose.msra.mxu0 0
        %1726 = vmatprep.subr.bf16.mxu0 0
        %1727 = vmatpush1.bf16.xpose.msra.mxu0 0
        %1728 = vmatprep.subr.bf16.mxu0 0
        %1729 = vmatpush1.bf16.xpose.msra.mxu0 0
        %1730 = vmatprep.subr.bf16.mxu0 0
        %1731 = vmatpush1.bf16.xpose.msra.mxu0 0
        %1732 = vmatprep.subr.bf16.mxu0 0
        %1733 = vmatpush1.bf16.xpose.msra.mxu0 0
        %1734 = vmatprep.subr.bf16.mxu0 0
        %1735 = vmatpush1.bf16.xpose.msra.mxu0 0
        %1736 = vmatprep.mubr.bf16.mxu0 0
        %1737 = vmatmul.mubr.bf16.gmra.mrb[0].mxu0 %v1699
        %v1738 = vpop.f32.mrb[0].mxu0
        %v1739 = vadd.f32 0.0, %v1738
        %v1740 = vpop.f32.mrb[0].mxu0
        %v1741 = vpop.f32.mrb[0].mxu0
        %v1742 = vpop.f32.mrb[0].mxu0
        %1743 = vdwg.mxu0
        %1744 = vrot.lane.b32.xlu0 %v1596, 104
        %v1745 = vpop.permute.xlu0 %1744
        %1746 = vrot.lane.b32.xlu0 %v1597, 104
        %v1747 = vpop.permute.xlu0 %1746
        %v1749 = vsel %vm1128, %v1745, 0
        %v1752 = vsel %vm1128, %v1747, 0
        %1754 = vmatprep.subr.bf16.mxu0 0
        %1755 = vmatpush1.bf16.xpose.msra.mxu0 %v1752
        %1756 = vmatprep.subr.bf16.mxu0 0
        %1757 = vmatpush1.bf16.xpose.msra.mxu0 0
        %1758 = vmatprep.subr.bf16.mxu0 0
        %1759 = vmatpush1.bf16.xpose.msra.mxu0 0
        %1760 = vmatprep.subr.bf16.mxu0 0
        %1761 = vmatpush1.bf16.xpose.msra.mxu0 0
        %1762 = vmatprep.subr.bf16.mxu0 0
        %1763 = vmatpush1.bf16.xpose.msra.mxu0 0
        %1764 = vmatprep.subr.bf16.mxu0 0
        %1765 = vmatpush1.bf16.xpose.msra.mxu0 0
        %1766 = vmatprep.subr.bf16.mxu0 0
        %1767 = vmatpush1.bf16.xpose.msra.mxu0 0
        %1768 = vmatprep.subr.bf16.mxu0 0
        %1769 = vmatpush1.bf16.xpose.msra.mxu0 0
        %1770 = vmatprep.subr.bf16.mxu0 0
        %1771 = vmatpush1.bf16.xpose.msra.mxu0 0
        %1772 = vmatprep.subr.bf16.mxu0 0
        %1773 = vmatpush1.bf16.xpose.msra.mxu0 0
        %1774 = vmatprep.subr.bf16.mxu0 0
        %1775 = vmatpush1.bf16.xpose.msra.mxu0 0
        %1776 = vmatprep.subr.bf16.mxu0 0
        %1777 = vmatpush1.bf16.xpose.msra.mxu0 0
        %1778 = vmatprep.subr.bf16.mxu0 0
        %1779 = vmatpush1.bf16.xpose.msra.mxu0 0
        %1780 = vmatprep.subr.bf16.mxu0 0
        %1781 = vmatpush1.bf16.xpose.msra.mxu0 0
        %1782 = vmatprep.subr.bf16.mxu0 0
        %1783 = vmatpush1.bf16.xpose.msra.mxu0 0
        %1784 = vmatprep.subr.bf16.mxu0 0
        %1785 = vmatpush1.bf16.xpose.msra.mxu0 0
        %1786 = vmatprep.mubr.bf16.mxu0 0
        %1787 = vmatmul.mubr.bf16.gmra.mrb[0].mxu0 %v1749
        %v1788 = vpop.f32.mrb[0].mxu0
        %v1789 = vadd.f32 0.0, %v1788
        %v1790 = vpop.f32.mrb[0].mxu0
        %v1791 = vpop.f32.mrb[0].mxu0
        %v1792 = vpop.f32.mrb[0].mxu0
        %1793 = vdwg.mxu0
        %v1795 = vlaneseq
        %v1796 = vshrl.u32 %v1795, 7
        %v1797 = vsub.s32 0, %v1796
        %v1798 = vrot.slane %v1127, %v1797
        %v1800 = vadd.f32 %v1639, %v1798
        %v1801 = vadd.f32 %v1689, %v1798
        %v1802 = vadd.f32 %v1739, %v1798
        %v1803 = vadd.f32 %v1789, %v1798
        %v1804 = vsel %vm1128, %v1800, -inf
        %1805 = vmax.xlane.f32.xlu0 %v1804
        %v1806 = vpop.xlane.xlu0 %1805
        %v1807 = vsel %vm1128, %v1801, -inf
        %1808 = vmax.xlane.f32.xlu0 %v1807
        %v1809 = vpop.xlane.xlu0 %1808
        %v1810 = vsel %vm1128, %v1802, -inf
        %1811 = vmax.xlane.f32.xlu0 %v1810
        %v1812 = vpop.xlane.xlu0 %1811
        %v1813 = vsel %vm1128, %v1803, -inf
        %1814 = vmax.xlane.f32.xlu0 %v1813
        %v1815 = vpop.xlane.xlu0 %1814
        %v1816 = vsub.f32 %v1800, %v1806
        %v1817 = vsub.f32 %v1801, %v1809
        %v1818 = vsub.f32 %v1802, %v1812
        %v1819 = vsub.f32 %v1803, %v1815
        %v1820 = vmul.f32 %v1816, 1.442695
        %v1821 = vpow.pop %v1820
        %v1822 = vmul.f32 %v1817, 1.442695
        %v1823 = vpow.pop %v1822
        %v1824 = vmul.f32 %v1818, 1.442695
        %v1825 = vpow.pop %v1824
        %v1826 = vmul.f32 %v1819, 1.442695
        %v1827 = vpow.pop %v1826
        %v1828 = vsel %vm1128, %v1821, 0.0
        %1829 = vadd.xlane.f32.xlu0 %v1828
        %v1830 = vpop.xlane.xlu0 %1829
        %v1831 = vsel %vm1128, %v1823, 0.0
        %1832 = vadd.xlane.f32.xlu0 %v1831
        %v1833 = vpop.xlane.xlu0 %1832
        %v1834 = vsel %vm1128, %v1825, 0.0
        %1835 = vadd.xlane.f32.xlu0 %v1834
        %v1836 = vpop.xlane.xlu0 %1835
        %v1837 = vsel %vm1128, %v1827, 0.0
        %1838 = vadd.xlane.f32.xlu0 %v1837
        %v1839 = vpop.xlane.xlu0 %1838
        %v1840 = vrcp.pop %v1830
        %v1841 = vrcp.pop %v1833
        %v1842 = vrcp.pop %v1836
        %v1843 = vrcp.pop %v1839
        %v1844 = vmul.f32 %v1821, %v1840
        %v1845 = vmul.f32 %v1823, %v1841
        %v1846 = vmul.f32 %v1825, %v1842
        %v1847 = vmul.f32 %v1827, %v1843
        %v1848 = vpack.c.bf16 %v1845, %v1844
        %v1849 = vpack.c.bf16 %v1847, %v1846
        %v1850 = vrot.slane %v1125, 4
        %v1852 = vsel %vm1128, %v1848, 0
        %v1855 = vsel %vm1386, %v1850, 0
        %1857 = vmatprep.subr.bf16.mxu0 0
        %1858 = vmatpush1.bf16.msra.mxu0 %v1855
        %1859 = vmatprep.subr.bf16.mxu0 0
        %1860 = vmatpush1.bf16.msra.mxu0 0
        %1861 = vmatprep.subr.bf16.mxu0 0
        %1862 = vmatpush1.bf16.msra.mxu0 0
        %1863 = vmatprep.subr.bf16.mxu0 0
        %1864 = vmatpush1.bf16.msra.mxu0 0
        %1865 = vmatprep.subr.bf16.mxu0 0
        %1866 = vmatpush1.bf16.msra.mxu0 0
        %1867 = vmatprep.subr.bf16.mxu0 0
        %1868 = vmatpush1.bf16.msra.mxu0 0
        %1869 = vmatprep.subr.bf16.mxu0 0
        %1870 = vmatpush1.bf16.msra.mxu0 0
        %1871 = vmatprep.subr.bf16.mxu0 0
        %1872 = vmatpush1.bf16.msra.mxu0 0
        %1873 = vmatprep.subr.bf16.mxu0 0
        %1874 = vmatpush1.bf16.msra.mxu0 0
        %1875 = vmatprep.subr.bf16.mxu0 0
        %1876 = vmatpush1.bf16.msra.mxu0 0
        %1877 = vmatprep.subr.bf16.mxu0 0
        %1878 = vmatpush1.bf16.msra.mxu0 0
        %1879 = vmatprep.subr.bf16.mxu0 0
        %1880 = vmatpush1.bf16.msra.mxu0 0
        %1881 = vmatprep.subr.bf16.mxu0 0
        %1882 = vmatpush1.bf16.msra.mxu0 0
        %1883 = vmatprep.subr.bf16.mxu0 0
        %1884 = vmatpush1.bf16.msra.mxu0 0
        %1885 = vmatprep.subr.bf16.mxu0 0
        %1886 = vmatpush1.bf16.msra.mxu0 0
        %1887 = vmatprep.subr.bf16.mxu0 0
        %1888 = vmatpush1.bf16.msra.mxu0 0
        %1889 = vmatprep.mubr.bf16.mxu0 0
        %1890 = vmatmul.mubr.bf16.gmra.mrb[0].mxu0 %v1852
        %v1891 = vpop.f32.mrb[0].mxu0
        %v1892 = vadd.f32 0.0, %v1891
        %v1893 = vpop.f32.mrb[0].mxu0
        %v1894 = vpop.f32.mrb[0].mxu0
        %v1895 = vpop.f32.mrb[0].mxu0
        %1896 = vdwg.mxu0
        %v1898 = vrot.slane %v1848, 4
        %1899 = vrot.lane.b32.xlu0 %v1850, 120
        %v1900 = vpop.permute.xlu0 %1899
        %v1902 = vsel %vm1128, %v1898, 0
        %v1905 = vsel %vm1386, %v1900, 0
        %1907 = vmatprep.subr.bf16.mxu0 0
        %1908 = vmatpush1.bf16.msra.mxu0 %v1905
        %1909 = vmatprep.subr.bf16.mxu0 0
        %1910 = vmatpush1.bf16.msra.mxu0 0
        %1911 = vmatprep.subr.bf16.mxu0 0
        %1912 = vmatpush1.bf16.msra.mxu0 0
        %1913 = vmatprep.subr.bf16.mxu0 0
        %1914 = vmatpush1.bf16.msra.mxu0 0
        %1915 = vmatprep.subr.bf16.mxu0 0
        %1916 = vmatpush1.bf16.msra.mxu0 0
        %1917 = vmatprep.subr.bf16.mxu0 0
        %1918 = vmatpush1.bf16.msra.mxu0 0
        %1919 = vmatprep.subr.bf16.mxu0 0
        %1920 = vmatpush1.bf16.msra.mxu0 0
        %1921 = vmatprep.subr.bf16.mxu0 0
        %1922 = vmatpush1.bf16.msra.mxu0 0
        %1923 = vmatprep.subr.bf16.mxu0 0
        %1924 = vmatpush1.bf16.msra.mxu0 0
        %1925 = vmatprep.subr.bf16.mxu0 0
        %1926 = vmatpush1.bf16.msra.mxu0 0
        %1927 = vmatprep.subr.bf16.mxu0 0
        %1928 = vmatpush1.bf16.msra.mxu0 0
        %1929 = vmatprep.subr.bf16.mxu0 0
        %1930 = vmatpush1.bf16.msra.mxu0 0
        %1931 = vmatprep.subr.bf16.mxu0 0
        %1932 = vmatpush1.bf16.msra.mxu0 0
        %1933 = vmatprep.subr.bf16.mxu0 0
        %1934 = vmatpush1.bf16.msra.mxu0 0
        %1935 = vmatprep.subr.bf16.mxu0 0
        %1936 = vmatpush1.bf16.msra.mxu0 0
        %1937 = vmatprep.subr.bf16.mxu0 0
        %1938 = vmatpush1.bf16.msra.mxu0 0
        %1939 = vmatprep.mubr.bf16.mxu0 0
        %1940 = vmatmul.mubr.bf16.gmra.mrb[0].mxu0 %v1902
        %v1941 = vpop.f32.mrb[0].mxu0
        %v1942 = vadd.f32 0.0, %v1941
        %v1943 = vpop.f32.mrb[0].mxu0
        %v1944 = vpop.f32.mrb[0].mxu0
        %v1945 = vpop.f32.mrb[0].mxu0
        %1946 = vdwg.mxu0
        %1947 = vrot.lane.b32.xlu0 %v1850, 112
        %v1948 = vpop.permute.xlu0 %1947
        %v1950 = vsel %vm1128, %v1849, 0
        %v1953 = vsel %vm1386, %v1948, 0
        %1955 = vmatprep.subr.bf16.mxu0 0
        %1956 = vmatpush1.bf16.msra.mxu0 %v1953
        %1957 = vmatprep.subr.bf16.mxu0 0
        %1958 = vmatpush1.bf16.msra.mxu0 0
        %1959 = vmatprep.subr.bf16.mxu0 0
        %1960 = vmatpush1.bf16.msra.mxu0 0
        %1961 = vmatprep.subr.bf16.mxu0 0
        %1962 = vmatpush1.bf16.msra.mxu0 0
        %1963 = vmatprep.subr.bf16.mxu0 0
        %1964 = vmatpush1.bf16.msra.mxu0 0
        %1965 = vmatprep.subr.bf16.mxu0 0
        %1966 = vmatpush1.bf16.msra.mxu0 0
        %1967 = vmatprep.subr.bf16.mxu0 0
        %1968 = vmatpush1.bf16.msra.mxu0 0
        %1969 = vmatprep.subr.bf16.mxu0 0
        %1970 = vmatpush1.bf16.msra.mxu0 0
        %1971 = vmatprep.subr.bf16.mxu0 0
        %1972 = vmatpush1.bf16.msra.mxu0 0
        %1973 = vmatprep.subr.bf16.mxu0 0
        %1974 = vmatpush1.bf16.msra.mxu0 0
        %1975 = vmatprep.subr.bf16.mxu0 0
        %1976 = vmatpush1.bf16.msra.mxu0 0
        %1977 = vmatprep.subr.bf16.mxu0 0
        %1978 = vmatpush1.bf16.msra.mxu0 0
        %1979 = vmatprep.subr.bf16.mxu0 0
        %1980 = vmatpush1.bf16.msra.mxu0 0
        %1981 = vmatprep.subr.bf16.mxu0 0
        %1982 = vmatpush1.bf16.msra.mxu0 0
        %1983 = vmatprep.subr.bf16.mxu0 0
        %1984 = vmatpush1.bf16.msra.mxu0 0
        %1985 = vmatprep.subr.bf16.mxu0 0
        %1986 = vmatpush1.bf16.msra.mxu0 0
        %1987 = vmatprep.mubr.bf16.mxu0 0
        %1988 = vmatmul.mubr.bf16.gmra.mrb[0].mxu0 %v1950
        %v1989 = vpop.f32.mrb[0].mxu0
        %v1990 = vadd.f32 0.0, %v1989
        %v1991 = vpop.f32.mrb[0].mxu0
        %v1992 = vpop.f32.mrb[0].mxu0
        %v1993 = vpop.f32.mrb[0].mxu0
        %1994 = vdwg.mxu0
        %v1996 = vrot.slane %v1849, 4
        %1997 = vrot.lane.b32.xlu0 %v1850, 104
        %v1998 = vpop.permute.xlu0 %1997
        %v2000 = vsel %vm1128, %v1996, 0
        %v2003 = vsel %vm1386, %v1998, 0
        %2005 = vmatprep.subr.bf16.mxu0 0
        %2006 = vmatpush1.bf16.msra.mxu0 %v2003
        %2007 = vmatprep.subr.bf16.mxu0 0
        %2008 = vmatpush1.bf16.msra.mxu0 0
        %2009 = vmatprep.subr.bf16.mxu0 0
        %2010 = vmatpush1.bf16.msra.mxu0 0
        %2011 = vmatprep.subr.bf16.mxu0 0
        %2012 = vmatpush1.bf16.msra.mxu0 0
        %2013 = vmatprep.subr.bf16.mxu0 0
        %2014 = vmatpush1.bf16.msra.mxu0 0
        %2015 = vmatprep.subr.bf16.mxu0 0
        %2016 = vmatpush1.bf16.msra.mxu0 0
        %2017 = vmatprep.subr.bf16.mxu0 0
        %2018 = vmatpush1.bf16.msra.mxu0 0
        %2019 = vmatprep.subr.bf16.mxu0 0
        %2020 = vmatpush1.bf16.msra.mxu0 0
        %2021 = vmatprep.subr.bf16.mxu0 0
        %2022 = vmatpush1.bf16.msra.mxu0 0
        %2023 = vmatprep.subr.bf16.mxu0 0
        %2024 = vmatpush1.bf16.msra.mxu0 0
        %2025 = vmatprep.subr.bf16.mxu0 0
        %2026 = vmatpush1.bf16.msra.mxu0 0
        %2027 = vmatprep.subr.bf16.mxu0 0
        %2028 = vmatpush1.bf16.msra.mxu0 0
        %2029 = vmatprep.subr.bf16.mxu0 0
        %2030 = vmatpush1.bf16.msra.mxu0 0
        %2031 = vmatprep.subr.bf16.mxu0 0
        %2032 = vmatpush1.bf16.msra.mxu0 0
        %2033 = vmatprep.subr.bf16.mxu0 0
        %2034 = vmatpush1.bf16.msra.mxu0 0
        %2035 = vmatprep.subr.bf16.mxu0 0
        %2036 = vmatpush1.bf16.msra.mxu0 0
        %2037 = vmatprep.mubr.bf16.mxu0 0
        %2038 = vmatmul.mubr.bf16.gmra.mrb[0].mxu0 %v2000
        %v2039 = vpop.f32.mrb[0].mxu0
        %v2040 = vadd.f32 0.0, %v2039
        %v2041 = vpop.f32.mrb[0].mxu0
        %v2042 = vpop.f32.mrb[0].mxu0
        %v2043 = vpop.f32.mrb[0].mxu0
        %2044 = vdwg.mxu0
        %2046 = vrot.lane.b32.xlu0 %v1942, 8
        %v2047 = vpop.permute.xlu0 %2046
        %2050 = vrot.lane.b32.xlu0 %v1990, 16
        %v2051 = vpop.permute.xlu0 %2050
        %2054 = vrot.lane.b32.xlu0 %v2040, 24
        %v2055 = vpop.permute.xlu0 %2054
        %v2057 = vsel %vm1128, %v1892, %v2047
        %v2058 = vsel %vm1592, %v2057, %v2051
        %v2059 = vsel %vm1594, %v2058, %v2055
        %v2060 = vpack.c.bf16 %v2059, %v1595
        %v2061 = vld [vmem:[%s882] sm:$0xf]
        %v2062 = vld [vmem:[%s882 + $0x4] sm:$0xf]
        %v2063 = vld [vmem:[%s882 + $0x8] sm:$0xf]
        %v2064 = vld [vmem:[%s882 + $0xc] sm:$0xf]
        %v2065 = vld [vmem:[%s885] sm:$0x1]
        %v2067 = vlaneseq
        %v2068 = vshrl.u32 %v2067, 7
        %v2069 = vsub.s32 0, %v2068
        %v2070 = vrot.slane %v2065, %v2069
        %v2076 = vunpack.c.l.b16 %v2061
        %v2077 = vunpack.c.l.b16 %v2062
        %v2078 = vunpack.c.l.b16 %v2063
        %v2079 = vunpack.c.l.b16 %v2064
        %v2080 = vpack.c.b16 %v2077, %v2076
        %v2081 = vpack.c.b16 %v2079, %v2078
        %v2085 = vsel %vm950, %v2060, 0
        %2087 = vmatprep.subr.bf16.mxu0 0
        %2088 = vmatpush1.bf16.msra.mxu0 %v2080
        %2089 = vmatprep.subr.bf16.mxu0 0
        %2090 = vmatpush1.bf16.msra.mxu0 %v2081
        %2091 = vmatprep.subr.bf16.mxu0 0
        %2092 = vmatpush1.bf16.msra.mxu0 0
        %2093 = vmatprep.subr.bf16.mxu0 0
        %2094 = vmatpush1.bf16.msra.mxu0 0
        %2095 = vmatprep.subr.bf16.mxu0 0
        %2096 = vmatpush1.bf16.msra.mxu0 0
        %2097 = vmatprep.subr.bf16.mxu0 0
        %2098 = vmatpush1.bf16.msra.mxu0 0
        %2099 = vmatprep.subr.bf16.mxu0 0
        %2100 = vmatpush1.bf16.msra.mxu0 0
        %2101 = vmatprep.subr.bf16.mxu0 0
        %2102 = vmatpush1.bf16.msra.mxu0 0
        %2103 = vmatprep.subr.bf16.mxu0 0
        %2104 = vmatpush1.bf16.msra.mxu0 0
        %2105 = vmatprep.subr.bf16.mxu0 0
        %2106 = vmatpush1.bf16.msra.mxu0 0
        %2107 = vmatprep.subr.bf16.mxu0 0
        %2108 = vmatpush1.bf16.msra.mxu0 0
        %2109 = vmatprep.subr.bf16.mxu0 0
        %2110 = vmatpush1.bf16.msra.mxu0 0
        %2111 = vmatprep.subr.bf16.mxu0 0
        %2112 = vmatpush1.bf16.msra.mxu0 0
        %2113 = vmatprep.subr.bf16.mxu0 0
        %2114 = vmatpush1.bf16.msra.mxu0 0
        %2115 = vmatprep.subr.bf16.mxu0 0
        %2116 = vmatpush1.bf16.msra.mxu0 0
        %2117 = vmatprep.subr.bf16.mxu0 0
        %2118 = vmatpush1.bf16.msra.mxu0 0
        %2119 = vmatprep.mubr.bf16.mxu0 0
        %2120 = vmatmul.mubr.bf16.gmra.mrb[0].mxu0 %v2085
        %v2121 = vpop.f32.mrb[0].mxu0
        %v2122 = vadd.f32 %v2070, %v2121
        %v2123 = vpop.f32.mrb[0].mxu0
        %v2124 = vpop.f32.mrb[0].mxu0
        %v2125 = vadd.f32 %v2070, %v2124
        %v2126 = vpop.f32.mrb[0].mxu0
        %2127 = vdwg.mxu0
        %v2128 = vadd.f32 %v924, %v2122
        %v2129 = vadd.f32 %v925, %v2125
        %v2130 = vld [vmem:[%s888] sm:$0x1]
        %v2131 = vld [vmem:[%s891] sm:$0x1]
        %v2132 = vsel %vm950, %v2128, 0.0
        %2133 = vadd.xlane.f32.xlu0 %v2132
        %v2134 = vpop.xlane.xlu0 %2133
        %v2135 = vsel %vm950, %v2129, 0.0
        %2136 = vadd.xlane.f32.xlu0 %v2135
        %v2137 = vpop.xlane.xlu0 %2136
        %v2138 = vrcp.pop 32.0
        %v2139 = vmul.f32 %v2134, %v2138
        %v2140 = vmul.f32 %v2137, %v2138
        %v2141 = vsub.f32 %v2128, %v2139
        %v2142 = vsub.f32 %v2129, %v2140
        %v2143 = vmul.f32 %v2141, %v2141
        %v2144 = vmul.f32 %v2142, %v2142
        %v2145 = vsel %vm950, %v2143, 0.0
        %2146 = vadd.xlane.f32.xlu0 %v2145
        %v2147 = vpop.xlane.xlu0 %2146
        %v2148 = vsel %vm950, %v2144, 0.0
        %2149 = vadd.xlane.f32.xlu0 %v2148
        %v2150 = vpop.xlane.xlu0 %2149
        %v2151 = vmul.f32 %v2147, %v2138
        %v2152 = vmul.f32 %v2150, %v2138
        %v2153 = vadd.f32 %v2151, 1e-05
        %v2154 = vadd.f32 %v2152, 1e-05
        %v2155 = vrsqrt.pop %v2153
        %v2156 = vrsqrt.pop %v2154
        %v2157 = vmul.f32 %v2141, %v2155
        %v2158 = vmul.f32 %v2142, %v2156
        %v2160 = vlaneseq
        %v2161 = vshrl.u32 %v2160, 7
        %v2162 = vsub.s32 0, %v2161
        %v2163 = vrot.slane %v2130, %v2162
        %v2165 = vmul.f32 %v2157, %v2163
        %v2166 = vmul.f32 %v2158, %v2163
        %v2168 = vlaneseq
        %v2169 = vshrl.u32 %v2168, 7
        %v2170 = vsub.s32 0, %v2169
        %v2171 = vrot.slane %v2131, %v2170
        %v2173 = vadd.f32 %v2165, %v2171
        %v2174 = vadd.f32 %v2166, %v2171
        %v2175 = vpack.c.bf16 %v2174, %v2173
        %v2176 = vld [vmem:[%s896] sm:$0xf]
        %v2177 = vld [vmem:[%s896 + $0x4] sm:$0xf]
        %v2178 = vld [vmem:[%s896 + $0x8] sm:$0xf]
        %v2179 = vld [vmem:[%s896 + $0xc] sm:$0xf]
        %v2180 = vld [vmem:[%s899] sm:$0x1]
        %v2182 = vlaneseq
        %v2183 = vshrl.u32 %v2182, 7
        %v2184 = vsub.s32 0, %v2183
        %v2185 = vrot.slane %v2180, %v2184
        %v2191 = vunpack.c.l.b16 %v2176
        %v2192 = vunpack.c.l.b16 %v2177
        %v2193 = vunpack.c.l.b16 %v2178
        %v2194 = vunpack.c.l.b16 %v2179
        %v2195 = vpack.c.b16 %v2192, %v2191
        %v2196 = vpack.c.b16 %v2194, %v2193
        %v2200 = vsel %vm950, %v2175, 0
        %2202 = vmatprep.subr.bf16.mxu0 0
        %2203 = vmatpush1.bf16.msra.mxu0 %v2195
        %2204 = vmatprep.subr.bf16.mxu0 0
        %2205 = vmatpush1.bf16.msra.mxu0 %v2196
        %2206 = vmatprep.subr.bf16.mxu0 0
        %2207 = vmatpush1.bf16.msra.mxu0 0
        %2208 = vmatprep.subr.bf16.mxu0 0
        %2209 = vmatpush1.bf16.msra.mxu0 0
        %2210 = vmatprep.subr.bf16.mxu0 0
        %2211 = vmatpush1.bf16.msra.mxu0 0
        %2212 = vmatprep.subr.bf16.mxu0 0
        %2213 = vmatpush1.bf16.msra.mxu0 0
        %2214 = vmatprep.subr.bf16.mxu0 0
        %2215 = vmatpush1.bf16.msra.mxu0 0
        %2216 = vmatprep.subr.bf16.mxu0 0
        %2217 = vmatpush1.bf16.msra.mxu0 0
        %2218 = vmatprep.subr.bf16.mxu0 0
        %2219 = vmatpush1.bf16.msra.mxu0 0
        %2220 = vmatprep.subr.bf16.mxu0 0
        %2221 = vmatpush1.bf16.msra.mxu0 0
        %2222 = vmatprep.subr.bf16.mxu0 0
        %2223 = vmatpush1.bf16.msra.mxu0 0
        %2224 = vmatprep.subr.bf16.mxu0 0
        %2225 = vmatpush1.bf16.msra.mxu0 0
        %2226 = vmatprep.subr.bf16.mxu0 0
        %2227 = vmatpush1.bf16.msra.mxu0 0
        %2228 = vmatprep.subr.bf16.mxu0 0
        %2229 = vmatpush1.bf16.msra.mxu0 0
        %2230 = vmatprep.subr.bf16.mxu0 0
        %2231 = vmatpush1.bf16.msra.mxu0 0
        %2232 = vmatprep.subr.bf16.mxu0 0
        %2233 = vmatpush1.bf16.msra.mxu0 0
        %2234 = vmatprep.mubr.bf16.mxu0 0
        %2235 = vmatmul.mubr.bf16.gmra.mrb[0].mxu0 %v2200
        %v2236 = vpop.f32.mrb[0].mxu0
        %v2237 = vadd.f32 %v2185, %v2236
        %v2238 = vpop.f32.mrb[0].mxu0
        %v2239 = vpop.f32.mrb[0].mxu0
        %v2240 = vadd.f32 %v2185, %v2239
        %v2241 = vpop.f32.mrb[0].mxu0
        %2242 = vdwg.mxu0
        %v2243 = vmax.f32 %v2237, 0.0
        %v2244 = vmax.f32 %v2240, 0.0
        %v2245 = vpack.c.bf16 %v2244, %v2243
        %v2246 = vld [vmem:[%s904] sm:$0xf]
        %v2247 = vld [vmem:[%s904 + $0x4] sm:$0xf]
        %v2248 = vld [vmem:[%s904 + $0x8] sm:$0xf]
        %v2249 = vld [vmem:[%s904 + $0xc] sm:$0xf]
        %v2250 = vld [vmem:[%s904 + $0x10] sm:$0xf]
        %v2251 = vld [vmem:[%s904 + $0x14] sm:$0xf]
        %v2252 = vld [vmem:[%s904 + $0x18] sm:$0xf]
        %v2253 = vld [vmem:[%s904 + $0x1c] sm:$0xf]
        %v2254 = vld [vmem:[%s907] sm:$0x1]
        %v2256 = vlaneseq
        %v2257 = vshrl.u32 %v2256, 7
        %v2258 = vsub.s32 0, %v2257
        %v2259 = vrot.slane %v2254, %v2258
        %v2269 = vunpack.c.l.b16 %v2246
        %v2270 = vunpack.c.l.b16 %v2247
        %v2271 = vunpack.c.l.b16 %v2248
        %v2272 = vunpack.c.l.b16 %v2249
        %v2273 = vunpack.c.l.b16 %v2250
        %v2274 = vunpack.c.l.b16 %v2251
        %v2275 = vunpack.c.l.b16 %v2252
        %v2276 = vunpack.c.l.b16 %v2253
        %v2277 = vpack.c.b16 %v2270, %v2269
        %v2278 = vpack.c.b16 %v2272, %v2271
        %v2279 = vpack.c.b16 %v2274, %v2273
        %v2280 = vpack.c.b16 %v2276, %v2275
        %vm2285 = vcmask 523264
        %v2287 = vsel %vm2285, %v2245, 0
        %2289 = vmatprep.subr.bf16.mxu0 0
        %2290 = vmatpush1.bf16.msra.mxu0 %v2277
        %2291 = vmatprep.subr.bf16.mxu0 0
        %2292 = vmatpush1.bf16.msra.mxu0 %v2278
        %2293 = vmatprep.subr.bf16.mxu0 0
        %2294 = vmatpush1.bf16.msra.mxu0 %v2279
        %2295 = vmatprep.subr.bf16.mxu0 0
        %2296 = vmatpush1.bf16.msra.mxu0 %v2280
        %2297 = vmatprep.subr.bf16.mxu0 0
        %2298 = vmatpush1.bf16.msra.mxu0 0
        %2299 = vmatprep.subr.bf16.mxu0 0
        %2300 = vmatpush1.bf16.msra.mxu0 0
        %2301 = vmatprep.subr.bf16.mxu0 0
        %2302 = vmatpush1.bf16.msra.mxu0 0
        %2303 = vmatprep.subr.bf16.mxu0 0
        %2304 = vmatpush1.bf16.msra.mxu0 0
        %2305 = vmatprep.subr.bf16.mxu0 0
        %2306 = vmatpush1.bf16.msra.mxu0 0
        %2307 = vmatprep.subr.bf16.mxu0 0
        %2308 = vmatpush1.bf16.msra.mxu0 0
        %2309 = vmatprep.subr.bf16.mxu0 0
        %2310 = vmatpush1.bf16.msra.mxu0 0
        %2311 = vmatprep.subr.bf16.mxu0 0
        %2312 = vmatpush1.bf16.msra.mxu0 0
        %2313 = vmatprep.subr.bf16.mxu0 0
        %2314 = vmatpush1.bf16.msra.mxu0 0
        %2315 = vmatprep.subr.bf16.mxu0 0
        %2316 = vmatpush1.bf16.msra.mxu0 0
        %2317 = vmatprep.subr.bf16.mxu0 0
        %2318 = vmatpush1.bf16.msra.mxu0 0
        %2319 = vmatprep.subr.bf16.mxu0 0
        %2320 = vmatpush1.bf16.msra.mxu0 0
        %2321 = vmatprep.mubr.bf16.mxu0 0
        %2322 = vmatmul.mubr.bf16.gmra.mrb[0].mxu0 %v2287
        %v2323 = vpop.f32.mrb[0].mxu0
        %v2324 = vadd.f32 %v2259, %v2323
        %v2325 = vpop.f32.mrb[0].mxu0
        %v2326 = vpop.f32.mrb[0].mxu0
        %v2327 = vadd.f32 %v2259, %v2326
        %v2328 = vpop.f32.mrb[0].mxu0
        %2329 = vdwg.mxu0
        %v2330 = vadd.f32 %v2173, %v2324
        %v2331 = vadd.f32 %v2174, %v2327
        %v2332 = vld [vmem:[%s910] sm:$0x1]
        %v2333 = vld [vmem:[%s913] sm:$0x1]
        %v2334 = vsel %vm950, %v2330, 0.0
        %2335 = vadd.xlane.f32.xlu0 %v2334
        %v2336 = vpop.xlane.xlu0 %2335
        %v2337 = vsel %vm950, %v2331, 0.0
        %2338 = vadd.xlane.f32.xlu0 %v2337
        %v2339 = vpop.xlane.xlu0 %2338
        %v2340 = vmul.f32 %v2336, %v2138
        %v2341 = vmul.f32 %v2339, %v2138
        %v2342 = vsub.f32 %v2330, %v2340
        %v2343 = vsub.f32 %v2331, %v2341
        %v2344 = vmul.f32 %v2342, %v2342
        %v2345 = vmul.f32 %v2343, %v2343
        %v2346 = vsel %vm950, %v2344, 0.0
        %2347 = vadd.xlane.f32.xlu0 %v2346
        %v2348 = vpop.xlane.xlu0 %2347
        %v2349 = vsel %vm950, %v2345, 0.0
        %2350 = vadd.xlane.f32.xlu0 %v2349
        %v2351 = vpop.xlane.xlu0 %2350
        %v2352 = vmul.f32 %v2348, %v2138
        %v2353 = vmul.f32 %v2351, %v2138
        %v2354 = vadd.f32 %v2352, 1e-05
        %v2355 = vadd.f32 %v2353, 1e-05
        %v2356 = vrsqrt.pop %v2354
        %v2357 = vrsqrt.pop %v2355
        %v2358 = vmul.f32 %v2342, %v2356
        %v2359 = vmul.f32 %v2343, %v2357
        %v2361 = vlaneseq
        %v2362 = vshrl.u32 %v2361, 7
        %v2363 = vsub.s32 0, %v2362
        %v2364 = vrot.slane %v2332, %v2363
        %v2366 = vmul.f32 %v2358, %v2364
        %v2367 = vmul.f32 %v2359, %v2364
        %v2369 = vlaneseq
        %v2370 = vshrl.u32 %v2369, 7
        %v2371 = vsub.s32 0, %v2370
        %v2372 = vrot.slane %v2333, %v2371
        %v2374 = vadd.f32 %v2366, %v2372
        %v2375 = vadd.f32 %v2367, %v2372
        %2376 = vst.msk [vmem:[#allocation2] sm:$0xff] %vm950, %v2374
        %2377 = vst.msk [vmem:[#allocation2 + $0x8] sm:$0xff] %vm950, %v2375
        %p2378 = scmp.eq.s32.totalorder %s37, 1
        // Predicated region
        $region105: #{transformer_forward.1} parent=99 // pred_check
          %p2379 = pneg %p2378
        $region106: #{transformer_forward.1} parent=99 // pred_check_branch
          %2381 = sbr.rel (%p2379) target = $region108
        $region107: #{transformer_forward.1} parent=99 // pred_region
          %vm2382 = vcmp.eq.f32.partialorder %v1126, 0.0
          %v2383 = vsel %vm2382, 1, 0
          %v2384 = vcvt.s32.f32 %v2383
          %v2386 = vsel %vm1128, %v2384, 0
          %2388 = vmatprep.subr.mxu0 0.0
          %2389 = vmatpush1.msra.mxu0 %v2374
          %2390 = vmatprep.subr.mxu0 0.0
          %2391 = vmatpush1.msra.mxu0 0.0
          %2392 = vmatprep.subr.mxu0 0.0
          %2393 = vmatpush1.msra.mxu0 0.0
          %2394 = vmatprep.subr.mxu0 0.0
          %2395 = vmatpush1.msra.mxu0 0.0
          %2396 = vmatprep.subr.mxu0 0.0
          %2397 = vmatpush1.msra.mxu0 0.0
          %2398 = vmatprep.subr.mxu0 0.0
          %2399 = vmatpush1.msra.mxu0 0.0
          %2400 = vmatprep.subr.mxu0 0.0
          %2401 = vmatpush1.msra.mxu0 0.0
          %2402 = vmatprep.subr.mxu0 0.0
          %2403 = vmatpush1.msra.mxu0 0.0
          %2404 = vmatprep.subr.mxu0 0.0
          %2405 = vmatpush1.msra.mxu0 0.0
          %2406 = vmatprep.subr.mxu0 0.0
          %2407 = vmatpush1.msra.mxu0 0.0
          %2408 = vmatprep.subr.mxu0 0.0
          %2409 = vmatpush1.msra.mxu0 0.0
          %2410 = vmatprep.subr.mxu0 0.0
          %2411 = vmatpush1.msra.mxu0 0.0
          %2412 = vmatprep.subr.mxu0 0.0
          %2413 = vmatpush1.msra.mxu0 0.0
          %2414 = vmatprep.subr.mxu0 0.0
          %2415 = vmatpush1.msra.mxu0 0.0
          %2416 = vmatprep.subr.mxu0 0.0
          %2417 = vmatpush1.msra.mxu0 0.0
          %2418 = vmatprep.subr.mxu0 0.0
          %2419 = vmatpush1.msra.mxu0 0.0
          %2420 = vmatprep.subr.mxu0 0.0
          %2421 = vmatpush1.msra.mxu0 0.0
          %2422 = vmatprep.subr.mxu0 0.0
          %2423 = vmatpush1.msra.mxu0 0.0
          %2424 = vmatprep.subr.mxu0 0.0
          %2425 = vmatpush1.msra.mxu0 0.0
          %2426 = vmatprep.subr.mxu0 0.0
          %2427 = vmatpush1.msra.mxu0 0.0
          %2428 = vmatprep.subr.mxu0 0.0
          %2429 = vmatpush1.msra.mxu0 0.0
          %2430 = vmatprep.subr.mxu0 0.0
          %2431 = vmatpush1.msra.mxu0 0.0
          %2432 = vmatprep.subr.mxu0 0.0
          %2433 = vmatpush1.msra.mxu0 0.0
          %2434 = vmatprep.subr.mxu0 0.0
          %2435 = vmatpush1.msra.mxu0 0.0
          %2436 = vmatprep.subr.mxu0 0.0
          %2437 = vmatpush1.msra.mxu0 0.0
          %2438 = vmatprep.subr.mxu0 0.0
          %2439 = vmatpush1.msra.mxu0 0.0
          %2440 = vmatprep.subr.mxu0 0.0
          %2441 = vmatpush1.msra.mxu0 0.0
          %2442 = vmatprep.subr.mxu0 0.0
          %2443 = vmatpush1.msra.mxu0 0.0
          %2444 = vmatprep.subr.mxu0 0.0
          %2445 = vmatpush1.msra.mxu0 0.0
          %2446 = vmatprep.subr.mxu0 0.0
          %2447 = vmatpush1.msra.mxu0 0.0
          %2448 = vmatprep.subr.mxu0 0.0
          %2449 = vmatpush1.msra.mxu0 0.0
          %2450 = vmatprep.subr.mxu0 0.0
          %2451 = vmatpush1.msra.mxu0 0.0
          %2452 = vmatprep.mubr.f32.mxu0 0.0
          %2453 = vmatmul.mubr.f32.gmra.mrb[0].mxu0 %v2386
          %v2454 = vpop.f32.mrb[0].mxu0
          %v2455 = vadd.f32 0.0, %v2454
          %v2456 = vpop.f32.mrb[0].mxu0
          %2457 = vdwg.mxu0
          %vm2458 = vcmask 57344
          %v2459 = vsel %vm2458, %v2384, 0.0
          %2460 = vadd.xlane.f32.xlu0 %v2459
          %v2461 = vpop.xlane.xlu0 %2460
          %v2462 = vmax.f32 %v2461, 1.0
          %v2463 = vrcp.pop %v2462
          %v2464 = vmul.f32 %v2455, %v2463
          %vm2465 = vcmp.eq.f32.partialorder %v1127, 0.0
          %v2466 = vsel %vm2465, 1, 0
          %v2467 = vcvt.s32.f32 %v2466
          %v2469 = vsel %vm1128, %v2467, 0
          %2471 = vmatprep.subr.mxu0 0.0
          %2472 = vmatpush1.msra.mxu0 %v2375
          %2473 = vmatprep.subr.mxu0 0.0
          %2474 = vmatpush1.msra.mxu0 0.0
          %2475 = vmatprep.subr.mxu0 0.0
          %2476 = vmatpush1.msra.mxu0 0.0
          %2477 = vmatprep.subr.mxu0 0.0
          %2478 = vmatpush1.msra.mxu0 0.0
          %2479 = vmatprep.subr.mxu0 0.0
          %2480 = vmatpush1.msra.mxu0 0.0
          %2481 = vmatprep.subr.mxu0 0.0
          %2482 = vmatpush1.msra.mxu0 0.0
          %2483 = vmatprep.subr.mxu0 0.0
          %2484 = vmatpush1.msra.mxu0 0.0
          %2485 = vmatprep.subr.mxu0 0.0
          %2486 = vmatpush1.msra.mxu0 0.0
          %2487 = vmatprep.subr.mxu0 0.0
          %2488 = vmatpush1.msra.mxu0 0.0
          %2489 = vmatprep.subr.mxu0 0.0
          %2490 = vmatpush1.msra.mxu0 0.0
          %2491 = vmatprep.subr.mxu0 0.0
          %2492 = vmatpush1.msra.mxu0 0.0
          %2493 = vmatprep.subr.mxu0 0.0
          %2494 = vmatpush1.msra.mxu0 0.0
          %2495 = vmatprep.subr.mxu0 0.0
          %2496 = vmatpush1.msra.mxu0 0.0
          %2497 = vmatprep.subr.mxu0 0.0
          %2498 = vmatpush1.msra.mxu0 0.0
          %2499 = vmatprep.subr.mxu0 0.0
          %2500 = vmatpush1.msra.mxu0 0.0
          %2501 = vmatprep.subr.mxu0 0.0
          %2502 = vmatpush1.msra.mxu0 0.0
          %2503 = vmatprep.subr.mxu0 0.0
          %2504 = vmatpush1.msra.mxu0 0.0
          %2505 = vmatprep.subr.mxu0 0.0
          %2506 = vmatpush1.msra.mxu0 0.0
          %2507 = vmatprep.subr.mxu0 0.0
          %2508 = vmatpush1.msra.mxu0 0.0
          %2509 = vmatprep.subr.mxu0 0.0
          %2510 = vmatpush1.msra.mxu0 0.0
          %2511 = vmatprep.subr.mxu0 0.0
          %2512 = vmatpush1.msra.mxu0 0.0
          %2513 = vmatprep.subr.mxu0 0.0
          %2514 = vmatpush1.msra.mxu0 0.0
          %2515 = vmatprep.subr.mxu0 0.0
          %2516 = vmatpush1.msra.mxu0 0.0
          %2517 = vmatprep.subr.mxu0 0.0
          %2518 = vmatpush1.msra.mxu0 0.0
          %2519 = vmatprep.subr.mxu0 0.0
          %2520 = vmatpush1.msra.mxu0 0.0
          %2521 = vmatprep.subr.mxu0 0.0
          %2522 = vmatpush1.msra.mxu0 0.0
          %2523 = vmatprep.subr.mxu0 0.0
          %2524 = vmatpush1.msra.mxu0 0.0
          %2525 = vmatprep.subr.mxu0 0.0
          %2526 = vmatpush1.msra.mxu0 0.0
          %2527 = vmatprep.subr.mxu0 0.0
          %2528 = vmatpush1.msra.mxu0 0.0
          %2529 = vmatprep.subr.mxu0 0.0
          %2530 = vmatpush1.msra.mxu0 0.0
          %2531 = vmatprep.subr.mxu0 0.0
          %2532 = vmatpush1.msra.mxu0 0.0
          %2533 = vmatprep.subr.mxu0 0.0
          %2534 = vmatpush1.msra.mxu0 0.0
          %2535 = vmatprep.mubr.f32.mxu0 0.0
          %2536 = vmatmul.mubr.f32.gmra.mrb[0].mxu0 %v2469
          %v2537 = vpop.f32.mrb[0].mxu0
          %v2538 = vadd.f32 0.0, %v2537
          %v2539 = vpop.f32.mrb[0].mxu0
          %2540 = vdwg.mxu0
          %v2541 = vsel %vm2458, %v2467, 0.0
          %2542 = vadd.xlane.f32.xlu0 %v2541
          %v2543 = vpop.xlane.xlu0 %2542
          %v2544 = vmax.f32 %v2543, 1.0
          %v2545 = vrcp.pop %v2544
          %v2546 = vmul.f32 %v2538, %v2545
          %v2548 = vrot.slane %v2546, 7
          %vm2550 = vcmask 1040384
          %v2551 = vsel %vm2550, %v2464, %v2548
          %v2552 = vpack.c.bf16 %v2551, %v2551
          %v2553 = vld [vmem:[%s18] sm:$0xf]
          %v2554 = vld [vmem:[%s18 + $0x4] sm:$0xf]
          %v2555 = vld [vmem:[%s18 + $0x8] sm:$0xf]
          %v2556 = vld [vmem:[%s18 + $0xc] sm:$0xf]
          %v2557 = vld [vmem:[%s19] sm:$0x1]
          %v2559 = vlaneseq
          %v2560 = vshrl.u32 %v2559, 7
          %v2561 = vsub.s32 0, %v2560
          %v2562 = vrot.slane %v2557, %v2561
          %v2568 = vunpack.c.l.b16 %v2553
          %v2569 = vunpack.c.l.b16 %v2554
          %v2570 = vunpack.c.l.b16 %v2555
          %v2571 = vunpack.c.l.b16 %v2556
          %v2572 = vpack.c.b16 %v2569, %v2568
          %v2573 = vpack.c.b16 %v2571, %v2570
          %v2577 = vsel %vm950, %v2552, 0
          %2579 = vmatprep.subr.bf16.mxu0 0
          %2580 = vmatpush1.bf16.msra.mxu0 %v2572
          %2581 = vmatprep.subr.bf16.mxu0 0
          %2582 = vmatpush1.bf16.msra.mxu0 %v2573
          %2583 = vmatprep.subr.bf16.mxu0 0
          %2584 = vmatpush1.bf16.msra.mxu0 0
          %2585 = vmatprep.subr.bf16.mxu0 0
          %2586 = vmatpush1.bf16.msra.mxu0 0
          %2587 = vmatprep.subr.bf16.mxu0 0
          %2588 = vmatpush1.bf16.msra.mxu0 0
          %2589 = vmatprep.subr.bf16.mxu0 0
          %2590 = vmatpush1.bf16.msra.mxu0 0
          %2591 = vmatprep.subr.bf16.mxu0 0
          %2592 = vmatpush1.bf16.msra.mxu0 0
          %2593 = vmatprep.subr.bf16.mxu0 0
          %2594 = vmatpush1.bf16.msra.mxu0 0
          %2595 = vmatprep.subr.bf16.mxu0 0
          %2596 = vmatpush1.bf16.msra.mxu0 0
          %2597 = vmatprep.subr.bf16.mxu0 0
          %2598 = vmatpush1.bf16.msra.mxu0 0
          %2599 = vmatprep.subr.bf16.mxu0 0
          %2600 = vmatpush1.bf16.msra.mxu0 0
          %2601 = vmatprep.subr.bf16.mxu0 0
          %2602 = vmatpush1.bf16.msra.mxu0 0
          %2603 = vmatprep.subr.bf16.mxu0 0
          %2604 = vmatpush1.bf16.msra.mxu0 0
          %2605 = vmatprep.subr.bf16.mxu0 0
          %2606 = vmatpush1.bf16.msra.mxu0 0
          %2607 = vmatprep.subr.bf16.mxu0 0
          %2608 = vmatpush1.bf16.msra.mxu0 0
          %2609 = vmatprep.subr.bf16.mxu0 0
          %2610 = vmatpush1.bf16.msra.mxu0 0
          %2611 = vmatprep.mubr.bf16.mxu0 0
          %2612 = vmatmul.mubr.bf16.gmra.mrb[0].mxu0 %v2577
          %v2613 = vpop.f32.mrb[0].mxu0
          %v2614 = vadd.f32 %v2562, %v2613
          %v2615 = vpop.f32.mrb[0].mxu0
          %v2616 = vpop.f32.mrb[0].mxu0
          %v2617 = vpop.f32.mrb[0].mxu0
          %2618 = vdwg.mxu0
          %2619 = vst [vmem:[#allocation3] sm:$0x3] %v2614
        $region108: #{transformer_forward.1} parent=99 // pred_fallthru
          _
        // Predicated region
        $region109: #{transformer_forward.1} parent=99 // pred_check
          %p2620 = pneg %p572
        $region110: #{transformer_forward.1} parent=99 // pred_check_branch
          %2622 = sbr.rel (%p2620) target = $region112
        $region111: #{transformer_forward.1} parent=99 // pred_region
          %s2624 = ssub.s32 32, 32
          %2625 = vsyncadd [#allocation4], %s2624
          %s2626 = smul.addr %s36, 32
          %s2627 = scalar_lea.hbm %s20, %s2626
          %s2629 = sshll.u32 [#allocation3], 4
          %s2630 = int_to_ptr.vmem [resolvable:$true] %s2629
          %2632 = dma.vmem_to_hbm [thread:$0]  %s2630, 32, %s2627, [#allocation4]
        $region112: #{transformer_forward.1} parent=99 // pred_fallthru
          _
        // Predicated region
        $region113: #{transformer_forward.1} parent=99 // pred_check
          %p2633 = pneg %p572
        $region114: #{transformer_forward.1} parent=99 // pred_check_branch
          %2635 = sbr.rel (%p2633) target = $region116
        $region115: #{transformer_forward.1} parent=99 // pred_region
          %2636 = dma.done [#allocation4], 32
        $region116: #{transformer_forward.1} parent=99 // pred_fallthru
          _
      $region100: #{transformer_forward.1} parent=5 // pred_fallthru
        _
      %p2637 = scmp.le.s32.totalorder 2, %s27
      // Predicated region
      $region117: #{transformer_forward.1} parent=5 // pred_check
        %p2638 = pneg %p2637
      $region118: #{transformer_forward.1} parent=5 // pred_check_branch
        %2640 = sbr.rel (%p2638) target = $region120
      $region119: #{transformer_forward.1} parent=5 // pred_region
        %s2641 = ssub.s32 %s27, 2
      $region120: #{transformer_forward.1} parent=5 // pred_fallthru
        _
    $region6: #{transformer_forward.1} parent=1 // loop_footer
      %s31 = sadd.s32 1, %s27
    $region7: #{transformer_forward.1} parent=1 // loop_footer_branch
      %26 = sbr.rel target = $region3
    $region8: #{transformer_forward.1} parent=1 // loop_exit
      _
    %2642 = vsyncpa [#allocation4], 1
    %s2643 = scalar_lea.sflag [#allocation4], 1
    %2644 = vsyncpa %s2643, 1

</llo_original>
